<compile_context>
chip_gen: v7x
topology: tpu7x:2x2x1
jax: 0.10.0
libtpu: 0.0.40
codegen_flags: <defaults>
</compile_context>

<pallas_src>
import functools

import jax
import jax.numpy as jnp
from jax.experimental import pallas as pl
from jax.experimental.pallas import tpu as pltpu


# ----------------------------------------------------------------------------
# generation-aware knobs
# ----------------------------------------------------------------------------
def _default_vmem_limit():
    try:
        cap = int(pltpu.get_tpu_info().vmem_capacity_bytes)
    except Exception:
        cap = 64 * 1024 * 1024  # assume the tightest generation (v7x: 64 MiB/TC)
    # leave ~20% headroom for compiler-internal scratch
    return min(int(cap * 0.8), 112 * 1024 * 1024)


def _detect_low_bw_chip():
    """v5e / v4 class chips (low HBM bandwidth) benefit from deeper weight-panel
    buffering in the big matmuls."""
    try:
        kind = jax.devices()[0].device_kind.lower()
    except Exception:
        return False
    return ("v5 lite" in kind) or ("v5e" in kind) or ("v5litepod" in kind) or ("v4" in kind)


_VMEM_LIMIT = _default_vmem_limit()
_LOW_BW_CHIP = _detect_low_bw_chip()


# ----------------------------------------------------------------------------
# helpers
# ----------------------------------------------------------------------------
def _round_up(x, m):
    return (x + m - 1) // m * m


def _pick_tile(dim, target, align):
    """Tile for one matmul axis.

    Prefers an exact divisor of the aligned dim that is >= target/2 (no
    padding); otherwise keeps the full target tile and the caller pads the
    axis to a tile multiple.  Never collapses to a tiny tile (e.g. the 28996
    vocab axis keeps 512-wide tiles, padded to 29184)."""
    dim_a = _round_up(dim, align)
    if dim_a <= target:
        return dim_a
    tgt = (target // align) * align
    t = tgt
    while t >= max(align, tgt // 2):
        if dim_a % t == 0:
            return t
        t -= align
    return tgt


def _q_tile_size(T, target=256):
    """Query tile for attention: divisor of T, multiple of 8, <= target."""
    if T <= target:
        return T
    t = (target // 8) * 8
    while t >= 8:
        if T % t == 0:
            return t
        t -= 8
    return T


def _pad2(a, rows, cols):
    r, c = a.shape
    if r == rows and c == cols:
        return a
    return jnp.pad(a, ((0, rows - r), (0, cols - c)))


def _weight_spec(block_shape, index_map):
    """Weight-panel BlockSpec; triple-buffered on low-bandwidth chips."""
    if _LOW_BW_CHIP:
        try:
            return pl.BlockSpec(block_shape, index_map, pipeline_mode=pl.Buffered(3))
        except Exception:
            pass
    return pl.BlockSpec(block_shape, index_map)


# ----------------------------------------------------------------------------
# Pallas kernels
# ----------------------------------------------------------------------------
def _dense_kernel(x_ref, w_ref, b_ref, o_ref, acc_ref, *, activation):
    """Tiled matmul with f32 accumulator; bias (+ optional GELU) epilogue."""
    k = pl.program_id(2)

    @pl.when(k == 0)
    def _init():
        acc_ref[...] = jnp.zeros_like(acc_ref)

    acc_ref[...] += jnp.dot(x_ref[...], w_ref[...],
                            preferred_element_type=jnp.float32)

    @pl.when(k == pl.num_programs(2) - 1)
    def _finalize():
        y = acc_ref[...] + b_ref[...]
        if activation == "gelu":
            # TODO(synk): HF BERT uses exact erf-GELU; tanh approximation here.
            c = 0.7978845608028654  # sqrt(2/pi)
            y = 0.5 * y * (1.0 + jnp.tanh(c * (y + 0.044715 * y * y * y)))
        o_ref[...] = y.astype(o_ref.dtype)


def dense(x, w, b, activation=None, out_dtype=jnp.bfloat16,
          tm=512, tn=512, tk=512):
    """y = x @ w + b (optionally GELU). bf16 operands, f32 accumulation."""
    M, K = x.shape
    Kw, N = w.shape
    assert K == Kw
    tm = _pick_tile(M, tm, 8)
    tn = _pick_tile(N, tn, 128)
    tk = _pick_tile(K, tk, 128)
    Mp, Np, Kp = _round_up(M, tm), _round_up(N, tn), _round_up(K, tk)

    # With pre-padded / pre-cast params these are no-ops (no extra HBM copies).
    xp = _pad2(x, Mp, Kp).astype(jnp.bfloat16)
    wp = _pad2(w, Kp, Np).astype(jnp.bfloat16)
    bp = _pad2(b.reshape(1, -1).astype(jnp.float32), 1, Np)

    out = pl.pallas_call(
        functools.partial(_dense_kernel, activation=activation),
        out_shape=jax.ShapeDtypeStruct((Mp, Np), out_dtype),
        grid=(Mp // tm, Np // tn, Kp // tk),
        in_specs=[
            pl.BlockSpec((tm, tk), lambda i, j, k: (i, k)),
            _weight_spec((tk, tn), lambda i, j, k: (k, j)),
            pl.BlockSpec((1, tn), lambda i, j, k: (0, j)),
        ],
        out_specs=pl.BlockSpec((tm, tn), lambda i, j, k: (i, j)),
        scratch_shapes=[pltpu.VMEM((tm, tn), jnp.float32)],
        compiler_params=pltpu.CompilerParams(
            dimension_semantics=("parallel", "parallel", "arbitrary"),
            vmem_limit_bytes=_VMEM_LIMIT),
    )(xp, wp, bp)
    return out[:M, :N]


def _dense_add_ln_kernel(x_ref, w_ref, b_ref, r_ref, g_ref, bt_ref,
                         o_ref, acc_ref):
    """Tiled matmul + bias + residual-add + LayerNorm fused in the epilogue."""
    k = pl.program_id(1)

    @pl.when(k == 0)
    def _init():
        acc_ref[...] = jnp.zeros_like(acc_ref)

    acc_ref[...] += jnp.dot(x_ref[...], w_ref[...],
                            preferred_element_type=jnp.float32)

    @pl.when(k == pl.num_programs(1) - 1)
    def _finalize():
        h = acc_ref[...] + b_ref[...] + r_ref[...].astype(jnp.float32)
        mu = jnp.mean(h, axis=-1, keepdims=True)
        d = h - mu
        var = jnp.mean(d * d, axis=-1, keepdims=True)
        o_ref[...] = (d * jax.lax.rsqrt(var + 1e-12) * g_ref[...]
                      + bt_ref[...]).astype(o_ref.dtype)


def dense_add_ln(x, w, b, residual, gamma, beta,
                 out_dtype=jnp.bfloat16, tm=512, tk=512):
    """LayerNorm(x @ w + b + residual) over the last axis (eps=1e-12)."""
    M, K = x.shape
    Kw, H = w.shape
    assert K == Kw and residual.shape == (M, H)
    tm = _pick_tile(M, tm, 8)
    tk = _pick_tile(K, tk, 128)
    Mp, Kp = _round_up(M, tm), _round_up(K, tk)

    xp = _pad2(x, Mp, Kp).astype(jnp.bfloat16)
    wp = _pad2(w, Kp, H).astype(jnp.bfloat16)
    rp = _pad2(residual, Mp, H)

    out = pl.pallas_call(
        _dense_add_ln_kernel,
        out_shape=jax.ShapeDtypeStruct((Mp, H), out_dtype),
        grid=(Mp // tm, Kp // tk),
        in_specs=[
            pl.BlockSpec((tm, tk), lambda i, k: (i, k)),
            pl.BlockSpec((tk, H), lambda i, k: (k, 0)),
            pl.BlockSpec((1, H), lambda i, k: (0, 0)),
            pl.BlockSpec((tm, H), lambda i, k: (i, 0)),
            pl.BlockSpec((1, H), lambda i, k: (0, 0)),
            pl.BlockSpec((1, H), lambda i, k: (0, 0)),
        ],
        out_specs=pl.BlockSpec((tm, H), lambda i, k: (i, 0)),
        scratch_shapes=[pltpu.VMEM((tm, H), jnp.float32)],
        compiler_params=pltpu.CompilerParams(
            dimension_semantics=("parallel", "arbitrary"),
            vmem_limit_bytes=_VMEM_LIMIT),
    )(xp, wp, b.reshape(1, -1).astype(jnp.float32), rp,
      gamma.reshape(1, -1).astype(jnp.float32),
      beta.reshape(1, -1).astype(jnp.float32))
    return out[:M]


def _ln_kernel(x_ref, g_ref, b_ref, o_ref):
    h = x_ref[...].astype(jnp.float32)
    mu = jnp.mean(h, axis=-1, keepdims=True)
    d = h - mu
    var = jnp.mean(d * d, axis=-1, keepdims=True)
    o_ref[...] = (d * jax.lax.rsqrt(var + 1e-12) * g_ref[...]
                  + b_ref[...]).astype(o_ref.dtype)


def layernorm(x, gamma, beta, out_dtype=jnp.bfloat16, tm=512):
    """Row-tiled LayerNorm over the last axis (no residual)."""
    M, H = x.shape
    tm = _pick_tile(M, tm, 8)
    Mp = _round_up(M, tm)
    xp = _pad2(x, Mp, H)
    out = pl.pallas_call(
        _ln_kernel,
        out_shape=jax.ShapeDtypeStruct((Mp, H), out_dtype),
        grid=(Mp // tm,),
        in_specs=[
            pl.BlockSpec((tm, H), lambda i: (i, 0)),
            pl.BlockSpec((1, H), lambda i: (0, 0)),
            pl.BlockSpec((1, H), lambda i: (0, 0)),
        ],
        out_specs=pl.BlockSpec((tm, H), lambda i: (i, 0)),
        compiler_params=pltpu.CompilerParams(
            dimension_semantics=("parallel",),
            vmem_limit_bytes=_VMEM_LIMIT),
    )(xp, gamma.reshape(1, -1).astype(jnp.float32),
      beta.reshape(1, -1).astype(jnp.float32))
    return out[:M]


def _attn_kernel(qkv_ref, o_ref, *, num_heads, hidden, q_tile):
    """One (batch, q-tile) step.  qkv_ref block is (1, T, W) with W >= 3H
    (trailing pad columns, if any, are never touched); 1/sqrt(D) is already
    folded into the Q projection.  Each head's context is stored straight into
    its o_ref column slice (no concat / no per-head live list)."""
    H = hidden
    D = H // num_heads
    q_start = pl.multiple_of(pl.program_id(1) * q_tile, q_tile)
    # TODO(synk): no attention/padding mask (real BERT masks padded tokens).
    # TODO(synk): D=64 heads under-fill the 256-wide MXU on v6e/v7x; packing
    #             two heads per p@v call would raise output width to 128 lanes.
    for h in range(num_heads):
        c0 = h * D
        qh = qkv_ref[0, pl.ds(q_start, q_tile), c0:c0 + D]            # (tq, D)
        kh = qkv_ref[0, :, H + c0:H + c0 + D]                         # (T, D)
        vh = qkv_ref[0, :, 2 * H + c0:2 * H + c0 + D]                 # (T, D)
        # q @ k^T as a contraction over D (no materialized k.T).
        s = jax.lax.dot_general(qh, kh, (((1,), (1,)), ((), ())),
                                preferred_element_type=jnp.float32)    # (tq, T)
        m = jnp.max(s, axis=-1, keepdims=True)
        p = jnp.exp(s - m)
        inv = pl.reciprocal(jnp.sum(p, axis=-1, keepdims=True), approx=True)
        p = (p * inv).astype(vh.dtype)
        ctx = jnp.dot(p, vh, preferred_element_type=jnp.float32)       # (tq, D)
        o_ref[0, :, c0:c0 + D] = ctx.astype(o_ref.dtype)


def attention(qkv, *, num_heads, hidden):
    """Softmax(q k^T) v (scale pre-folded into Q); qkv is (N, T, W>=3H),
    returns (N, T, H) bf16.  grid=(N, T//tq); the qkv block index depends only
    on the batch axis so K/V are fetched once per batch element."""
    N, T, W = qkv.shape
    H = hidden
    assert W >= 3 * H
    tq = _q_tile_size(T)
    kernel = functools.partial(_attn_kernel, num_heads=num_heads,
                               hidden=H, q_tile=tq)
    return pl.pallas_call(
        kernel,
        out_shape=jax.ShapeDtypeStruct((N, T, H), jnp.bfloat16),
        grid=(N, T // tq),
        in_specs=[pl.BlockSpec((1, T, W), lambda b, qi: (b, 0, 0))],
        out_specs=pl.BlockSpec((1, tq, H), lambda b, qi: (b, qi, 0)),
        compiler_params=pltpu.CompilerParams(
            dimension_semantics=("parallel", "arbitrary"),
            vmem_limit_bytes=_VMEM_LIMIT),
    )(qkv)


# ----------------------------------------------------------------------------
# Model: parameters + forward
# ----------------------------------------------------------------------------
def init_params(key, *, H, n_layers, ff, token_vocab, out_vocab, max_pos,
                num_heads):
    keys = iter(jax.random.split(key, 4 + 4 * n_layers))

    def nrm(shape, scale=0.02):
        return scale * jax.random.normal(next(keys), shape)   # f32; cast below

    def padded_linear(w_f32, n_logical, target_tn=512):
        """Pre-cast to bf16 and pre-pad the output axis to a tile multiple so
        dense() never pads/casts weights per forward (notably the (H, vocab)
        fc weight)."""
        tn = _pick_tile(n_logical, target_tn, 128)
        n_pad = _round_up(n_logical, tn)
        w = jnp.pad(w_f32, ((0, 0), (0, n_pad - n_logical))).astype(jnp.bfloat16)
        b = jnp.zeros((1, n_pad), jnp.float32)
        return w, b

    def ones_row(n):
        return jnp.ones((1, n), jnp.float32)

    def zeros_row(n):
        return jnp.zeros((1, n), jnp.float32)

    params = {
        "word_emb": nrm((token_vocab, H)).astype(jnp.bfloat16),
        "pos_emb": nrm((max_pos, H)).astype(jnp.bfloat16),
        "type_emb": nrm((2, H)).astype(jnp.bfloat16),
        "emb_ln_g": ones_row(H), "emb_ln_b": zeros_row(H),
        "layers": [],
    }
    params["fc_w"], params["fc_b"] = padded_linear(nrm((H, out_vocab)), out_vocab)

    D = H // num_heads
    for _ in range(n_layers):
        wqkv = nrm((H, 3 * H))
        # Fold the 1/sqrt(D) attention scale into the Q projection columns
        # (bqkv is zero so no bias scaling needed); removes a per-token VPU
        # multiply from the attention kernel.
        wqkv = wqkv.at[:, :H].multiply(1.0 / (D ** 0.5))
        wqkv, bqkv = padded_linear(wqkv, 3 * H)               # fused Q/K/V
        wi, bi = padded_linear(nrm((H, ff)), ff)
        params["layers"].append({
            "wqkv": wqkv, "bqkv": bqkv,
            "wo": nrm((H, H)).astype(jnp.bfloat16), "bo": zeros_row(H),
            "ln1_g": ones_row(H), "ln1_b": zeros_row(H),
            "wi": wi, "bi": bi,
            "wo2": nrm((ff, H)).astype(jnp.bfloat16), "bo2": zeros_row(H),
            "ln2_g": ones_row(H), "ln2_b": zeros_row(H),
        })
    return params


def net_forward(params, x, y, *, num_heads, out_vocab, mixup=False):
    """x, y: (N, T) int32 token ids.  Returns (logits (N, T, VOCAB), y)."""
    if mixup:
        # TODO(synk): mixup branch depends on custom BertModel internals (y_a,
        # y_b, lam interpolation of hidden states); not implemented here.
        raise NotImplementedError("mixup=True path not implemented")

    N, T = x.shape
    H = params["word_emb"].shape[1]

    # --- embeddings (gather is glue; layernorm runs in a Pallas kernel).
    #     Sum kept bf16: the LN kernel recomputes in f32, so feeding f32 only
    #     doubles its HBM read for no accuracy benefit. ---
    h = (params["word_emb"][x]
         + params["pos_emb"][:T][None, :, :]
         + params["type_emb"][0][None, None, :]).reshape(N * T, H)      # bf16
    h = layernorm(h, params["emb_ln_g"], params["emb_ln_b"])            # (N*T, H)

    # --- transformer encoder layers ---
    for lp in params["layers"]:
        qkv = dense(h, lp["wqkv"], lp["bqkv"])                  # fused Q/K/V (scale folded)
        ctx = attention(qkv.reshape(N, T, -1),
                        num_heads=num_heads, hidden=H)          # (N, T, H)
        h = dense_add_ln(ctx.reshape(N * T, H), lp["wo"], lp["bo"],
                         h, lp["ln1_g"], lp["ln1_b"])           # proj + add&norm
        inter = dense(h, lp["wi"], lp["bi"], activation="gelu")
        h = dense_add_ln(inter, lp["wo2"], lp["bo2"],
                         h, lp["ln2_g"], lp["ln2_b"])           # proj + add&norm

    # --- final fc (nn.Linear(H, vocab_size)); fc_w pre-padded to tile width ---
    # TODO(synk): emitting bf16 logits / fusing the loss into the fc epilogue
    #             would halve the largest HBM write at real vocab sizes.
    logits = dense(h, params["fc_w"], params["fc_b"], out_dtype=jnp.float32)
    logits = logits[:, :out_vocab].reshape(N, T, out_vocab)
    return logits, y


# ----------------------------------------------------------------------------
if __name__ == "__main__":
    # Small shapes consistent with the forward: (N, T) int token ids.
    N, T = 2, 8
    H, NUM_HEADS, N_LAYERS, FF = 128, 4, 2, 512      # stand-in for 768/12/12/3072
    TOKEN_VOCAB, OUT_VOCAB, MAX_POS = 96, 64, 16

    key = jax.random.PRNGKey(0)
    pkey, xkey, ykey = jax.random.split(key, 3)

    params = init_params(pkey, H=H, n_layers=N_LAYERS, ff=FF,
                         token_vocab=TOKEN_VOCAB, out_vocab=OUT_VOCAB,
                         max_pos=MAX_POS, num_heads=NUM_HEADS)

    x = jax.random.randint(xkey, (N, T), 0, TOKEN_VOCAB, dtype=jnp.int32)
    y = jax.random.randint(ykey, (N, T), 0, OUT_VOCAB, dtype=jnp.int32)

    fwd = jax.jit(net_forward, static_argnames=("num_heads", "out_vocab", "mixup"))
    logits, y_out = fwd(params, x, y, num_heads=NUM_HEADS,
                        out_vocab=OUT_VOCAB, mixup=False)
    jax.block_until_ready(logits)

    assert logits.shape == (N, T, OUT_VOCAB), logits.shape
    assert logits.dtype == jnp.float32
    assert y_out.shape == (N, T)
    assert bool(jnp.all(jnp.isfinite(logits)))
    print("KERNEL_OK")
</pallas_src>

<mosaic_0001>
module attributes {stable_mosaic.version = 11 : i64} {
  func.func @_ln_kernel(%arg0: i32, %arg1: memref<16x128xbf16, #tpu.memory_space<vmem>>, %arg2: memref<1x128xf32, #tpu.memory_space<vmem>>, %arg3: memref<1x128xf32, #tpu.memory_space<vmem>>, %arg4: memref<16x128xbf16, #tpu.memory_space<vmem>>) attributes {dimension_semantics = [#tpu.dimension_semantics<parallel>], iteration_bounds = array<i64: 1>, scalar_prefetch = 0 : i64, scratch_operands = 0 : i64, tpu.core_type = #tpu.core_type<tc>, window_params = [{transform_indices = @transform_0, window_bounds = array<i64: 16, 128>}, {pipeline_mode = #tpu.pipeline_mode<synchronous>, transform_indices = @transform_1, window_bounds = array<i64: 1, 128>}, {pipeline_mode = #tpu.pipeline_mode<synchronous>, transform_indices = @transform_2, window_bounds = array<i64: 1, 128>}, {transform_indices = @transform_3, window_bounds = array<i64: 16, 128>}]} {
    %c0 = arith.constant 0 : index
    %c0_0 = arith.constant 0 : index
    %0 = vector.load %arg1[%c0, %c0_0] : memref<16x128xbf16, #tpu.memory_space<vmem>>, vector<16x128xbf16>
    %1 = arith.extf %0 : vector<16x128xbf16> to vector<16x128xf32>
    %cst = arith.constant dense<0.000000e+00> : vector<16xf32>
    %2 = vector.multi_reduction <add>, %1, %cst [1] : vector<16x128xf32> to vector<16xf32>
    %3 = vector.shape_cast %2 : vector<16xf32> to vector<16x1xf32>
    %cst_1 = arith.constant 1.280000e+02 : f32
    %4 = vector.broadcast %cst_1 : f32 to vector<16x1xf32>
    %5 = arith.divf %3, %4 : vector<16x1xf32>
    %6 = vector.broadcast %5 : vector<16x1xf32> to vector<16x128xf32>
    %7 = arith.subf %1, %6 : vector<16x128xf32>
    %8 = arith.mulf %7, %7 : vector<16x128xf32>
    %cst_2 = arith.constant dense<0.000000e+00> : vector<16xf32>
    %9 = vector.multi_reduction <add>, %8, %cst_2 [1] : vector<16x128xf32> to vector<16xf32>
    %10 = vector.shape_cast %9 : vector<16xf32> to vector<16x1xf32>
    %cst_3 = arith.constant 1.280000e+02 : f32
    %11 = vector.broadcast %cst_3 : f32 to vector<16x1xf32>
    %12 = arith.divf %10, %11 : vector<16x1xf32>
    %cst_4 = arith.constant 9.99999996E-13 : f32
    %13 = vector.broadcast %cst_4 : f32 to vector<16x1xf32>
    %14 = arith.addf %12, %13 : vector<16x1xf32>
    %15 = math.rsqrt %14 : vector<16x1xf32>
    %16 = vector.broadcast %15 : vector<16x1xf32> to vector<16x128xf32>
    %17 = arith.mulf %7, %16 : vector<16x128xf32>
    %c0_5 = arith.constant 0 : index
    %c0_6 = arith.constant 0 : index
    %18 = vector.load %arg2[%c0_5, %c0_6] : memref<1x128xf32, #tpu.memory_space<vmem>>, vector<1x128xf32>
    %19 = vector.broadcast %18 : vector<1x128xf32> to vector<16x128xf32>
    %20 = arith.mulf %17, %19 : vector<16x128xf32>
    %c0_7 = arith.constant 0 : index
    %c0_8 = arith.constant 0 : index
    %21 = vector.load %arg3[%c0_7, %c0_8] : memref<1x128xf32, #tpu.memory_space<vmem>>, vector<1x128xf32>
    %22 = vector.broadcast %21 : vector<1x128xf32> to vector<16x128xf32>
    %23 = arith.addf %20, %22 : vector<16x128xf32>
    %24 = arith.truncf %23 : vector<16x128xf32> to vector<16x128xbf16>
    %c0_9 = arith.constant 0 : index
    %c0_10 = arith.constant 0 : index
    %25 = vector.load %arg4[%c0_9, %c0_10] : memref<16x128xbf16, #tpu.memory_space<vmem>>, vector<16x128xbf16>
    tpu.vector_store %arg4[%c0_9, %c0_10], %24 {strides = array<i32>} : memref<16x128xbf16, #tpu.memory_space<vmem>>, vector<16x128xbf16>,
    return
  }
  func.func @transform_0(%arg0: i32) -> (i32, i32) {
    %c0_i32 = arith.constant 0 : i32
    %c0_i32_0 = arith.constant 0 : i32
    return %arg0, %c0_i32 : i32, i32
  }
  func.func @transform_1(%arg0: i32) -> (i32, i32) {
    %c0_i32 = arith.constant 0 : i32
    %c0_i32_0 = arith.constant 0 : i32
    %c0_i32_1 = arith.constant 0 : i32
    return %c0_i32, %c0_i32_0 : i32, i32
  }
  func.func @transform_2(%arg0: i32) -> (i32, i32) {
    %c0_i32 = arith.constant 0 : i32
    %c0_i32_0 = arith.constant 0 : i32
    %c0_i32_1 = arith.constant 0 : i32
    return %c0_i32, %c0_i32_0 : i32, i32
  }
  func.func @transform_3(%arg0: i32) -> (i32, i32) {
    %c0_i32 = arith.constant 0 : i32
    %c0_i32_0 = arith.constant 0 : i32
    return %arg0, %c0_i32 : i32, i32
  }
}

module attributes {stable_mosaic.version = 11 : i64} {
  func.func @_dense_kernel(%arg0: i32, %arg1: i32, %arg2: i32, %arg3: memref<16x128xbf16, #tpu.memory_space<vmem>>, %arg4: memref<128x384xbf16, #tpu.memory_space<vmem>>, %arg5: memref<1x384xf32, #tpu.memory_space<vmem>>, %arg6: memref<16x384xbf16, #tpu.memory_space<vmem>>, %arg7: memref<16x384xf32, #tpu.memory_space<vmem>>) attributes {dimension_semantics = [#tpu.dimension_semantics<parallel>, #tpu.dimension_semantics<parallel>, #tpu.dimension_semantics<arbitrary>], iteration_bounds = array<i64: 1, 1, 1>, scalar_prefetch = 0 : i64, scratch_operands = 1 : i64, tpu.core_type = #tpu.core_type<tc>, window_params = [{transform_indices = @transform_0, window_bounds = array<i64: 16, 128>}, {transform_indices = @transform_1, window_bounds = array<i64: 128, 384>}, {transform_indices = @transform_2, window_bounds = array<i64: 1, 384>}, {transform_indices = @transform_3, window_bounds = array<i64: 16, 384>}]} {
    %c0_i32 = arith.constant 0 : i32
    %0 = arith.cmpi eq, %arg2, %c0_i32 : i32
    %1 = arith.extui %0 : i1 to i32
    %c0_i32_0 = arith.constant 0 : i32
    %2 = arith.cmpi ne, %1, %c0_i32_0 : i32
    scf.if %2 {
      %cst_10 = arith.constant 0.000000e+00 : f32
      %12 = vector.broadcast %cst_10 : f32 to vector<16x384xf32>
      %c0_11 = arith.constant 0 : index
      %c0_12 = arith.constant 0 : index
      %13 = vector.load %arg7[%c0_11, %c0_12] : memref<16x384xf32, #tpu.memory_space<vmem>>, vector<16x384xf32>
      tpu.vector_store %arg7[%c0_11, %c0_12], %12 {strides = array<i32>} : memref<16x384xf32, #tpu.memory_space<vmem>>, vector<16x384xf32>,
    } else {
    }
    %c0 = arith.constant 0 : index
    %c0_1 = arith.constant 0 : index
    %3 = vector.load %arg7[%c0, %c0_1] : memref<16x384xf32, #tpu.memory_space<vmem>>, vector<16x384xf32>
    %c0_2 = arith.constant 0 : index
    %c0_3 = arith.constant 0 : index
    %4 = vector.load %arg3[%c0_2, %c0_3] : memref<16x128xbf16, #tpu.memory_space<vmem>>, vector<16x128xbf16>
    %c0_4 = arith.constant 0 : index
    %c0_5 = arith.constant 0 : index
    %5 = vector.load %arg4[%c0_4, %c0_5] : memref<128x384xbf16, #tpu.memory_space<vmem>>, vector<128x384xbf16>
    %cst = arith.constant dense<0.000000e+00> : vector<16x384xf32>
    %6 = tpu.matmul %4, %5, %cst {dimension_numbers = #tpu.dot_dimension_numbers<[1], [0], [0], [1], [0, 0, 1, 1], [], []>} : vector<16x128xbf16>, vector<128x384xbf16>, vector<16x384xf32> -> vector<16x384xf32>
    %7 = arith.addf %3, %6 : vector<16x384xf32>
    %c0_6 = arith.constant 0 : index
    %c0_7 = arith.constant 0 : index
    %8 = vector.load %arg7[%c0_6, %c0_7] : memref<16x384xf32, #tpu.memory_space<vmem>>, vector<16x384xf32>
    tpu.vector_store %arg7[%c0_6, %c0_7], %7 {strides = array<i32>} : memref<16x384xf32, #tpu.memory_space<vmem>>, vector<16x384xf32>,
    %c0_i32_8 = arith.constant 0 : i32
    %9 = arith.cmpi eq, %arg2, %c0_i32_8 : i32
    %10 = arith.extui %9 : i1 to i32
    %c0_i32_9 = arith.constant 0 : i32
    %11 = arith.cmpi ne, %10, %c0_i32_9 : i32
    scf.if %11 {
      %c0_10 = arith.constant 0 : index
      %c0_11 = arith.constant 0 : index
      %12 = vector.load %arg7[%c0_10, %c0_11] : memref<16x384xf32, #tpu.memory_space<vmem>>, vector<16x384xf32>
      %c0_12 = arith.constant 0 : index
      %c0_13 = arith.constant 0 : index
      %13 = vector.load %arg5[%c0_12, %c0_13] : memref<1x384xf32, #tpu.memory_space<vmem>>, vector<1x384xf32>
      %14 = vector.broadcast %13 : vector<1x384xf32> to vector<16x384xf32>
      %15 = arith.addf %12, %14 : vector<16x384xf32>
      %16 = arith.truncf %15 : vector<16x384xf32> to vector<16x384xbf16>
      %c0_14 = arith.constant 0 : index
      %c0_15 = arith.constant 0 : index
      %17 = vector.load %arg6[%c0_14, %c0_15] : memref<16x384xbf16, #tpu.memory_space<vmem>>, vector<16x384xbf16>
      tpu.vector_store %arg6[%c0_14, %c0_15], %16 {strides = array<i32>} : memref<16x384xbf16, #tpu.memory_space<vmem>>, vector<16x384xbf16>,
    } else {
    }
    return
  }
  func.func @transform_0(%arg0: i32, %arg1: i32, %arg2: i32) -> (i32, i32) {
    %c0_i32 = arith.constant 0 : i32
    return %arg0, %arg2 : i32, i32
  }
  func.func @transform_1(%arg0: i32, %arg1: i32, %arg2: i32) -> (i32, i32) {
    %c0_i32 = arith.constant 0 : i32
    return %arg2, %arg1 : i32, i32
  }
  func.func @transform_2(%arg0: i32, %arg1: i32, %arg2: i32) -> (i32, i32) {
    %c0_i32 = arith.constant 0 : i32
    %c0_i32_0 = arith.constant 0 : i32
    return %c0_i32, %arg1 : i32, i32
  }
  func.func @transform_3(%arg0: i32, %arg1: i32, %arg2: i32) -> (i32, i32) {
    %c0_i32 = arith.constant 0 : i32
    return %arg0, %arg1 : i32, i32
  }
}

module attributes {stable_mosaic.version = 11 : i64} {
  func.func @_attn_kernel(%arg0: i32, %arg1: i32, %arg2: memref<1x8x384xbf16, #tpu.memory_space<vmem>>, %arg3: memref<1x8x128xbf16, #tpu.memory_space<vmem>>) attributes {dimension_semantics = [#tpu.dimension_semantics<parallel>, #tpu.dimension_semantics<arbitrary>], iteration_bounds = array<i64: 2, 1>, scalar_prefetch = 0 : i64, scratch_operands = 0 : i64, tpu.core_type = #tpu.core_type<tc>, window_params = [{transform_indices = @transform_0, window_bounds = array<i64: 1, 8, 384>}, {transform_indices = @transform_1, window_bounds = array<i64: 1, 8, 128>}]} {
    %c8_i32 = arith.constant 8 : i32
    %0 = arith.muli %arg1, %c8_i32 : i32
    %1 = tpu.assume_multiple %0, 8 : i32
    %c0 = arith.constant 0 : index
    %2 = arith.index_cast %1 : i32 to index
    %c0_0 = arith.constant 0 : index
    %3 = vector.load %arg2[%c0, %2, %c0_0] : memref<1x8x384xbf16, #tpu.memory_space<vmem>>, vector<1x8x32xbf16>
    %4 = vector.shape_cast %3 : vector<1x8x32xbf16> to vector<8x32xbf16>
    %c0_1 = arith.constant 0 : index
    %c0_2 = arith.constant 0 : index
    %c128 = arith.constant 128 : index
    %5 = vector.load %arg2[%c0_1, %c0_2, %c128] : memref<1x8x384xbf16, #tpu.memory_space<vmem>>, vector<1x8x32xbf16>
    %6 = vector.shape_cast %5 : vector<1x8x32xbf16> to vector<8x32xbf16>
    %c0_3 = arith.constant 0 : index
    %c0_4 = arith.constant 0 : index
    %c256 = arith.constant 256 : index
    %7 = vector.load %arg2[%c0_3, %c0_4, %c256] : memref<1x8x384xbf16, #tpu.memory_space<vmem>>, vector<1x8x32xbf16>
    %8 = vector.shape_cast %7 : vector<1x8x32xbf16> to vector<8x32xbf16>
    %cst = arith.constant dense<0.000000e+00> : vector<8x8xf32>
    %9 = tpu.matmul %4, %6, %cst {dimension_numbers = #tpu.dot_dimension_numbers<[1], [1], [0], [0], [0, 0, 1, 0], [], []>} : vector<8x32xbf16>, vector<8x32xbf16>, vector<8x8xf32> -> vector<8x8xf32>
    %cst_5 = arith.constant dense<0xFF800000> : vector<8xf32>
    %10 = vector.multi_reduction <maximumf>, %9, %cst_5 [1] : vector<8x8xf32> to vector<8xf32>
    %11 = vector.shape_cast %10 : vector<8xf32> to vector<8x1xf32>
    %12 = vector.broadcast %11 : vector<8x1xf32> to vector<8x8xf32>
    %13 = arith.subf %9, %12 : vector<8x8xf32>
    %14 = math.exp %13 : vector<8x8xf32>
    %cst_6 = arith.constant dense<0.000000e+00> : vector<8xf32>
    %15 = vector.multi_reduction <add>, %14, %cst_6 [1] : vector<8x8xf32> to vector<8xf32>
    %16 = vector.shape_cast %15 : vector<8xf32> to vector<8x1xf32>
    %17 = tpu.reciprocal %16 {approx = true} : vector<8x1xf32> -> vector<8x1xf32>
    %18 = vector.broadcast %17 : vector<8x1xf32> to vector<8x8xf32>
    %19 = arith.mulf %14, %18 : vector<8x8xf32>
    %20 = arith.truncf %19 : vector<8x8xf32> to vector<8x8xbf16>
    %cst_7 = arith.constant dense<0.000000e+00> : vector<8x32xf32>
    %21 = tpu.matmul %20, %8, %cst_7 {dimension_numbers = #tpu.dot_dimension_numbers<[1], [0], [0], [1], [0, 0, 1, 1], [], []>} : vector<8x8xbf16>, vector<8x32xbf16>, vector<8x32xf32> -> vector<8x32xf32>
    %22 = arith.truncf %21 : vector<8x32xf32> to vector<8x32xbf16>
    %c0_8 = arith.constant 0 : index
    %c0_9 = arith.constant 0 : index
    %c0_10 = arith.constant 0 : index
    %23 = vector.load %arg3[%c0_8, %c0_9, %c0_10] : memref<1x8x128xbf16, #tpu.memory_space<vmem>>, vector<1x8x32xbf16>
    %24 = vector.shape_cast %23 : vector<1x8x32xbf16> to vector<8x32xbf16>
    %25 = vector.shape_cast %22 : vector<8x32xbf16> to vector<1x8x32xbf16>
    tpu.vector_store %arg3[%c0_8, %c0_9, %c0_10], %25 {strides = array<i32>} : memref<1x8x128xbf16, #tpu.memory_space<vmem>>, vector<1x8x32xbf16>,
    %c0_11 = arith.constant 0 : index
    %26 = arith.index_cast %1 : i32 to index
    %c32 = arith.constant 32 : index
    %27 = vector.load %arg2[%c0_11, %26, %c32] : memref<1x8x384xbf16, #tpu.memory_space<vmem>>, vector<1x8x32xbf16>
    %28 = vector.shape_cast %27 : vector<1x8x32xbf16> to vector<8x32xbf16>
    %c0_12 = arith.constant 0 : index
    %c0_13 = arith.constant 0 : index
    %c160 = arith.constant 160 : index
    %29 = vector.load %arg2[%c0_12, %c0_13, %c160] : memref<1x8x384xbf16, #tpu.memory_space<vmem>>, vector<1x8x32xbf16>
    %30 = vector.shape_cast %29 : vector<1x8x32xbf16> to vector<8x32xbf16>
    %c0_14 = arith.constant 0 : index
    %c0_15 = arith.constant 0 : index
    %c288 = arith.constant 288 : index
    %31 = vector.load %arg2[%c0_14, %c0_15, %c288] : memref<1x8x384xbf16, #tpu.memory_space<vmem>>, vector<1x8x32xbf16>
    %32 = vector.shape_cast %31 : vector<1x8x32xbf16> to vector<8x32xbf16>
    %cst_16 = arith.constant dense<0.000000e+00> : vector<8x8xf32>
    %33 = tpu.matmul %28, %30, %cst_16 {dimension_numbers = #tpu.dot_dimension_numbers<[1], [1], [0], [0], [0, 0, 1, 0], [], []>} : vector<8x32xbf16>, vector<8x32xbf16>, vector<8x8xf32> -> vector<8x8xf32>
    %cst_17 = arith.constant dense<0xFF800000> : vector<8xf32>
    %34 = vector.multi_reduction <maximumf>, %33, %cst_17 [1] : vector<8x8xf32> to vector<8xf32>
    %35 = vector.shape_cast %34 : vector<8xf32> to vector<8x1xf32>
    %36 = vector.broadcast %35 : vector<8x1xf32> to vector<8x8xf32>
    %37 = arith.subf %33, %36 : vector<8x8xf32>
    %38 = math.exp %37 : vector<8x8xf32>
    %cst_18 = arith.constant dense<0.000000e+00> : vector<8xf32>
    %39 = vector.multi_reduction <add>, %38, %cst_18 [1] : vector<8x8xf32> to vector<8xf32>
    %40 = vector.shape_cast %39 : vector<8xf32> to vector<8x1xf32>
    %41 = tpu.reciprocal %40 {approx = true} : vector<8x1xf32> -> vector<8x1xf32>
    %42 = vector.broadcast %41 : vector<8x1xf32> to vector<8x8xf32>
    %43 = arith.mulf %38, %42 : vector<8x8xf32>
    %44 = arith.truncf %43 : vector<8x8xf32> to vector<8x8xbf16>
    %cst_19 = arith.constant dense<0.000000e+00> : vector<8x32xf32>
    %45 = tpu.matmul %44, %32, %cst_19 {dimension_numbers = #tpu.dot_dimension_numbers<[1], [0], [0], [1], [0, 0, 1, 1], [], []>} : vector<8x8xbf16>, vector<8x32xbf16>, vector<8x32xf32> -> vector<8x32xf32>
    %46 = arith.truncf %45 : vector<8x32xf32> to vector<8x32xbf16>
    %c0_20 = arith.constant 0 : index
    %c0_21 = arith.constant 0 : index
    %c32_22 = arith.constant 32 : index
    %47 = vector.load %arg3[%c0_20, %c0_21, %c32_22] : memref<1x8x128xbf16, #tpu.memory_space<vmem>>, vector<1x8x32xbf16>
    %48 = vector.shape_cast %47 : vector<1x8x32xbf16> to vector<8x32xbf16>
    %49 = vector.shape_cast %46 : vector<8x32xbf16> to vector<1x8x32xbf16>
    tpu.vector_store %arg3[%c0_20, %c0_21, %c32_22], %49 {strides = array<i32>} : memref<1x8x128xbf16, #tpu.memory_space<vmem>>, vector<1x8x32xbf16>,
    %c0_23 = arith.constant 0 : index
    %50 = arith.index_cast %1 : i32 to index
    %c64 = arith.constant 64 : index
    %51 = vector.load %arg2[%c0_23, %50, %c64] : memref<1x8x384xbf16, #tpu.memory_space<vmem>>, vector<1x8x32xbf16>
    %52 = vector.shape_cast %51 : vector<1x8x32xbf16> to vector<8x32xbf16>
    %c0_24 = arith.constant 0 : index
    %c0_25 = arith.constant 0 : index
    %c192 = arith.constant 192 : index
    %53 = vector.load %arg2[%c0_24, %c0_25, %c192] : memref<1x8x384xbf16, #tpu.memory_space<vmem>>, vector<1x8x32xbf16>
    %54 = vector.shape_cast %53 : vector<1x8x32xbf16> to vector<8x32xbf16>
    %c0_26 = arith.constant 0 : index
    %c0_27 = arith.constant 0 : index
    %c320 = arith.constant 320 : index
    %55 = vector.load %arg2[%c0_26, %c0_27, %c320] : memref<1x8x384xbf16, #tpu.memory_space<vmem>>, vector<1x8x32xbf16>
    %56 = vector.shape_cast %55 : vector<1x8x32xbf16> to vector<8x32xbf16>
    %cst_28 = arith.constant dense<0.000000e+00> : vector<8x8xf32>
    %57 = tpu.matmul %52, %54, %cst_28 {dimension_numbers = #tpu.dot_dimension_numbers<[1], [1], [0], [0], [0, 0, 1, 0], [], []>} : vector<8x32xbf16>, vector<8x32xbf16>, vector<8x8xf32> -> vector<8x8xf32>
    %cst_29 = arith.constant dense<0xFF800000> : vector<8xf32>
    %58 = vector.multi_reduction <maximumf>, %57, %cst_29 [1] : vector<8x8xf32> to vector<8xf32>
    %59 = vector.shape_cast %58 : vector<8xf32> to vector<8x1xf32>
    %60 = vector.broadcast %59 : vector<8x1xf32> to vector<8x8xf32>
    %61 = arith.subf %57, %60 : vector<8x8xf32>
    %62 = math.exp %61 : vector<8x8xf32>
    %cst_30 = arith.constant dense<0.000000e+00> : vector<8xf32>
    %63 = vector.multi_reduction <add>, %62, %cst_30 [1] : vector<8x8xf32> to vector<8xf32>
    %64 = vector.shape_cast %63 : vector<8xf32> to vector<8x1xf32>
    %65 = tpu.reciprocal %64 {approx = true} : vector<8x1xf32> -> vector<8x1xf32>
    %66 = vector.broadcast %65 : vector<8x1xf32> to vector<8x8xf32>
    %67 = arith.mulf %62, %66 : vector<8x8xf32>
    %68 = arith.truncf %67 : vector<8x8xf32> to vector<8x8xbf16>
    %cst_31 = arith.constant dense<0.000000e+00> : vector<8x32xf32>
    %69 = tpu.matmul %68, %56, %cst_31 {dimension_numbers = #tpu.dot_dimension_numbers<[1], [0], [0], [1], [0, 0, 1, 1], [], []>} : vector<8x8xbf16>, vector<8x32xbf16>, vector<8x32xf32> -> vector<8x32xf32>
    %70 = arith.truncf %69 : vector<8x32xf32> to vector<8x32xbf16>
    %c0_32 = arith.constant 0 : index
    %c0_33 = arith.constant 0 : index
    %c64_34 = arith.constant 64 : index
    %71 = vector.load %arg3[%c0_32, %c0_33, %c64_34] : memref<1x8x128xbf16, #tpu.memory_space<vmem>>, vector<1x8x32xbf16>
    %72 = vector.shape_cast %71 : vector<1x8x32xbf16> to vector<8x32xbf16>
    %73 = vector.shape_cast %70 : vector<8x32xbf16> to vector<1x8x32xbf16>
    tpu.vector_store %arg3[%c0_32, %c0_33, %c64_34], %73 {strides = array<i32>} : memref<1x8x128xbf16, #tpu.memory_space<vmem>>, vector<1x8x32xbf16>,
    %c0_35 = arith.constant 0 : index
    %74 = arith.index_cast %1 : i32 to index
    %c96 = arith.constant 96 : index
    %75 = vector.load %arg2[%c0_35, %74, %c96] : memref<1x8x384xbf16, #tpu.memory_space<vmem>>, vector<1x8x32xbf16>
    %76 = vector.shape_cast %75 : vector<1x8x32xbf16> to vector<8x32xbf16>
    %c0_36 = arith.constant 0 : index
    %c0_37 = arith.constant 0 : index
    %c224 = arith.constant 224 : index
    %77 = vector.load %arg2[%c0_36, %c0_37, %c224] : memref<1x8x384xbf16, #tpu.memory_space<vmem>>, vector<1x8x32xbf16>
    %78 = vector.shape_cast %77 : vector<1x8x32xbf16> to vector<8x32xbf16>
    %c0_38 = arith.constant 0 : index
    %c0_39 = arith.constant 0 : index
    %c352 = arith.constant 352 : index
    %79 = vector.load %arg2[%c0_38, %c0_39, %c352] : memref<1x8x384xbf16, #tpu.memory_space<vmem>>, vector<1x8x32xbf16>
    %80 = vector.shape_cast %79 : vector<1x8x32xbf16> to vector<8x32xbf16>
    %cst_40 = arith.constant dense<0.000000e+00> : vector<8x8xf32>
    %81 = tpu.matmul %76, %78, %cst_40 {dimension_numbers = #tpu.dot_dimension_numbers<[1], [1], [0], [0], [0, 0, 1, 0], [], []>} : vector<8x32xbf16>, vector<8x32xbf16>, vector<8x8xf32> -> vector<8x8xf32>
    %cst_41 = arith.constant dense<0xFF800000> : vector<8xf32>
    %82 = vector.multi_reduction <maximumf>, %81, %cst_41 [1] : vector<8x8xf32> to vector<8xf32>
    %83 = vector.shape_cast %82 : vector<8xf32> to vector<8x1xf32>
    %84 = vector.broadcast %83 : vector<8x1xf32> to vector<8x8xf32>
    %85 = arith.subf %81, %84 : vector<8x8xf32>
    %86 = math.exp %85 : vector<8x8xf32>
    %cst_42 = arith.constant dense<0.000000e+00> : vector<8xf32>
    %87 = vector.multi_reduction <add>, %86, %cst_42 [1] : vector<8x8xf32> to vector<8xf32>
    %88 = vector.shape_cast %87 : vector<8xf32> to vector<8x1xf32>
    %89 = tpu.reciprocal %88 {approx = true} : vector<8x1xf32> -> vector<8x1xf32>
    %90 = vector.broadcast %89 : vector<8x1xf32> to vector<8x8xf32>
    %91 = arith.mulf %86, %90 : vector<8x8xf32>
    %92 = arith.truncf %91 : vector<8x8xf32> to vector<8x8xbf16>
    %cst_43 = arith.constant dense<0.000000e+00> : vector<8x32xf32>
    %93 = tpu.matmul %92, %80, %cst_43 {dimension_numbers = #tpu.dot_dimension_numbers<[1], [0], [0], [1], [0, 0, 1, 1], [], []>} : vector<8x8xbf16>, vector<8x32xbf16>, vector<8x32xf32> -> vector<8x32xf32>
    %94 = arith.truncf %93 : vector<8x32xf32> to vector<8x32xbf16>
    %c0_44 = arith.constant 0 : index
    %c0_45 = arith.constant 0 : index
    %c96_46 = arith.constant 96 : index
    %95 = vector.load %arg3[%c0_44, %c0_45, %c96_46] : memref<1x8x128xbf16, #tpu.memory_space<vmem>>, vector<1x8x32xbf16>
    %96 = vector.shape_cast %95 : vector<1x8x32xbf16> to vector<8x32xbf16>
    %97 = vector.shape_cast %94 : vector<8x32xbf16> to vector<1x8x32xbf16>
    tpu.vector_store %arg3[%c0_44, %c0_45, %c96_46], %97 {strides = array<i32>} : memref<1x8x128xbf16, #tpu.memory_space<vmem>>, vector<1x8x32xbf16>,
    return
  }
  func.func @transform_0(%arg0: i32, %arg1: i32) -> (i32, i32, i32) {
    %c0_i32 = arith.constant 0 : i32
    %c0_i32_0 = arith.constant 0 : i32
    %c0_i32_1 = arith.constant 0 : i32
    return %arg0, %c0_i32, %c0_i32_0 : i32, i32, i32
  }
  func.func @transform_1(%arg0: i32, %arg1: i32) -> (i32, i32, i32) {
    %c0_i32 = arith.constant 0 : i32
    %c0_i32_0 = arith.constant 0 : i32
    return %arg0, %arg1, %c0_i32 : i32, i32, i32
  }
}

module attributes {stable_mosaic.version = 11 : i64} {
  func.func @_dense_add_ln_kernel(%arg0: i32, %arg1: i32, %arg2: memref<16x128xbf16, #tpu.memory_space<vmem>>, %arg3: memref<128x128xbf16, #tpu.memory_space<vmem>>, %arg4: memref<1x128xf32, #tpu.memory_space<vmem>>, %arg5: memref<16x128xbf16, #tpu.memory_space<vmem>>, %arg6: memref<1x128xf32, #tpu.memory_space<vmem>>, %arg7: memref<1x128xf32, #tpu.memory_space<vmem>>, %arg8: memref<16x128xbf16, #tpu.memory_space<vmem>>, %arg9: memref<16x128xf32, #tpu.memory_space<vmem>>) attributes {dimension_semantics = [#tpu.dimension_semantics<parallel>, #tpu.dimension_semantics<arbitrary>], iteration_bounds = array<i64: 1, 1>, scalar_prefetch = 0 : i64, scratch_operands = 1 : i64, tpu.core_type = #tpu.core_type<tc>, window_params = [{transform_indices = @transform_0, window_bounds = array<i64: 16, 128>}, {transform_indices = @transform_1, window_bounds = array<i64: 128, 128>}, {pipeline_mode = #tpu.pipeline_mode<synchronous>, transform_indices = @transform_2, window_bounds = array<i64: 1, 128>}, {transform_indices = @transform_3, window_bounds = array<i64: 16, 128>}, {pipeline_mode = #tpu.pipeline_mode<synchronous>, transform_indices = @transform_4, window_bounds = array<i64: 1, 128>}, {pipeline_mode = #tpu.pipeline_mode<synchronous>, transform_indices = @transform_5, window_bounds = array<i64: 1, 128>}, {transform_indices = @transform_6, window_bounds = array<i64: 16, 128>}]} {
    %c0_i32 = arith.constant 0 : i32
    %0 = arith.cmpi eq, %arg1, %c0_i32 : i32
    %1 = arith.extui %0 : i1 to i32
    %c0_i32_0 = arith.constant 0 : i32
    %2 = arith.cmpi ne, %1, %c0_i32_0 : i32
    scf.if %2 {
      %cst_10 = arith.constant 0.000000e+00 : f32
      %12 = vector.broadcast %cst_10 : f32 to vector<16x128xf32>
      %c0_11 = arith.constant 0 : index
      %c0_12 = arith.constant 0 : index
      %13 = vector.load %arg9[%c0_11, %c0_12] : memref<16x128xf32, #tpu.memory_space<vmem>>, vector<16x128xf32>
      tpu.vector_store %arg9[%c0_11, %c0_12], %12 {strides = array<i32>} : memref<16x128xf32, #tpu.memory_space<vmem>>, vector<16x128xf32>,
    } else {
    }
    %c0 = arith.constant 0 : index
    %c0_1 = arith.constant 0 : index
    %3 = vector.load %arg9[%c0, %c0_1] : memref<16x128xf32, #tpu.memory_space<vmem>>, vector<16x128xf32>
    %c0_2 = arith.constant 0 : index
    %c0_3 = arith.constant 0 : index
    %4 = vector.load %arg2[%c0_2, %c0_3] : memref<16x128xbf16, #tpu.memory_space<vmem>>, vector<16x128xbf16>
    %c0_4 = arith.constant 0 : index
    %c0_5 = arith.constant 0 : index
    %5 = vector.load %arg3[%c0_4, %c0_5] : memref<128x128xbf16, #tpu.memory_space<vmem>>, vector<128x128xbf16>
    %cst = arith.constant dense<0.000000e+00> : vector<16x128xf32>
    %6 = tpu.matmul %4, %5, %cst {dimension_numbers = #tpu.dot_dimension_numbers<[1], [0], [0], [1], [0, 0, 1, 1], [], []>} : vector<16x128xbf16>, vector<128x128xbf16>, vector<16x128xf32> -> vector<16x128xf32>
    %7 = arith.addf %3, %6 : vector<16x128xf32>
    %c0_6 = arith.constant 0 : index
    %c0_7 = arith.constant 0 : index
    %8 = vector.load %arg9[%c0_6, %c0_7] : memref<16x128xf32, #tpu.memory_space<vmem>>, vector<16x128xf32>
    tpu.vector_store %arg9[%c0_6, %c0_7], %7 {strides = array<i32>} : memref<16x128xf32, #tpu.memory_space<vmem>>, vector<16x128xf32>,
    %c0_i32_8 = arith.constant 0 : i32
    %9 = arith.cmpi eq, %arg1, %c0_i32_8 : i32
    %10 = arith.extui %9 : i1 to i32
    %c0_i32_9 = arith.constant 0 : i32
    %11 = arith.cmpi ne, %10, %c0_i32_9 : i32
    scf.if %11 {
      %c0_10 = arith.constant 0 : index
      %c0_11 = arith.constant 0 : index
      %12 = vector.load %arg9[%c0_10, %c0_11] : memref<16x128xf32, #tpu.memory_space<vmem>>, vector<16x128xf32>
      %c0_12 = arith.constant 0 : index
      %c0_13 = arith.constant 0 : index
      %13 = vector.load %arg4[%c0_12, %c0_13] : memref<1x128xf32, #tpu.memory_space<vmem>>, vector<1x128xf32>
      %14 = vector.broadcast %13 : vector<1x128xf32> to vector<16x128xf32>
      %15 = arith.addf %12, %14 : vector<16x128xf32>
      %c0_14 = arith.constant 0 : index
      %c0_15 = arith.constant 0 : index
      %16 = vector.load %arg5[%c0_14, %c0_15] : memref<16x128xbf16, #tpu.memory_space<vmem>>, vector<16x128xbf16>
      %17 = arith.extf %16 : vector<16x128xbf16> to vector<16x128xf32>
      %18 = arith.addf %15, %17 : vector<16x128xf32>
      %cst_16 = arith.constant dense<0.000000e+00> : vector<16xf32>
      %19 = vector.multi_reduction <add>, %18, %cst_16 [1] : vector<16x128xf32> to vector<16xf32>
      %20 = vector.shape_cast %19 : vector<16xf32> to vector<16x1xf32>
      %cst_17 = arith.constant 1.280000e+02 : f32
      %21 = vector.broadcast %cst_17 : f32 to vector<16x1xf32>
      %22 = arith.divf %20, %21 : vector<16x1xf32>
      %23 = vector.broadcast %22 : vector<16x1xf32> to vector<16x128xf32>
      %24 = arith.subf %18, %23 : vector<16x128xf32>
      %25 = arith.mulf %24, %24 : vector<16x128xf32>
      %cst_18 = arith.constant dense<0.000000e+00> : vector<16xf32>
      %26 = vector.multi_reduction <add>, %25, %cst_18 [1] : vector<16x128xf32> to vector<16xf32>
      %27 = vector.shape_cast %26 : vector<16xf32> to vector<16x1xf32>
      %cst_19 = arith.constant 1.280000e+02 : f32
      %28 = vector.broadcast %cst_19 : f32 to vector<16x1xf32>
      %29 = arith.divf %27, %28 : vector<16x1xf32>
      %cst_20 = arith.constant 9.99999996E-13 : f32
      %30 = vector.broadcast %cst_20 : f32 to vector<16x1xf32>
      %31 = arith.addf %29, %30 : vector<16x1xf32>
      %32 = math.rsqrt %31 : vector<16x1xf32>
      %33 = vector.broadcast %32 : vector<16x1xf32> to vector<16x128xf32>
      %34 = arith.mulf %24, %33 : vector<16x128xf32>
      %c0_21 = arith.constant 0 : index
      %c0_22 = arith.constant 0 : index
      %35 = vector.load %arg6[%c0_21, %c0_22] : memref<1x128xf32, #tpu.memory_space<vmem>>, vector<1x128xf32>
      %36 = vector.broadcast %35 : vector<1x128xf32> to vector<16x128xf32>
      %37 = arith.mulf %34, %36 : vector<16x128xf32>
      %c0_23 = arith.constant 0 : index
      %c0_24 = arith.constant 0 : index
      %38 = vector.load %arg7[%c0_23, %c0_24] : memref<1x128xf32, #tpu.memory_space<vmem>>, vector<1x128xf32>
      %39 = vector.broadcast %38 : vector<1x128xf32> to vector<16x128xf32>
      %40 = arith.addf %37, %39 : vector<16x128xf32>
      %41 = arith.truncf %40 : vector<16x128xf32> to vector<16x128xbf16>
      %c0_25 = arith.constant 0 : index
      %c0_26 = arith.constant 0 : index
      %42 = vector.load %arg8[%c0_25, %c0_26] : memref<16x128xbf16, #tpu.memory_space<vmem>>, vector<16x128xbf16>
      tpu.vector_store %arg8[%c0_25, %c0_26], %41 {strides = array<i32>} : memref<16x128xbf16, #tpu.memory_space<vmem>>, vector<16x128xbf16>,
    } else {
    }
    return
  }
  func.func @transform_0(%arg0: i32, %arg1: i32) -> (i32, i32) {
    %c0_i32 = arith.constant 0 : i32
    return %arg0, %arg1 : i32, i32
  }
  func.func @transform_1(%arg0: i32, %arg1: i32) -> (i32, i32) {
    %c0_i32 = arith.constant 0 : i32
    %c0_i32_0 = arith.constant 0 : i32
    return %arg1, %c0_i32 : i32, i32
  }
  func.func @transform_2(%arg0: i32, %arg1: i32) -> (i32, i32) {
    %c0_i32 = arith.constant 0 : i32
    %c0_i32_0 = arith.constant 0 : i32
    %c0_i32_1 = arith.constant 0 : i32
    return %c0_i32, %c0_i32_0 : i32, i32
  }
  func.func @transform_3(%arg0: i32, %arg1: i32) -> (i32, i32) {
    %c0_i32 = arith.constant 0 : i32
    %c0_i32_0 = arith.constant 0 : i32
    return %arg0, %c0_i32 : i32, i32
  }
  func.func @transform_4(%arg0: i32, %arg1: i32) -> (i32, i32) {
    %c0_i32 = arith.constant 0 : i32
    %c0_i32_0 = arith.constant 0 : i32
    %c0_i32_1 = arith.constant 0 : i32
    return %c0_i32, %c0_i32_0 : i32, i32
  }
  func.func @transform_5(%arg0: i32, %arg1: i32) -> (i32, i32) {
    %c0_i32 = arith.constant 0 : i32
    %c0_i32_0 = arith.constant 0 : i32
    %c0_i32_1 = arith.constant 0 : i32
    return %c0_i32, %c0_i32_0 : i32, i32
  }
  func.func @transform_6(%arg0: i32, %arg1: i32) -> (i32, i32) {
    %c0_i32 = arith.constant 0 : i32
    %c0_i32_0 = arith.constant 0 : i32
    return %arg0, %c0_i32 : i32, i32
  }
}

module attributes {stable_mosaic.version = 11 : i64} {
  func.func @_dense_kernel(%arg0: i32, %arg1: i32, %arg2: i32, %arg3: memref<16x128xbf16, #tpu.memory_space<vmem>>, %arg4: memref<128x512xbf16, #tpu.memory_space<vmem>>, %arg5: memref<1x512xf32, #tpu.memory_space<vmem>>, %arg6: memref<16x512xbf16, #tpu.memory_space<vmem>>, %arg7: memref<16x512xf32, #tpu.memory_space<vmem>>) attributes {dimension_semantics = [#tpu.dimension_semantics<parallel>, #tpu.dimension_semantics<parallel>, #tpu.dimension_semantics<arbitrary>], iteration_bounds = array<i64: 1, 1, 1>, scalar_prefetch = 0 : i64, scratch_operands = 1 : i64, tpu.core_type = #tpu.core_type<tc>, window_params = [{transform_indices = @transform_0, window_bounds = array<i64: 16, 128>}, {transform_indices = @transform_1, window_bounds = array<i64: 128, 512>}, {transform_indices = @transform_2, window_bounds = array<i64: 1, 512>}, {transform_indices = @transform_3, window_bounds = array<i64: 16, 512>}]} {
    %c0_i32 = arith.constant 0 : i32
    %0 = arith.cmpi eq, %arg2, %c0_i32 : i32
    %1 = arith.extui %0 : i1 to i32
    %c0_i32_0 = arith.constant 0 : i32
    %2 = arith.cmpi ne, %1, %c0_i32_0 : i32
    scf.if %2 {
      %cst_10 = arith.constant 0.000000e+00 : f32
      %12 = vector.broadcast %cst_10 : f32 to vector<16x512xf32>
      %c0_11 = arith.constant 0 : index
      %c0_12 = arith.constant 0 : index
      %13 = vector.load %arg7[%c0_11, %c0_12] : memref<16x512xf32, #tpu.memory_space<vmem>>, vector<16x512xf32>
      tpu.vector_store %arg7[%c0_11, %c0_12], %12 {strides = array<i32>} : memref<16x512xf32, #tpu.memory_space<vmem>>, vector<16x512xf32>,
    } else {
    }
    %c0 = arith.constant 0 : index
    %c0_1 = arith.constant 0 : index
    %3 = vector.load %arg7[%c0, %c0_1] : memref<16x512xf32, #tpu.memory_space<vmem>>, vector<16x512xf32>
    %c0_2 = arith.constant 0 : index
    %c0_3 = arith.constant 0 : index
    %4 = vector.load %arg3[%c0_2, %c0_3] : memref<16x128xbf16, #tpu.memory_space<vmem>>, vector<16x128xbf16>
    %c0_4 = arith.constant 0 : index
    %c0_5 = arith.constant 0 : index
    %5 = vector.load %arg4[%c0_4, %c0_5] : memref<128x512xbf16, #tpu.memory_space<vmem>>, vector<128x512xbf16>
    %cst = arith.constant dense<0.000000e+00> : vector<16x512xf32>
    %6 = tpu.matmul %4, %5, %cst {dimension_numbers = #tpu.dot_dimension_numbers<[1], [0], [0], [1], [0, 0, 1, 1], [], []>} : vector<16x128xbf16>, vector<128x512xbf16>, vector<16x512xf32> -> vector<16x512xf32>
    %7 = arith.addf %3, %6 : vector<16x512xf32>
    %c0_6 = arith.constant 0 : index
    %c0_7 = arith.constant 0 : index
    %8 = vector.load %arg7[%c0_6, %c0_7] : memref<16x512xf32, #tpu.memory_space<vmem>>, vector<16x512xf32>
    tpu.vector_store %arg7[%c0_6, %c0_7], %7 {strides = array<i32>} : memref<16x512xf32, #tpu.memory_space<vmem>>, vector<16x512xf32>,
    %c0_i32_8 = arith.constant 0 : i32
    %9 = arith.cmpi eq, %arg2, %c0_i32_8 : i32
    %10 = arith.extui %9 : i1 to i32
    %c0_i32_9 = arith.constant 0 : i32
    %11 = arith.cmpi ne, %10, %c0_i32_9 : i32
    scf.if %11 {
      %c0_10 = arith.constant 0 : index
      %c0_11 = arith.constant 0 : index
      %12 = vector.load %arg7[%c0_10, %c0_11] : memref<16x512xf32, #tpu.memory_space<vmem>>, vector<16x512xf32>
      %c0_12 = arith.constant 0 : index
      %c0_13 = arith.constant 0 : index
      %13 = vector.load %arg5[%c0_12, %c0_13] : memref<1x512xf32, #tpu.memory_space<vmem>>, vector<1x512xf32>
      %14 = vector.broadcast %13 : vector<1x512xf32> to vector<16x512xf32>
      %15 = arith.addf %12, %14 : vector<16x512xf32>
      %cst_14 = arith.constant 5.000000e-01 : f32
      %16 = vector.broadcast %cst_14 : f32 to vector<16x512xf32>
      %17 = arith.mulf %16, %15 : vector<16x512xf32>
      %cst_15 = arith.constant 4.471500e-02 : f32
      %18 = vector.broadcast %cst_15 : f32 to vector<16x512xf32>
      %19 = arith.mulf %18, %15 : vector<16x512xf32>
      %20 = arith.mulf %19, %15 : vector<16x512xf32>
      %21 = arith.mulf %20, %15 : vector<16x512xf32>
      %22 = arith.addf %15, %21 : vector<16x512xf32>
      %cst_16 = arith.constant 0.797884583 : f32
      %23 = vector.broadcast %cst_16 : f32 to vector<16x512xf32>
      %24 = arith.mulf %23, %22 : vector<16x512xf32>
      %25 = math.tanh %24 : vector<16x512xf32>
      %cst_17 = arith.constant 1.000000e+00 : f32
      %26 = vector.broadcast %cst_17 : f32 to vector<16x512xf32>
      %27 = arith.addf %26, %25 : vector<16x512xf32>
      %28 = arith.mulf %17, %27 : vector<16x512xf32>
      %29 = arith.truncf %28 : vector<16x512xf32> to vector<16x512xbf16>
      %c0_18 = arith.constant 0 : index
      %c0_19 = arith.constant 0 : index
      %30 = vector.load %arg6[%c0_18, %c0_19] : memref<16x512xbf16, #tpu.memory_space<vmem>>, vector<16x512xbf16>
      tpu.vector_store %arg6[%c0_18, %c0_19], %29 {strides = array<i32>} : memref<16x512xbf16, #tpu.memory_space<vmem>>, vector<16x512xbf16>,
    } else {
    }
    return
  }
  func.func @transform_0(%arg0: i32, %arg1: i32, %arg2: i32) -> (i32, i32) {
    %c0_i32 = arith.constant 0 : i32
    return %arg0, %arg2 : i32, i32
  }
  func.func @transform_1(%arg0: i32, %arg1: i32, %arg2: i32) -> (i32, i32) {
    %c0_i32 = arith.constant 0 : i32
    return %arg2, %arg1 : i32, i32
  }
  func.func @transform_2(%arg0: i32, %arg1: i32, %arg2: i32) -> (i32, i32) {
    %c0_i32 = arith.constant 0 : i32
    %c0_i32_0 = arith.constant 0 : i32
    return %c0_i32, %arg1 : i32, i32
  }
  func.func @transform_3(%arg0: i32, %arg1: i32, %arg2: i32) -> (i32, i32) {
    %c0_i32 = arith.constant 0 : i32
    return %arg0, %arg1 : i32, i32
  }
}

module attributes {stable_mosaic.version = 11 : i64} {
  func.func @_dense_add_ln_kernel(%arg0: i32, %arg1: i32, %arg2: memref<16x512xbf16, #tpu.memory_space<vmem>>, %arg3: memref<512x128xbf16, #tpu.memory_space<vmem>>, %arg4: memref<1x128xf32, #tpu.memory_space<vmem>>, %arg5: memref<16x128xbf16, #tpu.memory_space<vmem>>, %arg6: memref<1x128xf32, #tpu.memory_space<vmem>>, %arg7: memref<1x128xf32, #tpu.memory_space<vmem>>, %arg8: memref<16x128xbf16, #tpu.memory_space<vmem>>, %arg9: memref<16x128xf32, #tpu.memory_space<vmem>>) attributes {dimension_semantics = [#tpu.dimension_semantics<parallel>, #tpu.dimension_semantics<arbitrary>], iteration_bounds = array<i64: 1, 1>, scalar_prefetch = 0 : i64, scratch_operands = 1 : i64, tpu.core_type = #tpu.core_type<tc>, window_params = [{transform_indices = @transform_0, window_bounds = array<i64: 16, 512>}, {transform_indices = @transform_1, window_bounds = array<i64: 512, 128>}, {pipeline_mode = #tpu.pipeline_mode<synchronous>, transform_indices = @transform_2, window_bounds = array<i64: 1, 128>}, {transform_indices = @transform_3, window_bounds = array<i64: 16, 128>}, {pipeline_mode = #tpu.pipeline_mode<synchronous>, transform_indices = @transform_4, window_bounds = array<i64: 1, 128>}, {pipeline_mode = #tpu.pipeline_mode<synchronous>, transform_indices = @transform_5, window_bounds = array<i64: 1, 128>}, {transform_indices = @transform_6, window_bounds = array<i64: 16, 128>}]} {
    %c0_i32 = arith.constant 0 : i32
    %0 = arith.cmpi eq, %arg1, %c0_i32 : i32
    %1 = arith.extui %0 : i1 to i32
    %c0_i32_0 = arith.constant 0 : i32
    %2 = arith.cmpi ne, %1, %c0_i32_0 : i32
    scf.if %2 {
      %cst_10 = arith.constant 0.000000e+00 : f32
      %12 = vector.broadcast %cst_10 : f32 to vector<16x128xf32>
      %c0_11 = arith.constant 0 : index
      %c0_12 = arith.constant 0 : index
      %13 = vector.load %arg9[%c0_11, %c0_12] : memref<16x128xf32, #tpu.memory_space<vmem>>, vector<16x128xf32>
      tpu.vector_store %arg9[%c0_11, %c0_12], %12 {strides = array<i32>} : memref<16x128xf32, #tpu.memory_space<vmem>>, vector<16x128xf32>,
    } else {
    }
    %c0 = arith.constant 0 : index
    %c0_1 = arith.constant 0 : index
    %3 = vector.load %arg9[%c0, %c0_1] : memref<16x128xf32, #tpu.memory_space<vmem>>, vector<16x128xf32>
    %c0_2 = arith.constant 0 : index
    %c0_3 = arith.constant 0 : index
    %4 = vector.load %arg2[%c0_2, %c0_3] : memref<16x512xbf16, #tpu.memory_space<vmem>>, vector<16x512xbf16>
    %c0_4 = arith.constant 0 : index
    %c0_5 = arith.constant 0 : index
    %5 = vector.load %arg3[%c0_4, %c0_5] : memref<512x128xbf16, #tpu.memory_space<vmem>>, vector<512x128xbf16>
    %cst = arith.constant dense<0.000000e+00> : vector<16x128xf32>
    %6 = tpu.matmul %4, %5, %cst {dimension_numbers = #tpu.dot_dimension_numbers<[1], [0], [0], [1], [0, 0, 1, 1], [], []>} : vector<16x512xbf16>, vector<512x128xbf16>, vector<16x128xf32> -> vector<16x128xf32>
    %7 = arith.addf %3, %6 : vector<16x128xf32>
    %c0_6 = arith.constant 0 : index
    %c0_7 = arith.constant 0 : index
    %8 = vector.load %arg9[%c0_6, %c0_7] : memref<16x128xf32, #tpu.memory_space<vmem>>, vector<16x128xf32>
    tpu.vector_store %arg9[%c0_6, %c0_7], %7 {strides = array<i32>} : memref<16x128xf32, #tpu.memory_space<vmem>>, vector<16x128xf32>,
    %c0_i32_8 = arith.constant 0 : i32
    %9 = arith.cmpi eq, %arg1, %c0_i32_8 : i32
    %10 = arith.extui %9 : i1 to i32
    %c0_i32_9 = arith.constant 0 : i32
    %11 = arith.cmpi ne, %10, %c0_i32_9 : i32
    scf.if %11 {
      %c0_10 = arith.constant 0 : index
      %c0_11 = arith.constant 0 : index
      %12 = vector.load %arg9[%c0_10, %c0_11] : memref<16x128xf32, #tpu.memory_space<vmem>>, vector<16x128xf32>
      %c0_12 = arith.constant 0 : index
      %c0_13 = arith.constant 0 : index
      %13 = vector.load %arg4[%c0_12, %c0_13] : memref<1x128xf32, #tpu.memory_space<vmem>>, vector<1x128xf32>
      %14 = vector.broadcast %13 : vector<1x128xf32> to vector<16x128xf32>
      %15 = arith.addf %12, %14 : vector<16x128xf32>
      %c0_14 = arith.constant 0 : index
      %c0_15 = arith.constant 0 : index
      %16 = vector.load %arg5[%c0_14, %c0_15] : memref<16x128xbf16, #tpu.memory_space<vmem>>, vector<16x128xbf16>
      %17 = arith.extf %16 : vector<16x128xbf16> to vector<16x128xf32>
      %18 = arith.addf %15, %17 : vector<16x128xf32>
      %cst_16 = arith.constant dense<0.000000e+00> : vector<16xf32>
      %19 = vector.multi_reduction <add>, %18, %cst_16 [1] : vector<16x128xf32> to vector<16xf32>
      %20 = vector.shape_cast %19 : vector<16xf32> to vector<16x1xf32>
      %cst_17 = arith.constant 1.280000e+02 : f32
      %21 = vector.broadcast %cst_17 : f32 to vector<16x1xf32>
      %22 = arith.divf %20, %21 : vector<16x1xf32>
      %23 = vector.broadcast %22 : vector<16x1xf32> to vector<16x128xf32>
      %24 = arith.subf %18, %23 : vector<16x128xf32>
      %25 = arith.mulf %24, %24 : vector<16x128xf32>
      %cst_18 = arith.constant dense<0.000000e+00> : vector<16xf32>
      %26 = vector.multi_reduction <add>, %25, %cst_18 [1] : vector<16x128xf32> to vector<16xf32>
      %27 = vector.shape_cast %26 : vector<16xf32> to vector<16x1xf32>
      %cst_19 = arith.constant 1.280000e+02 : f32
      %28 = vector.broadcast %cst_19 : f32 to vector<16x1xf32>
      %29 = arith.divf %27, %28 : vector<16x1xf32>
      %cst_20 = arith.constant 9.99999996E-13 : f32
      %30 = vector.broadcast %cst_20 : f32 to vector<16x1xf32>
      %31 = arith.addf %29, %30 : vector<16x1xf32>
      %32 = math.rsqrt %31 : vector<16x1xf32>
      %33 = vector.broadcast %32 : vector<16x1xf32> to vector<16x128xf32>
      %34 = arith.mulf %24, %33 : vector<16x128xf32>
      %c0_21 = arith.constant 0 : index
      %c0_22 = arith.constant 0 : index
      %35 = vector.load %arg6[%c0_21, %c0_22] : memref<1x128xf32, #tpu.memory_space<vmem>>, vector<1x128xf32>
      %36 = vector.broadcast %35 : vector<1x128xf32> to vector<16x128xf32>
      %37 = arith.mulf %34, %36 : vector<16x128xf32>
      %c0_23 = arith.constant 0 : index
      %c0_24 = arith.constant 0 : index
      %38 = vector.load %arg7[%c0_23, %c0_24] : memref<1x128xf32, #tpu.memory_space<vmem>>, vector<1x128xf32>
      %39 = vector.broadcast %38 : vector<1x128xf32> to vector<16x128xf32>
      %40 = arith.addf %37, %39 : vector<16x128xf32>
      %41 = arith.truncf %40 : vector<16x128xf32> to vector<16x128xbf16>
      %c0_25 = arith.constant 0 : index
      %c0_26 = arith.constant 0 : index
      %42 = vector.load %arg8[%c0_25, %c0_26] : memref<16x128xbf16, #tpu.memory_space<vmem>>, vector<16x128xbf16>
      tpu.vector_store %arg8[%c0_25, %c0_26], %41 {strides = array<i32>} : memref<16x128xbf16, #tpu.memory_space<vmem>>, vector<16x128xbf16>,
    } else {
    }
    return
  }
  func.func @transform_0(%arg0: i32, %arg1: i32) -> (i32, i32) {
    %c0_i32 = arith.constant 0 : i32
    return %arg0, %arg1 : i32, i32
  }
  func.func @transform_1(%arg0: i32, %arg1: i32) -> (i32, i32) {
    %c0_i32 = arith.constant 0 : i32
    %c0_i32_0 = arith.constant 0 : i32
    return %arg1, %c0_i32 : i32, i32
  }
  func.func @transform_2(%arg0: i32, %arg1: i32) -> (i32, i32) {
    %c0_i32 = arith.constant 0 : i32
    %c0_i32_0 = arith.constant 0 : i32
    %c0_i32_1 = arith.constant 0 : i32
    return %c0_i32, %c0_i32_0 : i32, i32
  }
  func.func @transform_3(%arg0: i32, %arg1: i32) -> (i32, i32) {
    %c0_i32 = arith.constant 0 : i32
    %c0_i32_0 = arith.constant 0 : i32
    return %arg0, %c0_i32 : i32, i32
  }
  func.func @transform_4(%arg0: i32, %arg1: i32) -> (i32, i32) {
    %c0_i32 = arith.constant 0 : i32
    %c0_i32_0 = arith.constant 0 : i32
    %c0_i32_1 = arith.constant 0 : i32
    return %c0_i32, %c0_i32_0 : i32, i32
  }
  func.func @transform_5(%arg0: i32, %arg1: i32) -> (i32, i32) {
    %c0_i32 = arith.constant 0 : i32
    %c0_i32_0 = arith.constant 0 : i32
    %c0_i32_1 = arith.constant 0 : i32
    return %c0_i32, %c0_i32_0 : i32, i32
  }
  func.func @transform_6(%arg0: i32, %arg1: i32) -> (i32, i32) {
    %c0_i32 = arith.constant 0 : i32
    %c0_i32_0 = arith.constant 0 : i32
    return %arg0, %c0_i32 : i32, i32
  }
}

module attributes {stable_mosaic.version = 11 : i64} {
  func.func @_dense_kernel(%arg0: i32, %arg1: i32, %arg2: i32, %arg3: memref<16x128xbf16, #tpu.memory_space<vmem>>, %arg4: memref<128x128xbf16, #tpu.memory_space<vmem>>, %arg5: memref<1x128xf32, #tpu.memory_space<vmem>>, %arg6: memref<16x128xf32, #tpu.memory_space<vmem>>, %arg7: memref<16x128xf32, #tpu.memory_space<vmem>>) attributes {dimension_semantics = [#tpu.dimension_semantics<parallel>, #tpu.dimension_semantics<parallel>, #tpu.dimension_semantics<arbitrary>], iteration_bounds = array<i64: 1, 1, 1>, scalar_prefetch = 0 : i64, scratch_operands = 1 : i64, tpu.core_type = #tpu.core_type<tc>, window_params = [{transform_indices = @transform_0, window_bounds = array<i64: 16, 128>}, {transform_indices = @transform_1, window_bounds = array<i64: 128, 128>}, {transform_indices = @transform_2, window_bounds = array<i64: 1, 128>}, {transform_indices = @transform_3, window_bounds = array<i64: 16, 128>}]} {
    %c0_i32 = arith.constant 0 : i32
    %0 = arith.cmpi eq, %arg2, %c0_i32 : i32
    %1 = arith.extui %0 : i1 to i32
    %c0_i32_0 = arith.constant 0 : i32
    %2 = arith.cmpi ne, %1, %c0_i32_0 : i32
    scf.if %2 {
      %cst_10 = arith.constant 0.000000e+00 : f32
      %12 = vector.broadcast %cst_10 : f32 to vector<16x128xf32>
      %c0_11 = arith.constant 0 : index
      %c0_12 = arith.constant 0 : index
      %13 = vector.load %arg7[%c0_11, %c0_12] : memref<16x128xf32, #tpu.memory_space<vmem>>, vector<16x128xf32>
      tpu.vector_store %arg7[%c0_11, %c0_12], %12 {strides = array<i32>} : memref<16x128xf32, #tpu.memory_space<vmem>>, vector<16x128xf32>,
    } else {
    }
    %c0 = arith.constant 0 : index
    %c0_1 = arith.constant 0 : index
    %3 = vector.load %arg7[%c0, %c0_1] : memref<16x128xf32, #tpu.memory_space<vmem>>, vector<16x128xf32>
    %c0_2 = arith.constant 0 : index
    %c0_3 = arith.constant 0 : index
    %4 = vector.load %arg3[%c0_2, %c0_3] : memref<16x128xbf16, #tpu.memory_space<vmem>>, vector<16x128xbf16>
    %c0_4 = arith.constant 0 : index
    %c0_5 = arith.constant 0 : index
    %5 = vector.load %arg4[%c0_4, %c0_5] : memref<128x128xbf16, #tpu.memory_space<vmem>>, vector<128x128xbf16>
    %cst = arith.constant dense<0.000000e+00> : vector<16x128xf32>
    %6 = tpu.matmul %4, %5, %cst {dimension_numbers = #tpu.dot_dimension_numbers<[1], [0], [0], [1], [0, 0, 1, 1], [], []>} : vector<16x128xbf16>, vector<128x128xbf16>, vector<16x128xf32> -> vector<16x128xf32>
    %7 = arith.addf %3, %6 : vector<16x128xf32>
    %c0_6 = arith.constant 0 : index
    %c0_7 = arith.constant 0 : index
    %8 = vector.load %arg7[%c0_6, %c0_7] : memref<16x128xf32, #tpu.memory_space<vmem>>, vector<16x128xf32>
    tpu.vector_store %arg7[%c0_6, %c0_7], %7 {strides = array<i32>} : memref<16x128xf32, #tpu.memory_space<vmem>>, vector<16x128xf32>,
    %c0_i32_8 = arith.constant 0 : i32
    %9 = arith.cmpi eq, %arg2, %c0_i32_8 : i32
    %10 = arith.extui %9 : i1 to i32
    %c0_i32_9 = arith.constant 0 : i32
    %11 = arith.cmpi ne, %10, %c0_i32_9 : i32
    scf.if %11 {
      %c0_10 = arith.constant 0 : index
      %c0_11 = arith.constant 0 : index
      %12 = vector.load %arg7[%c0_10, %c0_11] : memref<16x128xf32, #tpu.memory_space<vmem>>, vector<16x128xf32>
      %c0_12 = arith.constant 0 : index
      %c0_13 = arith.constant 0 : index
      %13 = vector.load %arg5[%c0_12, %c0_13] : memref<1x128xf32, #tpu.memory_space<vmem>>, vector<1x128xf32>
      %14 = vector.broadcast %13 : vector<1x128xf32> to vector<16x128xf32>
      %15 = arith.addf %12, %14 : vector<16x128xf32>
      %c0_14 = arith.constant 0 : index
      %c0_15 = arith.constant 0 : index
      %16 = vector.load %arg6[%c0_14, %c0_15] : memref<16x128xf32, #tpu.memory_space<vmem>>, vector<16x128xf32>
      tpu.vector_store %arg6[%c0_14, %c0_15], %15 {strides = array<i32>} : memref<16x128xf32, #tpu.memory_space<vmem>>, vector<16x128xf32>,
    } else {
    }
    return
  }
  func.func @transform_0(%arg0: i32, %arg1: i32, %arg2: i32) -> (i32, i32) {
    %c0_i32 = arith.constant 0 : i32
    return %arg0, %arg2 : i32, i32
  }
  func.func @transform_1(%arg0: i32, %arg1: i32, %arg2: i32) -> (i32, i32) {
    %c0_i32 = arith.constant 0 : i32
    return %arg2, %arg1 : i32, i32
  }
  func.func @transform_2(%arg0: i32, %arg1: i32, %arg2: i32) -> (i32, i32) {
    %c0_i32 = arith.constant 0 : i32
    %c0_i32_0 = arith.constant 0 : i32
    return %c0_i32, %arg1 : i32, i32
  }
  func.func @transform_3(%arg0: i32, %arg1: i32, %arg2: i32) -> (i32, i32) {
    %c0_i32 = arith.constant 0 : i32
    return %arg0, %arg1 : i32, i32
  }
}

</mosaic_0001>

<llo_original>
// kernel: net_forward.12
$region0: #{net_forward.12}
  #allocation0 [shape = 'u32[]', space=smem, size = 0x4, offset = 0x4, fixed_abs, tag = 'smem constant byte address 0x4 - core index']
  #allocation1 [shape = 'u32[144,128]{1,0:T(1,128)}', space=vmem, size = 0x12000, scoped, tag = 'internal scratch']
  %s0 = inlined_call_operand.vmem [shape: bf16[16,128], index: 0, kind: input, shape index: {}]
  %s1 = inlined_call_operand.vmem [shape: f32[1,128], index: 1, kind: input, shape index: {}]
  %s2 = inlined_call_operand.vmem [shape: f32[1,128], index: 2, kind: input, shape index: {}]
  %s3 = inlined_call_operand.vmem [shape: bf16[16,128], index: 3, kind: output, shape index: {}]
  %s4 = sld [smem:[#allocation0]]
  $region22: #{net_forward.12} parent=0
    _
  %s6 = ssub.s32 1, %s4
  %s7 = scalar_select 0, %s6, %s4
  // Predicated region
  $region2: #{net_forward.12} parent=0 // pred_check
    _
  $region3: #{net_forward.12} parent=0 // pred_check_branch
    %9 = sbr.rel (0) target = $region5
  $region4: #{net_forward.12} parent=0 // pred_region
    _
  $region5: #{net_forward.12} parent=0 // pred_fallthru
    _
  // Predicated region
  $region6: #{net_forward.12} parent=0 // pred_check
    _
  $region7: #{net_forward.12} parent=0 // pred_check_branch
    %11 = sbr.rel (0) target = $region9
  $region8: #{net_forward.12} parent=0 // pred_region
    _
  $region9: #{net_forward.12} parent=0 // pred_fallthru
    _
  // Predicated region
  $region10: #{net_forward.12} parent=0 // pred_check
    _
  $region11: #{net_forward.12} parent=0 // pred_check_branch
    %13 = sbr.rel (0) target = $region13
  $region12: #{net_forward.12} parent=0 // pred_region
    _
  $region13: #{net_forward.12} parent=0 // pred_fallthru
    _
  %v14 = vld [vmem:[%s0] sm:$0xf]
  %v15 = vld [vmem:[%s0 + $0x4] sm:$0xf]
  %v16 = vunpack.c.l.bf16 %v14
  %v17 = vunpack.c.l.bf16 %v15
  %18 = vadd.xlane.f32.xlu0 %v16
  %v19 = vpop.xlane.xlu0 %18
  %20 = vadd.xlane.f32.xlu0 %v17
  %v21 = vpop.xlane.xlu0 %20
  %v22 = vrcp.pop 128.0
  %v23 = vmul.f32 %v19, %v22
  %v24 = vmul.f32 %v21, %v22
  %v25 = vsub.f32 %v16, %v23
  %v26 = vsub.f32 %v17, %v24
  %v27 = vmul.f32 %v25, %v25
  %v28 = vmul.f32 %v26, %v26
  %29 = vadd.xlane.f32.xlu0 %v27
  %v30 = vpop.xlane.xlu0 %29
  %31 = vadd.xlane.f32.xlu0 %v28
  %v32 = vpop.xlane.xlu0 %31
  %v33 = vmul.f32 %v30, %v22
  %v34 = vmul.f32 %v32, %v22
  %v35 = vadd.f32 %v33, 1e-12
  %v36 = vadd.f32 %v34, 1e-12
  %v37 = vrsqrt.pop %v35
  %v38 = vrsqrt.pop %v36
  %v39 = vmul.f32 %v25, %v37
  %v40 = vmul.f32 %v26, %v38
  %v41 = vld [vmem:[%s1] sm:$0x1]
  %v43 = vlaneseq
  %v44 = vshrl.u32 %v43, 7
  %v45 = vsub.s32 0, %v44
  %v46 = vrot.slane %v41, %v45
  %v48 = vmul.f32 %v39, %v46
  %v49 = vmul.f32 %v40, %v46
  %v50 = vld [vmem:[%s2] sm:$0x1]
  %v52 = vlaneseq
  %v53 = vshrl.u32 %v52, 7
  %v54 = vsub.s32 0, %v53
  %v55 = vrot.slane %v50, %v54
  %v57 = vadd.f32 %v48, %v55
  %v58 = vadd.f32 %v49, %v55
  %v59 = vpack.c.bf16 %v58, %v57
  %v61 = vunpack.c.l.b16 %v59
  %v62 = vunpack.c.h.b16 %v59
  %v63 = vpack.c.b16 %v61, %v61
  %v64 = vpack.c.b16 %v62, %v62
  %67 = vst [vmem:[%s3] sm:$0xf] %v63
  %68 = vst [vmem:[%s3 + $0x4] sm:$0xf] %v64
  // Predicated region
  $region14: #{net_forward.12} parent=0 // pred_check
    _
  $region15: #{net_forward.12} parent=0 // pred_check_branch
    %70 = sbr.rel (0) target = $region17
  $region16: #{net_forward.12} parent=0 // pred_region
    _
  $region17: #{net_forward.12} parent=0 // pred_fallthru
    _
  // Predicated region
  $region18: #{net_forward.12} parent=0 // pred_check
    _
  $region19: #{net_forward.12} parent=0 // pred_check_branch
    %72 = sbr.rel (0) target = $region21
  $region20: #{net_forward.12} parent=0 // pred_region
    _
  $region21: #{net_forward.12} parent=0 // pred_fallthru
    _

// kernel: net_forward.15
$region0: #{net_forward.15}
  #allocation0 [shape = 'u32[]', space=smem, size = 0x4, offset = 0x4, fixed_abs, tag = 'smem constant byte address 0x4 - core index']
  #allocation1 [shape = 'u32[144,128]{1,0:T(1,128)}', space=vmem, size = 0x12000, scoped, tag = 'internal scratch']
  #allocation2 [shape = 'f32[16,128]{1,0:T(8,128)}', space=vmem, size = 0x2000, scoped, tag = 'scratch operand']
  %s0 = inlined_call_operand.vmem [shape: bf16[16,128], index: 0, kind: input, shape index: {}]
  %s1 = inlined_call_operand.vmem [shape: bf16[128,128], index: 1, kind: input, shape index: {}]
  %s2 = inlined_call_operand.vmem [shape: f32[1,128], index: 2, kind: input, shape index: {}]
  %s3 = inlined_call_operand.vmem [shape: bf16[16,128], index: 3, kind: input, shape index: {}]
  %s4 = inlined_call_operand.vmem [shape: f32[1,128], index: 4, kind: input, shape index: {}]
  %s5 = inlined_call_operand.vmem [shape: f32[1,128], index: 5, kind: input, shape index: {}]
  %s6 = inlined_call_operand.vmem [shape: bf16[16,128], index: 6, kind: output, shape index: {}]
  %s7 = sld [smem:[#allocation0]]
  $region42: #{net_forward.15} parent=0
    _
  %s9 = ssub.s32 1, %s7
  %s10 = scalar_select 0, %s9, %s7
  // Predicated region
  $region2: #{net_forward.15} parent=0 // pred_check
    _
  $region3: #{net_forward.15} parent=0 // pred_check_branch
    %12 = sbr.rel (0) target = $region5
  $region4: #{net_forward.15} parent=0 // pred_region
    _
  $region5: #{net_forward.15} parent=0 // pred_fallthru
    _
  // Predicated region
  $region6: #{net_forward.15} parent=0 // pred_check
    _
  $region7: #{net_forward.15} parent=0 // pred_check_branch
    %14 = sbr.rel (0) target = $region9
  $region8: #{net_forward.15} parent=0 // pred_region
    _
  $region9: #{net_forward.15} parent=0 // pred_fallthru
    _
  // Predicated region
  $region10: #{net_forward.15} parent=0 // pred_check
    _
  $region11: #{net_forward.15} parent=0 // pred_check_branch
    %16 = sbr.rel (0) target = $region13
  $region12: #{net_forward.15} parent=0 // pred_region
    _
  $region13: #{net_forward.15} parent=0 // pred_fallthru
    _
  // Predicated region
  $region14: #{net_forward.15} parent=0 // pred_check
    _
  $region15: #{net_forward.15} parent=0 // pred_check_branch
    %18 = sbr.rel (0) target = $region17
  $region16: #{net_forward.15} parent=0 // pred_region
    _
  $region17: #{net_forward.15} parent=0 // pred_fallthru
    _
  // Predicated region
  $region18: #{net_forward.15} parent=0 // pred_check
    _
  $region19: #{net_forward.15} parent=0 // pred_check_branch
    %20 = sbr.rel (0) target = $region21
  $region20: #{net_forward.15} parent=0 // pred_region
    _
  $region21: #{net_forward.15} parent=0 // pred_fallthru
    _
  // Predicated region
  $region22: #{net_forward.15} parent=0 // pred_check
    _
  $region23: #{net_forward.15} parent=0 // pred_check_branch
    %22 = sbr.rel (0) target = $region25
  $region24: #{net_forward.15} parent=0 // pred_region
    _
  $region25: #{net_forward.15} parent=0 // pred_fallthru
    _
  %p24 = scmp.eq.s32.totalorder 0, 0
  // Predicated region
  $region26: #{net_forward.15} parent=0 // pred_check
    %p25 = pneg %p24
  $region27: #{net_forward.15} parent=0 // pred_check_branch
    %27 = sbr.rel (%p25) target = $region29
  $region28: #{net_forward.15} parent=0 // pred_region
    %28 = vst [vmem:[#allocation2] sm:$0xff] 0.0
    %29 = vst [vmem:[#allocation2 + $0x8] sm:$0xff] 0.0
  $region29: #{net_forward.15} parent=0 // pred_fallthru
    _
  %v30 = vld [vmem:[#allocation2] sm:$0xff]
  %v31 = vld [vmem:[#allocation2 + $0x8] sm:$0xff]
  %v32 = vld [vmem:[%s0] sm:$0xf]
  %v33 = vld [vmem:[%s0 + $0x4] sm:$0xf]
  %v34 = vld [vmem:[%s1] sm:$0xf]
  %v35 = vld [vmem:[%s1 + $0x4] sm:$0xf]
  %v36 = vld [vmem:[%s1 + $0x8] sm:$0xf]
  %v37 = vld [vmem:[%s1 + $0xc] sm:$0xf]
  %v38 = vld [vmem:[%s1 + $0x10] sm:$0xf]
  %v39 = vld [vmem:[%s1 + $0x14] sm:$0xf]
  %v40 = vld [vmem:[%s1 + $0x18] sm:$0xf]
  %v41 = vld [vmem:[%s1 + $0x1c] sm:$0xf]
  %v42 = vld [vmem:[%s1 + $0x20] sm:$0xf]
  %v43 = vld [vmem:[%s1 + $0x24] sm:$0xf]
  %v44 = vld [vmem:[%s1 + $0x28] sm:$0xf]
  %v45 = vld [vmem:[%s1 + $0x2c] sm:$0xf]
  %v46 = vld [vmem:[%s1 + $0x30] sm:$0xf]
  %v47 = vld [vmem:[%s1 + $0x34] sm:$0xf]
  %v48 = vld [vmem:[%s1 + $0x38] sm:$0xf]
  %v49 = vld [vmem:[%s1 + $0x3c] sm:$0xf]
  %v52 = vunpack.c.l.b16 %v32
  %v53 = vunpack.c.l.b16 %v33
  %v54 = vpack.c.b16 %v53, %v52
  %v72 = vunpack.c.l.b16 %v34
  %v73 = vunpack.c.l.b16 %v35
  %v74 = vunpack.c.l.b16 %v36
  %v75 = vunpack.c.l.b16 %v37
  %v76 = vunpack.c.l.b16 %v38
  %v77 = vunpack.c.l.b16 %v39
  %v78 = vunpack.c.l.b16 %v40
  %v79 = vunpack.c.l.b16 %v41
  %v80 = vunpack.c.l.b16 %v42
  %v81 = vunpack.c.l.b16 %v43
  %v82 = vunpack.c.l.b16 %v44
  %v83 = vunpack.c.l.b16 %v45
  %v84 = vunpack.c.l.b16 %v46
  %v85 = vunpack.c.l.b16 %v47
  %v86 = vunpack.c.l.b16 %v48
  %v87 = vunpack.c.l.b16 %v49
  %v88 = vpack.c.b16 %v73, %v72
  %v89 = vpack.c.b16 %v75, %v74
  %v90 = vpack.c.b16 %v77, %v76
  %v91 = vpack.c.b16 %v79, %v78
  %v92 = vpack.c.b16 %v81, %v80
  %v93 = vpack.c.b16 %v83, %v82
  %v94 = vpack.c.b16 %v85, %v84
  %v95 = vpack.c.b16 %v87, %v86
  %104 = vmatprep.subr.bf16.mxu0 0
  %105 = vmatpush1.bf16.msra.mxu0 %v88
  %106 = vmatprep.subr.bf16.mxu0 0
  %107 = vmatpush1.bf16.msra.mxu0 %v89
  %108 = vmatprep.subr.bf16.mxu0 0
  %109 = vmatpush1.bf16.msra.mxu0 %v90
  %110 = vmatprep.subr.bf16.mxu0 0
  %111 = vmatpush1.bf16.msra.mxu0 %v91
  %112 = vmatprep.subr.bf16.mxu0 0
  %113 = vmatpush1.bf16.msra.mxu0 %v92
  %114 = vmatprep.subr.bf16.mxu0 0
  %115 = vmatpush1.bf16.msra.mxu0 %v93
  %116 = vmatprep.subr.bf16.mxu0 0
  %117 = vmatpush1.bf16.msra.mxu0 %v94
  %118 = vmatprep.subr.bf16.mxu0 0
  %119 = vmatpush1.bf16.msra.mxu0 %v95
  %120 = vmatprep.subr.bf16.mxu0 0
  %121 = vmatpush1.bf16.msra.mxu0 0
  %122 = vmatprep.subr.bf16.mxu0 0
  %123 = vmatpush1.bf16.msra.mxu0 0
  %124 = vmatprep.subr.bf16.mxu0 0
  %125 = vmatpush1.bf16.msra.mxu0 0
  %126 = vmatprep.subr.bf16.mxu0 0
  %127 = vmatpush1.bf16.msra.mxu0 0
  %128 = vmatprep.subr.bf16.mxu0 0
  %129 = vmatpush1.bf16.msra.mxu0 0
  %130 = vmatprep.subr.bf16.mxu0 0
  %131 = vmatpush1.bf16.msra.mxu0 0
  %132 = vmatprep.subr.bf16.mxu0 0
  %133 = vmatpush1.bf16.msra.mxu0 0
  %134 = vmatprep.subr.bf16.mxu0 0
  %135 = vmatpush1.bf16.msra.mxu0 0
  %136 = vmatprep.mubr.bf16.mxu0 0
  %137 = vmatmul.mubr.bf16.gmra.mrb[0].mxu0 %v54
  %v138 = vpop.f32.mrb[0].mxu0
  %v139 = vadd.f32 0.0, %v138
  %v140 = vpop.f32.mrb[0].mxu0
  %v141 = vpop.f32.mrb[0].mxu0
  %v142 = vadd.f32 0.0, %v141
  %v143 = vpop.f32.mrb[0].mxu0
  %144 = vdwg.mxu0
  %v145 = vadd.f32 %v30, %v139
  %v146 = vadd.f32 %v31, %v142
  %147 = vst [vmem:[#allocation2] sm:$0xff] %v145
  %148 = vst [vmem:[#allocation2 + $0x8] sm:$0xff] %v146
  // Predicated region
  $region30: #{net_forward.15} parent=0 // pred_check
    %p149 = pneg %p24
  $region31: #{net_forward.15} parent=0 // pred_check_branch
    %151 = sbr.rel (%p149) target = $region33
  $region32: #{net_forward.15} parent=0 // pred_region
    %v152 = vld [vmem:[#allocation2] sm:$0xff]
    %v153 = vld [vmem:[#allocation2 + $0x8] sm:$0xff]
    %v154 = vld [vmem:[%s2] sm:$0x1]
    %v156 = vlaneseq
    %v157 = vshrl.u32 %v156, 7
    %v158 = vsub.s32 0, %v157
    %v159 = vrot.slane %v154, %v158
    %v161 = vadd.f32 %v152, %v159
    %v162 = vadd.f32 %v153, %v159
    %v163 = vld [vmem:[%s3] sm:$0xf]
    %v164 = vld [vmem:[%s3 + $0x4] sm:$0xf]
    %v165 = vunpack.c.l.bf16 %v163
    %v166 = vunpack.c.l.bf16 %v164
    %v167 = vadd.f32 %v161, %v165
    %v168 = vadd.f32 %v162, %v166
    %169 = vadd.xlane.f32.xlu0 %v167
    %v170 = vpop.xlane.xlu0 %169
    %171 = vadd.xlane.f32.xlu0 %v168
    %v172 = vpop.xlane.xlu0 %171
    %v173 = vrcp.pop 128.0
    %v174 = vmul.f32 %v170, %v173
    %v175 = vmul.f32 %v172, %v173
    %v176 = vsub.f32 %v167, %v174
    %v177 = vsub.f32 %v168, %v175
    %v178 = vmul.f32 %v176, %v176
    %v179 = vmul.f32 %v177, %v177
    %180 = vadd.xlane.f32.xlu0 %v178
    %v181 = vpop.xlane.xlu0 %180
    %182 = vadd.xlane.f32.xlu0 %v179
    %v183 = vpop.xlane.xlu0 %182
    %v184 = vmul.f32 %v181, %v173
    %v185 = vmul.f32 %v183, %v173
    %v186 = vadd.f32 %v184, 1e-12
    %v187 = vadd.f32 %v185, 1e-12
    %v188 = vrsqrt.pop %v186
    %v189 = vrsqrt.pop %v187
    %v190 = vmul.f32 %v176, %v188
    %v191 = vmul.f32 %v177, %v189
    %v192 = vld [vmem:[%s4] sm:$0x1]
    %v194 = vlaneseq
    %v195 = vshrl.u32 %v194, 7
    %v196 = vsub.s32 0, %v195
    %v197 = vrot.slane %v192, %v196
    %v199 = vmul.f32 %v190, %v197
    %v200 = vmul.f32 %v191, %v197
    %v201 = vld [vmem:[%s5] sm:$0x1]
    %v203 = vlaneseq
    %v204 = vshrl.u32 %v203, 7
    %v205 = vsub.s32 0, %v204
    %v206 = vrot.slane %v201, %v205
    %v208 = vadd.f32 %v199, %v206
    %v209 = vadd.f32 %v200, %v206
    %v210 = vpack.c.bf16 %v209, %v208
    %v212 = vunpack.c.l.b16 %v210
    %v213 = vunpack.c.h.b16 %v210
    %v214 = vpack.c.b16 %v212, %v212
    %v215 = vpack.c.b16 %v213, %v213
    %218 = vst [vmem:[%s6] sm:$0xf] %v214
    %219 = vst [vmem:[%s6 + $0x4] sm:$0xf] %v215
  $region33: #{net_forward.15} parent=0 // pred_fallthru
    _
  // Predicated region
  $region34: #{net_forward.15} parent=0 // pred_check
    _
  $region35: #{net_forward.15} parent=0 // pred_check_branch
    %221 = sbr.rel (0) target = $region37
  $region36: #{net_forward.15} parent=0 // pred_region
    _
  $region37: #{net_forward.15} parent=0 // pred_fallthru
    _
  // Predicated region
  $region38: #{net_forward.15} parent=0 // pred_check
    _
  $region39: #{net_forward.15} parent=0 // pred_check_branch
    %223 = sbr.rel (0) target = $region41
  $region40: #{net_forward.15} parent=0 // pred_region
    _
  $region41: #{net_forward.15} parent=0 // pred_fallthru
    _

// kernel: net_forward.13
$region0: #{net_forward.13}
  #allocation0 [shape = 'u32[]', space=smem, size = 0x4, offset = 0x4, fixed_abs, tag = 'smem constant byte address 0x4 - core index']
  #allocation1 [shape = 'u32[144,128]{1,0:T(1,128)}', space=vmem, size = 0x12000, scoped, tag = 'internal scratch']
  #allocation2 [shape = 'f32[16,384]{1,0:T(8,128)}', space=vmem, size = 0x6000, scoped, tag = 'scratch operand']
  %s0 = inlined_call_operand.vmem [shape: bf16[16,128], index: 0, kind: input, shape index: {}]
  %s1 = inlined_call_operand.vmem [shape: bf16[128,384], index: 1, kind: input, shape index: {}]
  %s2 = inlined_call_operand.vmem [shape: f32[1,384], index: 2, kind: input, shape index: {}]
  %s3 = inlined_call_operand.vmem [shape: bf16[16,384], index: 3, kind: output, shape index: {}]
  %s4 = sld [smem:[#allocation0]]
  $region30: #{net_forward.13} parent=0
    _
  %s6 = ssub.s32 1, %s4
  %s7 = scalar_select 0, %s6, %s4
  // Predicated region
  $region2: #{net_forward.13} parent=0 // pred_check
    _
  $region3: #{net_forward.13} parent=0 // pred_check_branch
    %9 = sbr.rel (0) target = $region5
  $region4: #{net_forward.13} parent=0 // pred_region
    _
  $region5: #{net_forward.13} parent=0 // pred_fallthru
    _
  // Predicated region
  $region6: #{net_forward.13} parent=0 // pred_check
    _
  $region7: #{net_forward.13} parent=0 // pred_check_branch
    %11 = sbr.rel (0) target = $region9
  $region8: #{net_forward.13} parent=0 // pred_region
    _
  $region9: #{net_forward.13} parent=0 // pred_fallthru
    _
  // Predicated region
  $region10: #{net_forward.13} parent=0 // pred_check
    _
  $region11: #{net_forward.13} parent=0 // pred_check_branch
    %13 = sbr.rel (0) target = $region13
  $region12: #{net_forward.13} parent=0 // pred_region
    _
  $region13: #{net_forward.13} parent=0 // pred_fallthru
    _
  %p15 = scmp.eq.s32.totalorder 0, 0
  // Predicated region
  $region14: #{net_forward.13} parent=0 // pred_check
    %p16 = pneg %p15
  $region15: #{net_forward.13} parent=0 // pred_check_branch
    %18 = sbr.rel (%p16) target = $region17
  $region16: #{net_forward.13} parent=0 // pred_region
    %19 = vst [vmem:[#allocation2] sm:$0xff] 0.0
    %20 = vst [vmem:[#allocation2 + $0x8] sm:$0xff] 0.0
    %21 = vst [vmem:[#allocation2 + $0x10] sm:$0xff] 0.0
    %22 = vst [vmem:[#allocation2 + $0x18] sm:$0xff] 0.0
    %23 = vst [vmem:[#allocation2 + $0x20] sm:$0xff] 0.0
    %24 = vst [vmem:[#allocation2 + $0x28] sm:$0xff] 0.0
  $region17: #{net_forward.13} parent=0 // pred_fallthru
    _
  %v25 = vld [vmem:[#allocation2] sm:$0xff]
  %v26 = vld [vmem:[#allocation2 + $0x8] sm:$0xff]
  %v27 = vld [vmem:[#allocation2 + $0x10] sm:$0xff]
  %v28 = vld [vmem:[#allocation2 + $0x18] sm:$0xff]
  %v29 = vld [vmem:[#allocation2 + $0x20] sm:$0xff]
  %v30 = vld [vmem:[#allocation2 + $0x28] sm:$0xff]
  %v31 = vld [vmem:[%s0] sm:$0xf]
  %v32 = vld [vmem:[%s0 + $0x4] sm:$0xf]
  %v33 = vld [vmem:[%s1] sm:$0xff]
  %v34 = vld [vmem:[%s1 + $0x8] sm:$0xf]
  %v35 = vld [vmem:[%s1 + $0xc] sm:$0xff]
  %v36 = vld [vmem:[%s1 + $0x14] sm:$0xf]
  %v37 = vld [vmem:[%s1 + $0x18] sm:$0xff]
  %v38 = vld [vmem:[%s1 + $0x20] sm:$0xf]
  %v39 = vld [vmem:[%s1 + $0x24] sm:$0xff]
  %v40 = vld [vmem:[%s1 + $0x2c] sm:$0xf]
  %v41 = vld [vmem:[%s1 + $0x30] sm:$0xff]
  %v42 = vld [vmem:[%s1 + $0x38] sm:$0xf]
  %v43 = vld [vmem:[%s1 + $0x3c] sm:$0xff]
  %v44 = vld [vmem:[%s1 + $0x44] sm:$0xf]
  %v45 = vld [vmem:[%s1 + $0x48] sm:$0xff]
  %v46 = vld [vmem:[%s1 + $0x50] sm:$0xf]
  %v47 = vld [vmem:[%s1 + $0x54] sm:$0xff]
  %v48 = vld [vmem:[%s1 + $0x5c] sm:$0xf]
  %v49 = vld [vmem:[%s1 + $0x60] sm:$0xff]
  %v50 = vld [vmem:[%s1 + $0x68] sm:$0xf]
  %v51 = vld [vmem:[%s1 + $0x6c] sm:$0xff]
  %v52 = vld [vmem:[%s1 + $0x74] sm:$0xf]
  %v53 = vld [vmem:[%s1 + $0x78] sm:$0xff]
  %v54 = vld [vmem:[%s1 + $0x80] sm:$0xf]
  %v55 = vld [vmem:[%s1 + $0x84] sm:$0xff]
  %v56 = vld [vmem:[%s1 + $0x8c] sm:$0xf]
  %v57 = vld [vmem:[%s1 + $0x90] sm:$0xff]
  %v58 = vld [vmem:[%s1 + $0x98] sm:$0xf]
  %v59 = vld [vmem:[%s1 + $0x9c] sm:$0xff]
  %v60 = vld [vmem:[%s1 + $0xa4] sm:$0xf]
  %v61 = vld [vmem:[%s1 + $0xa8] sm:$0xff]
  %v62 = vld [vmem:[%s1 + $0xb0] sm:$0xf]
  %v63 = vld [vmem:[%s1 + $0xb4] sm:$0xff]
  %v64 = vld [vmem:[%s1 + $0xbc] sm:$0xf]
  %v67 = vunpack.c.l.b16 %v31
  %v68 = vunpack.c.l.b16 %v32
  %v69 = vpack.c.b16 %v68, %v67
  %v103 = vunpack.c.l.b16 %v33
  %v104 = vunpack.c.h.b16 %v33
  %v105 = vunpack.c.l.b16 %v34
  %v106 = vunpack.c.l.b16 %v35
  %v107 = vunpack.c.h.b16 %v35
  %v108 = vunpack.c.l.b16 %v36
  %v109 = vunpack.c.l.b16 %v37
  %v110 = vunpack.c.h.b16 %v37
  %v111 = vunpack.c.l.b16 %v38
  %v112 = vunpack.c.l.b16 %v39
  %v113 = vunpack.c.h.b16 %v39
  %v114 = vunpack.c.l.b16 %v40
  %v115 = vunpack.c.l.b16 %v41
  %v116 = vunpack.c.h.b16 %v41
  %v117 = vunpack.c.l.b16 %v42
  %v118 = vunpack.c.l.b16 %v43
  %v119 = vunpack.c.h.b16 %v43
  %v120 = vunpack.c.l.b16 %v44
  %v121 = vunpack.c.l.b16 %v45
  %v122 = vunpack.c.h.b16 %v45
  %v123 = vunpack.c.l.b16 %v46
  %v124 = vunpack.c.l.b16 %v47
  %v125 = vunpack.c.h.b16 %v47
  %v126 = vunpack.c.l.b16 %v48
  %v127 = vunpack.c.l.b16 %v49
  %v128 = vunpack.c.h.b16 %v49
  %v129 = vunpack.c.l.b16 %v50
  %v130 = vunpack.c.l.b16 %v51
  %v131 = vunpack.c.h.b16 %v51
  %v132 = vunpack.c.l.b16 %v52
  %v133 = vunpack.c.l.b16 %v53
  %v134 = vunpack.c.h.b16 %v53
  %v135 = vunpack.c.l.b16 %v54
  %v136 = vunpack.c.l.b16 %v55
  %v137 = vunpack.c.h.b16 %v55
  %v138 = vunpack.c.l.b16 %v56
  %v139 = vunpack.c.l.b16 %v57
  %v140 = vunpack.c.h.b16 %v57
  %v141 = vunpack.c.l.b16 %v58
  %v142 = vunpack.c.l.b16 %v59
  %v143 = vunpack.c.h.b16 %v59
  %v144 = vunpack.c.l.b16 %v60
  %v145 = vunpack.c.l.b16 %v61
  %v146 = vunpack.c.h.b16 %v61
  %v147 = vunpack.c.l.b16 %v62
  %v148 = vunpack.c.l.b16 %v63
  %v149 = vunpack.c.h.b16 %v63
  %v150 = vunpack.c.l.b16 %v64
  %v151 = vpack.c.b16 %v106, %v103
  %v152 = vpack.c.b16 %v107, %v104
  %v153 = vpack.c.b16 %v108, %v105
  %v154 = vpack.c.b16 %v112, %v109
  %v155 = vpack.c.b16 %v113, %v110
  %v156 = vpack.c.b16 %v114, %v111
  %v157 = vpack.c.b16 %v118, %v115
  %v158 = vpack.c.b16 %v119, %v116
  %v159 = vpack.c.b16 %v120, %v117
  %v160 = vpack.c.b16 %v124, %v121
  %v161 = vpack.c.b16 %v125, %v122
  %v162 = vpack.c.b16 %v126, %v123
  %v163 = vpack.c.b16 %v130, %v127
  %v164 = vpack.c.b16 %v131, %v128
  %v165 = vpack.c.b16 %v132, %v129
  %v166 = vpack.c.b16 %v136, %v133
  %v167 = vpack.c.b16 %v137, %v134
  %v168 = vpack.c.b16 %v138, %v135
  %v169 = vpack.c.b16 %v142, %v139
  %v170 = vpack.c.b16 %v143, %v140
  %v171 = vpack.c.b16 %v144, %v141
  %v172 = vpack.c.b16 %v148, %v145
  %v173 = vpack.c.b16 %v149, %v146
  %v174 = vpack.c.b16 %v150, %v147
  %199 = vmatprep.subr.bf16.mxu0 %v152
  %200 = vmatpush1.bf16.msra.mxu0 %v151
  %201 = vmatprep.subr.bf16.mxu0 %v155
  %202 = vmatpush1.bf16.msra.mxu0 %v154
  %203 = vmatprep.subr.bf16.mxu0 %v158
  %204 = vmatpush1.bf16.msra.mxu0 %v157
  %205 = vmatprep.subr.bf16.mxu0 %v161
  %206 = vmatpush1.bf16.msra.mxu0 %v160
  %207 = vmatprep.subr.bf16.mxu0 %v164
  %208 = vmatpush1.bf16.msra.mxu0 %v163
  %209 = vmatprep.subr.bf16.mxu0 %v167
  %210 = vmatpush1.bf16.msra.mxu0 %v166
  %211 = vmatprep.subr.bf16.mxu0 %v170
  %212 = vmatpush1.bf16.msra.mxu0 %v169
  %213 = vmatprep.subr.bf16.mxu0 %v173
  %214 = vmatpush1.bf16.msra.mxu0 %v172
  %215 = vmatprep.subr.bf16.mxu0 0
  %216 = vmatpush1.bf16.msra.mxu0 0
  %217 = vmatprep.subr.bf16.mxu0 0
  %218 = vmatpush1.bf16.msra.mxu0 0
  %219 = vmatprep.subr.bf16.mxu0 0
  %220 = vmatpush1.bf16.msra.mxu0 0
  %221 = vmatprep.subr.bf16.mxu0 0
  %222 = vmatpush1.bf16.msra.mxu0 0
  %223 = vmatprep.subr.bf16.mxu0 0
  %224 = vmatpush1.bf16.msra.mxu0 0
  %225 = vmatprep.subr.bf16.mxu0 0
  %226 = vmatpush1.bf16.msra.mxu0 0
  %227 = vmatprep.subr.bf16.mxu0 0
  %228 = vmatpush1.bf16.msra.mxu0 0
  %229 = vmatprep.subr.bf16.mxu0 0
  %230 = vmatpush1.bf16.msra.mxu0 0
  %231 = vmatprep.mubr.bf16.mxu0 0
  %232 = vmatmul.mubr.bf16.gmra.mrb[0].mxu0 %v69
  %v233 = vpop.f32.mrb[0].mxu0
  %v234 = vadd.f32 0.0, %v233
  %v235 = vpop.f32.mrb[0].mxu0
  %v236 = vadd.f32 0.0, %v235
  %v237 = vpop.f32.mrb[0].mxu0
  %v238 = vadd.f32 0.0, %v237
  %v239 = vpop.f32.mrb[0].mxu0
  %v240 = vadd.f32 0.0, %v239
  %241 = vdwg.mxu0
  %242 = vmatprep.subr.bf16.mxu0 0
  %243 = vmatpush1.bf16.msra.mxu0 %v153
  %244 = vmatprep.subr.bf16.mxu0 0
  %245 = vmatpush1.bf16.msra.mxu0 %v156
  %246 = vmatprep.subr.bf16.mxu0 0
  %247 = vmatpush1.bf16.msra.mxu0 %v159
  %248 = vmatprep.subr.bf16.mxu0 0
  %249 = vmatpush1.bf16.msra.mxu0 %v162
  %250 = vmatprep.subr.bf16.mxu0 0
  %251 = vmatpush1.bf16.msra.mxu0 %v165
  %252 = vmatprep.subr.bf16.mxu0 0
  %253 = vmatpush1.bf16.msra.mxu0 %v168
  %254 = vmatprep.subr.bf16.mxu0 0
  %255 = vmatpush1.bf16.msra.mxu0 %v171
  %256 = vmatprep.subr.bf16.mxu0 0
  %257 = vmatpush1.bf16.msra.mxu0 %v174
  %258 = vmatprep.subr.bf16.mxu0 0
  %259 = vmatpush1.bf16.msra.mxu0 0
  %260 = vmatprep.subr.bf16.mxu0 0
  %261 = vmatpush1.bf16.msra.mxu0 0
  %262 = vmatprep.subr.bf16.mxu0 0
  %263 = vmatpush1.bf16.msra.mxu0 0
  %264 = vmatprep.subr.bf16.mxu0 0
  %265 = vmatpush1.bf16.msra.mxu0 0
  %266 = vmatprep.subr.bf16.mxu0 0
  %267 = vmatpush1.bf16.msra.mxu0 0
  %268 = vmatprep.subr.bf16.mxu0 0
  %269 = vmatpush1.bf16.msra.mxu0 0
  %270 = vmatprep.subr.bf16.mxu0 0
  %271 = vmatpush1.bf16.msra.mxu0 0
  %272 = vmatprep.subr.bf16.mxu0 0
  %273 = vmatpush1.bf16.msra.mxu0 0
  %274 = vmatprep.mubr.bf16.mxu0 0
  %275 = vmatmul.mubr.bf16.gmra.mrb[0].mxu0 %v69
  %v276 = vpop.f32.mrb[0].mxu0
  %v277 = vadd.f32 0.0, %v276
  %v278 = vpop.f32.mrb[0].mxu0
  %v279 = vpop.f32.mrb[0].mxu0
  %v280 = vadd.f32 0.0, %v279
  %v281 = vpop.f32.mrb[0].mxu0
  %282 = vdwg.mxu0
  %v283 = vadd.f32 %v25, %v234
  %v284 = vadd.f32 %v26, %v236
  %v285 = vadd.f32 %v27, %v277
  %v286 = vadd.f32 %v28, %v238
  %v287 = vadd.f32 %v29, %v240
  %v288 = vadd.f32 %v30, %v280
  %289 = vst [vmem:[#allocation2] sm:$0xff] %v283
  %290 = vst [vmem:[#allocation2 + $0x8] sm:$0xff] %v284
  %291 = vst [vmem:[#allocation2 + $0x10] sm:$0xff] %v285
  %292 = vst [vmem:[#allocation2 + $0x18] sm:$0xff] %v286
  %293 = vst [vmem:[#allocation2 + $0x20] sm:$0xff] %v287
  %294 = vst [vmem:[#allocation2 + $0x28] sm:$0xff] %v288
  // Predicated region
  $region18: #{net_forward.13} parent=0 // pred_check
    %p295 = pneg %p15
  $region19: #{net_forward.13} parent=0 // pred_check_branch
    %297 = sbr.rel (%p295) target = $region21
  $region20: #{net_forward.13} parent=0 // pred_region
    %v298 = vld [vmem:[#allocation2] sm:$0xff]
    %v299 = vld [vmem:[#allocation2 + $0x8] sm:$0xff]
    %v300 = vld [vmem:[#allocation2 + $0x10] sm:$0xff]
    %v301 = vld [vmem:[#allocation2 + $0x18] sm:$0xff]
    %v302 = vld [vmem:[#allocation2 + $0x20] sm:$0xff]
    %v303 = vld [vmem:[#allocation2 + $0x28] sm:$0xff]
    %v304 = vld [vmem:[%s2] sm:$0x7]
    %v306 = vlaneseq
    %v307 = vshrl.u32 %v306, 7
    %v308 = vsub.s32 0, %v307
    %v309 = vrot.slane %v304, %v308
    %v310 = vlaneseq
    %v311 = vshrl.u32 %v310, 7
    %v312 = vsub.s32 1, %v311
    %v313 = vrot.slane %v304, %v312
    %v314 = vlaneseq
    %v315 = vshrl.u32 %v314, 7
    %v316 = vsub.s32 2, %v315
    %v317 = vrot.slane %v304, %v316
    %v321 = vadd.f32 %v298, %v309
    %v322 = vadd.f32 %v299, %v313
    %v323 = vadd.f32 %v300, %v317
    %v324 = vadd.f32 %v301, %v309
    %v325 = vadd.f32 %v302, %v313
    %v326 = vadd.f32 %v303, %v317
    %v327 = vpack.c.bf16 %v324, %v321
    %v328 = vpack.c.bf16 %v325, %v322
    %v329 = vpack.c.bf16 %v326, %v323
    %v333 = vunpack.c.l.b16 %v327
    %v334 = vunpack.c.l.b16 %v328
    %v335 = vunpack.c.l.b16 %v329
    %v336 = vunpack.c.h.b16 %v327
    %v337 = vunpack.c.h.b16 %v328
    %v338 = vunpack.c.h.b16 %v329
    %v339 = vpack.c.b16 %v334, %v333
    %v340 = vpack.c.b16 %v335, %v335
    %v341 = vpack.c.b16 %v337, %v336
    %v342 = vpack.c.b16 %v338, %v338
    %347 = vst [vmem:[%s3] sm:$0xff] %v339
    %348 = vst [vmem:[%s3 + $0x8] sm:$0xf] %v340
    %349 = vst [vmem:[%s3 + $0xc] sm:$0xff] %v341
    %350 = vst [vmem:[%s3 + $0x14] sm:$0xf] %v342
  $region21: #{net_forward.13} parent=0 // pred_fallthru
    _
  // Predicated region
  $region22: #{net_forward.13} parent=0 // pred_check
    _
  $region23: #{net_forward.13} parent=0 // pred_check_branch
    %352 = sbr.rel (0) target = $region25
  $region24: #{net_forward.13} parent=0 // pred_region
    _
  $region25: #{net_forward.13} parent=0 // pred_fallthru
    _
  // Predicated region
  $region26: #{net_forward.13} parent=0 // pred_check
    _
  $region27: #{net_forward.13} parent=0 // pred_check_branch
    %354 = sbr.rel (0) target = $region29
  $region28: #{net_forward.13} parent=0 // pred_region
    _
  $region29: #{net_forward.13} parent=0 // pred_fallthru
    _

// kernel: net_forward.14
$region0: #{net_forward.14}
  #allocation0 [shape = 'u32[]', space=smem, size = 0x4, offset = 0x4, fixed_abs, tag = 'smem constant byte address 0x4 - core index']
  #allocation1 [shape = 'u32[144,128]{1,0:T(1,128)}', space=vmem, size = 0x12000, scoped, tag = 'internal scratch']
  %s0 = inlined_call_operand.vmem [shape: bf16[2,8,384], index: 0, kind: input, shape index: {}]
  %s1 = inlined_call_operand.vmem [shape: bf16[2,8,128], index: 1, kind: output, shape index: {}]
  %s2 = sld [smem:[#allocation0]]
  $region37: #{net_forward.14} parent=0
    _
  %s4 = ssub.s32 1, %s2
  %s5 = scalar_select 0, %s4, %s2
  loop: start=0, step=1, limit=4
  $region2: #{net_forward.14} parent=0 // loop_pre_header
    _
  $region3: #{net_forward.14} parent=0 // loop_header
    %s7 = sphi 0, %s11
    %p8 = scmp.ge.s32.totalorder %s7, 4
    %s14 = sphi 0, %s26
    %s15 = sphi 0, %s22
    %s16 = sphi 0, %s14
    %s17 = sphi 0, %s15
    %s18 = sphi 0, %s16
    %s19 = sphi 0, %s17
    %s29 = sphi 0, %s31
    %s32 = sphi 0, %s29
    %s33 = sphi 0, %s32
    %s49 = sphi 0, %s33
    %s57 = sphi 0, %s59
    %s60 = sphi 0, %s57
    %s61 = sphi 0, %s60
    %s77 = sphi 0, %s61
  $region4: #{net_forward.14} parent=0 // loop_header_branch
    %10 = sbr.rel (%p8) target = $region8
  $region5: #{net_forward.14} parent=0 // loop_body
    %s12 = ssub.s32 %s7, 1
    %s13 = ssub.s32 %s7, 2
    %s20 = sadd.s32 1, %s15
    %p21 = scmp.ge.s32.totalorder %s20, 1
    %s22 = scalar_select %p21, 0, %s20
    %s23 = sadd.s32 1, %s14
    %s24 = scalar_select %p21, %s23, %s14
    %p25 = scmp.ge.s32.totalorder %s24, 2
    %s26 = scalar_select %p25, 0, %s24
    %s27 = ssub.s32 %s14, %s26
    %p28 = scmp.eq.s32.totalorder %s27, 0
    %s30 = sadd.s32 %s29, 1
    %s31 = scalar_select %p28, %s29, %s30
    %p34 = pneg %p28
    %p35 = scmp.eq.s32.totalorder %s7, 1
    %p36 = por %p34, %p35
    %p37 = scmp.ne.s32.totalorder %s29, %s32
    %p38 = scmp.eq.s32.totalorder %s7, 0
    %p39 = por %p37, %p38
    %p40 = scmp.ne.s32.totalorder %s29, %s32
    %p41 = scmp.eq.s32.totalorder %s12, 1
    %p42 = por %p40, %p41
    %p43 = scmp.ne.s32.totalorder %s32, %s33
    %p44 = scmp.eq.s32.totalorder %s12, 0
    %p45 = por %p43, %p44
    %p46 = scmp.ne.s32.totalorder %s32, %s33
    %p47 = scmp.eq.s32.totalorder %s13, 1
    %p48 = por %p46, %p47
    %p50 = scmp.ne.s32.totalorder %s33, %s49
    %p51 = scmp.eq.s32.totalorder %s13, 0
    %p52 = por %p50, %p51
    %s53 = ssub.s32 %s14, %s26
    %s54 = ssub.s32 %s15, %s22
    %s55 = sor.u32 %s53, %s54
    %p56 = scmp.eq.s32.totalorder %s55, 0
    %s58 = sadd.s32 %s57, 1
    %s59 = scalar_select %p56, %s57, %s58
    %p62 = pneg %p56
    %p63 = scmp.eq.s32.totalorder %s7, 1
    %p64 = por %p62, %p63
    %p65 = scmp.ne.s32.totalorder %s57, %s60
    %p66 = scmp.eq.s32.totalorder %s7, 0
    %p67 = por %p65, %p66
    %p68 = scmp.ne.s32.totalorder %s57, %s60
    %p69 = scmp.eq.s32.totalorder %s12, 1
    %p70 = por %p68, %p69
    %p71 = scmp.ne.s32.totalorder %s60, %s61
    %p72 = scmp.eq.s32.totalorder %s12, 0
    %p73 = por %p71, %p72
    %p74 = scmp.ne.s32.totalorder %s60, %s61
    %p75 = scmp.eq.s32.totalorder %s13, 1
    %p76 = por %p74, %p75
    %p78 = scmp.ne.s32.totalorder %s61, %s77
    %p79 = scmp.eq.s32.totalorder %s13, 0
    %p80 = por %p78, %p79
    %p81 = scmp.le.s32.totalorder 1, %s7
    %p82 = scmp.lt.s32.totalorder %s7, 3
    %p83 = pnand %p81, %p82
    %p84 = pneg %p83
    // Predicated region
    $region9: #{net_forward.14} parent=5 // pred_check
      _
    $region10: #{net_forward.14} parent=5 // pred_check_branch
      %86 = sbr.rel (%p83) target = $region12
    $region11: #{net_forward.14} parent=5 // pred_region
      %s87 = ssub.s32 %s7, 1
    $region12: #{net_forward.14} parent=5 // pred_fallthru
      _
    %p88 = scmp.lt.s32.totalorder %s7, 2
    // Predicated region
    $region13: #{net_forward.14} parent=5 // pred_check
      %p89 = pneg %p88
    $region14: #{net_forward.14} parent=5 // pred_check_branch
      %91 = sbr.rel (%p89) target = $region16
    $region15: #{net_forward.14} parent=5 // pred_region
      // Predicated region
      $region17: #{net_forward.14} parent=15 // pred_check
        %p92 = pneg %p39
      $region18: #{net_forward.14} parent=15 // pred_check_branch
        %94 = sbr.rel (%p92) target = $region20
      $region19: #{net_forward.14} parent=15 // pred_region
        %p95 = scmp.lt.s32.totalorder %s14, 1
        %s96 = scalar_select %p95, %s14, 1
        %s97 = smul.addr %s96, 3
        %s98 = smul.addr %s97, 4
        %s99 = scalar_lea.vmem %s0, %s98
      $region20: #{net_forward.14} parent=15 // pred_fallthru
        _
    $region16: #{net_forward.14} parent=5 // pred_fallthru
      _
    %p100 = scmp.le.s32.totalorder 1, %s7
    %p101 = scmp.lt.s32.totalorder %s7, 3
    %p102 = pnand %p100, %p101
    %p103 = pneg %p102
    // Predicated region
    $region21: #{net_forward.14} parent=5 // pred_check
      _
    $region22: #{net_forward.14} parent=5 // pred_check_branch
      %105 = sbr.rel (%p102) target = $region24
    $region23: #{net_forward.14} parent=5 // pred_region
      %s106 = ssub.s32 %s7, 1
      %p107 = scmp.lt.s32.totalorder %s16, 1
      %s108 = scalar_select %p107, %s16, 1
      %s109 = smul.addr %s108, 3
      %s110 = smul.addr %s109, 4
      %s111 = scalar_lea.vmem %s0, %s110
      %p112 = pneg %p45
      %p113 = pneg %p42
      %p114 = pneg %p73
      %p115 = pneg %p70
      %p116 = scmp.lt.s32.totalorder %s16, 1
      %s117 = scalar_select %p116, %s16, 1
      %p118 = scmp.lt.s32.totalorder %s17, 0
      %s119 = scalar_select %p118, %s17, 0
      %s120 = sadd.s32 %s119, %s117
      %s121 = smul.addr %s120, 4
      %s122 = scalar_lea.vmem %s1, %s121
      %p123 = scmp.lt.s32.totalorder %s16, 1
      %s124 = scalar_select %p123, %s16, 1
      %s125 = smul.addr %s124, 3
      %s126 = smul.addr %s125, 4
      %s127 = scalar_lea.vmem %s0, %s126
      %p128 = scmp.lt.s32.totalorder %s16, 1
      %s129 = scalar_select %p128, %s16, 1
      %p130 = scmp.lt.s32.totalorder %s17, 0
      %s131 = scalar_select %p130, %s17, 0
      %s132 = sadd.s32 %s131, %s129
      %s133 = smul.addr %s132, 4
      %s134 = scalar_lea.vmem %s1, %s133
      %s136 = smul.u32 %s17, 8
      %s137 = sshra.s32 %s136, 3
      %s138 = sand.u32 %s136, 7
      %s139 = smul.u32 %s137, 3
      %s140 = smul.addr %s139, 4
      %s141 = scalar_lea.vmem %s127, %s140
      %v142 = vld [vmem:[%s141] sm:$0xf]
      %v143 = vld [vmem:[%s127 + $0x4] sm:$0xf]
      %v144 = vld [vmem:[%s127 + $0x8] sm:$0xf]
      %vm145 = vcmask 261120
      %v147 = vsel %vm145, %v142, 0
      %v150 = vsel %vm145, %v143, 0
      %152 = vmatprep.subr.bf16.mxu0 0
      %153 = vmatpush1.bf16.xpose.msra.mxu0 %v150
      %154 = vmatprep.subr.bf16.mxu0 0
      %155 = vmatpush1.bf16.xpose.msra.mxu0 0
      %156 = vmatprep.subr.bf16.mxu0 0
      %157 = vmatpush1.bf16.xpose.msra.mxu0 0
      %158 = vmatprep.subr.bf16.mxu0 0
      %159 = vmatpush1.bf16.xpose.msra.mxu0 0
      %160 = vmatprep.subr.bf16.mxu0 0
      %161 = vmatpush1.bf16.xpose.msra.mxu0 0
      %162 = vmatprep.subr.bf16.mxu0 0
      %163 = vmatpush1.bf16.xpose.msra.mxu0 0
      %164 = vmatprep.subr.bf16.mxu0 0
      %165 = vmatpush1.bf16.xpose.msra.mxu0 0
      %166 = vmatprep.subr.bf16.mxu0 0
      %167 = vmatpush1.bf16.xpose.msra.mxu0 0
      %168 = vmatprep.subr.bf16.mxu0 0
      %169 = vmatpush1.bf16.xpose.msra.mxu0 0
      %170 = vmatprep.subr.bf16.mxu0 0
      %171 = vmatpush1.bf16.xpose.msra.mxu0 0
      %172 = vmatprep.subr.bf16.mxu0 0
      %173 = vmatpush1.bf16.xpose.msra.mxu0 0
      %174 = vmatprep.subr.bf16.mxu0 0
      %175 = vmatpush1.bf16.xpose.msra.mxu0 0
      %176 = vmatprep.subr.bf16.mxu0 0
      %177 = vmatpush1.bf16.xpose.msra.mxu0 0
      %178 = vmatprep.subr.bf16.mxu0 0
      %179 = vmatpush1.bf16.xpose.msra.mxu0 0
      %180 = vmatprep.subr.bf16.mxu0 0
      %181 = vmatpush1.bf16.xpose.msra.mxu0 0
      %182 = vmatprep.subr.bf16.mxu0 0
      %183 = vmatpush1.bf16.xpose.msra.mxu0 0
      %184 = vmatprep.mubr.bf16.mxu0 0
      %185 = vmatmul.mubr.bf16.gmra.mrb[0].mxu0 %v147
      %v186 = vpop.f32.mrb[0].mxu0
      %v187 = vadd.f32 0.0, %v186
      %v188 = vpop.f32.mrb[0].mxu0
      %v189 = vpop.f32.mrb[0].mxu0
      %v190 = vpop.f32.mrb[0].mxu0
      %191 = vdwg.mxu0
      %vm192 = vcmask 64512
      %v193 = vsel %vm192, %v187, -inf
      %194 = vmax.xlane.f32.xlu0 %v193
      %v195 = vpop.xlane.xlu0 %194
      %v196 = vsub.f32 %v187, %v195
      %v197 = vmul.f32 %v196, 1.442695
      %v198 = vpow.pop %v197
      %v199 = vsel %vm192, %v198, 0.0
      %200 = vadd.xlane.f32.xlu0 %v199
      %v201 = vpop.xlane.xlu0 %200
      %v202 = vrcp.pop %v201
      %v203 = vmul.f32 %v198, %v202
      %v204 = vpack.c.bf16 %v203, %v203
      %v206 = vsel %vm192, %v204, 0
      %vm208 = vcmask 1043456
      %v210 = vsel %vm208, %v144, 0
      %212 = vmatprep.subr.bf16.mxu0 0
      %213 = vmatpush1.bf16.msra.mxu0 %v210
      %214 = vmatprep.subr.bf16.mxu0 0
      %215 = vmatpush1.bf16.msra.mxu0 0
      %216 = vmatprep.subr.bf16.mxu0 0
      %217 = vmatpush1.bf16.msra.mxu0 0
      %218 = vmatprep.subr.bf16.mxu0 0
      %219 = vmatpush1.bf16.msra.mxu0 0
      %220 = vmatprep.subr.bf16.mxu0 0
      %221 = vmatpush1.bf16.msra.mxu0 0
      %222 = vmatprep.subr.bf16.mxu0 0
      %223 = vmatpush1.bf16.msra.mxu0 0
      %224 = vmatprep.subr.bf16.mxu0 0
      %225 = vmatpush1.bf16.msra.mxu0 0
      %226 = vmatprep.subr.bf16.mxu0 0
      %227 = vmatpush1.bf16.msra.mxu0 0
      %228 = vmatprep.subr.bf16.mxu0 0
      %229 = vmatpush1.bf16.msra.mxu0 0
      %230 = vmatprep.subr.bf16.mxu0 0
      %231 = vmatpush1.bf16.msra.mxu0 0
      %232 = vmatprep.subr.bf16.mxu0 0
      %233 = vmatpush1.bf16.msra.mxu0 0
      %234 = vmatprep.subr.bf16.mxu0 0
      %235 = vmatpush1.bf16.msra.mxu0 0
      %236 = vmatprep.subr.bf16.mxu0 0
      %237 = vmatpush1.bf16.msra.mxu0 0
      %238 = vmatprep.subr.bf16.mxu0 0
      %239 = vmatpush1.bf16.msra.mxu0 0
      %240 = vmatprep.subr.bf16.mxu0 0
      %241 = vmatpush1.bf16.msra.mxu0 0
      %242 = vmatprep.subr.bf16.mxu0 0
      %243 = vmatpush1.bf16.msra.mxu0 0
      %244 = vmatprep.mubr.bf16.mxu0 0
      %245 = vmatmul.mubr.bf16.gmra.mrb[0].mxu0 %v206
      %v246 = vpop.f32.mrb[0].mxu0
      %v247 = vadd.f32 0.0, %v246
      %v248 = vpop.f32.mrb[0].mxu0
      %v249 = vpop.f32.mrb[0].mxu0
      %v250 = vpop.f32.mrb[0].mxu0
      %251 = vdwg.mxu0
      %v252 = vpack.c.bf16 %v247, %v247
      %vm253 = vcmask 257024
      %254 = vst.msk [vmem:[%s134] sm:$0xf] %vm253, %v252
      %v255 = vld [vmem:[%s141] sm:$0xf]
      %v256 = vld [vmem:[%s127 + $0x4] sm:$0xf]
      %v257 = vld [vmem:[%s127 + $0x8] sm:$0xf]
      %v259 = vunpack.c.l.b16 %v255
      %v260 = vpack.c.b16 %v259, %v259
      %261 = vrot.lane.b32.xlu0 %v260, 96
      %v262 = vpop.permute.xlu0 %261
      %v264 = vunpack.c.l.b16 %v256
      %v265 = vpack.c.b16 %v264, %v264
      %266 = vrot.lane.b32.xlu0 %v265, 96
      %v267 = vpop.permute.xlu0 %266
      %v269 = vsel %vm145, %v262, 0
      %v272 = vsel %vm145, %v267, 0
      %274 = vmatprep.subr.bf16.mxu0 0
      %275 = vmatpush1.bf16.xpose.msra.mxu0 %v272
      %276 = vmatprep.subr.bf16.mxu0 0
      %277 = vmatpush1.bf16.xpose.msra.mxu0 0
      %278 = vmatprep.subr.bf16.mxu0 0
      %279 = vmatpush1.bf16.xpose.msra.mxu0 0
      %280 = vmatprep.subr.bf16.mxu0 0
      %281 = vmatpush1.bf16.xpose.msra.mxu0 0
      %282 = vmatprep.subr.bf16.mxu0 0
      %283 = vmatpush1.bf16.xpose.msra.mxu0 0
      %284 = vmatprep.subr.bf16.mxu0 0
      %285 = vmatpush1.bf16.xpose.msra.mxu0 0
      %286 = vmatprep.subr.bf16.mxu0 0
      %287 = vmatpush1.bf16.xpose.msra.mxu0 0
      %288 = vmatprep.subr.bf16.mxu0 0
      %289 = vmatpush1.bf16.xpose.msra.mxu0 0
      %290 = vmatprep.subr.bf16.mxu0 0
      %291 = vmatpush1.bf16.xpose.msra.mxu0 0
      %292 = vmatprep.subr.bf16.mxu0 0
      %293 = vmatpush1.bf16.xpose.msra.mxu0 0
      %294 = vmatprep.subr.bf16.mxu0 0
      %295 = vmatpush1.bf16.xpose.msra.mxu0 0
      %296 = vmatprep.subr.bf16.mxu0 0
      %297 = vmatpush1.bf16.xpose.msra.mxu0 0
      %298 = vmatprep.subr.bf16.mxu0 0
      %299 = vmatpush1.bf16.xpose.msra.mxu0 0
      %300 = vmatprep.subr.bf16.mxu0 0
      %301 = vmatpush1.bf16.xpose.msra.mxu0 0
      %302 = vmatprep.subr.bf16.mxu0 0
      %303 = vmatpush1.bf16.xpose.msra.mxu0 0
      %304 = vmatprep.subr.bf16.mxu0 0
      %305 = vmatpush1.bf16.xpose.msra.mxu0 0
      %306 = vmatprep.mubr.bf16.mxu0 0
      %307 = vmatmul.mubr.bf16.gmra.mrb[0].mxu0 %v269
      %v308 = vpop.f32.mrb[0].mxu0
      %v309 = vadd.f32 0.0, %v308
      %v310 = vpop.f32.mrb[0].mxu0
      %v311 = vpop.f32.mrb[0].mxu0
      %v312 = vpop.f32.mrb[0].mxu0
      %313 = vdwg.mxu0
      %v314 = vsel %vm192, %v309, -inf
      %315 = vmax.xlane.f32.xlu0 %v314
      %v316 = vpop.xlane.xlu0 %315
      %v317 = vsub.f32 %v309, %v316
      %v318 = vmul.f32 %v317, 1.442695
      %v319 = vpow.pop %v318
      %v320 = vsel %vm192, %v319, 0.0
      %321 = vadd.xlane.f32.xlu0 %v320
      %v322 = vpop.xlane.xlu0 %321
      %v323 = vrcp.pop %v322
      %v324 = vmul.f32 %v319, %v323
      %v325 = vpack.c.bf16 %v324, %v324
      %v327 = vunpack.c.l.b16 %v257
      %v328 = vpack.c.b16 %v327, %v327
      %329 = vrot.lane.b32.xlu0 %v328, 96
      %v330 = vpop.permute.xlu0 %329
      %v332 = vsel %vm192, %v325, 0
      %v335 = vsel %vm208, %v330, 0
      %337 = vmatprep.subr.bf16.mxu0 0
      %338 = vmatpush1.bf16.msra.mxu0 %v335
      %339 = vmatprep.subr.bf16.mxu0 0
      %340 = vmatpush1.bf16.msra.mxu0 0
      %341 = vmatprep.subr.bf16.mxu0 0
      %342 = vmatpush1.bf16.msra.mxu0 0
      %343 = vmatprep.subr.bf16.mxu0 0
      %344 = vmatpush1.bf16.msra.mxu0 0
      %345 = vmatprep.subr.bf16.mxu0 0
      %346 = vmatpush1.bf16.msra.mxu0 0
      %347 = vmatprep.subr.bf16.mxu0 0
      %348 = vmatpush1.bf16.msra.mxu0 0
      %349 = vmatprep.subr.bf16.mxu0 0
      %350 = vmatpush1.bf16.msra.mxu0 0
      %351 = vmatprep.subr.bf16.mxu0 0
      %352 = vmatpush1.bf16.msra.mxu0 0
      %353 = vmatprep.subr.bf16.mxu0 0
      %354 = vmatpush1.bf16.msra.mxu0 0
      %355 = vmatprep.subr.bf16.mxu0 0
      %356 = vmatpush1.bf16.msra.mxu0 0
      %357 = vmatprep.subr.bf16.mxu0 0
      %358 = vmatpush1.bf16.msra.mxu0 0
      %359 = vmatprep.subr.bf16.mxu0 0
      %360 = vmatpush1.bf16.msra.mxu0 0
      %361 = vmatprep.subr.bf16.mxu0 0
      %362 = vmatpush1.bf16.msra.mxu0 0
      %363 = vmatprep.subr.bf16.mxu0 0
      %364 = vmatpush1.bf16.msra.mxu0 0
      %365 = vmatprep.subr.bf16.mxu0 0
      %366 = vmatpush1.bf16.msra.mxu0 0
      %367 = vmatprep.subr.bf16.mxu0 0
      %368 = vmatpush1.bf16.msra.mxu0 0
      %369 = vmatprep.mubr.bf16.mxu0 0
      %370 = vmatmul.mubr.bf16.gmra.mrb[0].mxu0 %v332
      %v371 = vpop.f32.mrb[0].mxu0
      %v372 = vadd.f32 0.0, %v371
      %v373 = vpop.f32.mrb[0].mxu0
      %v374 = vpop.f32.mrb[0].mxu0
      %v375 = vpop.f32.mrb[0].mxu0
      %376 = vdwg.mxu0
      %v377 = vpack.c.bf16 %v372, %v372
      %v379 = vunpack.c.l.b16 %v377
      %v380 = vpack.c.b16 %v379, %v379
      %381 = vrot.lane.b32.xlu0 %v380, 32
      %v382 = vpop.permute.xlu0 %381
      %vm384 = vcmask 519424
      %385 = vst.msk [vmem:[%s134] sm:$0xf] %vm384, %v382
      %v386 = vld [vmem:[%s141] sm:$0xf]
      %v387 = vld [vmem:[%s127 + $0x4] sm:$0xf]
      %v388 = vld [vmem:[%s127 + $0x8] sm:$0xf]
      %v390 = vunpack.c.l.b16 %v386
      %v391 = vpack.c.b16 %v390, %v390
      %392 = vrot.lane.b32.xlu0 %v391, 64
      %v393 = vpop.permute.xlu0 %392
      %v395 = vunpack.c.l.b16 %v387
      %v396 = vpack.c.b16 %v395, %v395
      %397 = vrot.lane.b32.xlu0 %v396, 64
      %v398 = vpop.permute.xlu0 %397
      %v400 = vsel %vm145, %v393, 0
      %v403 = vsel %vm145, %v398, 0
      %405 = vmatprep.subr.bf16.mxu0 0
      %406 = vmatpush1.bf16.xpose.msra.mxu0 %v403
      %407 = vmatprep.subr.bf16.mxu0 0
      %408 = vmatpush1.bf16.xpose.msra.mxu0 0
      %409 = vmatprep.subr.bf16.mxu0 0
      %410 = vmatpush1.bf16.xpose.msra.mxu0 0
      %411 = vmatprep.subr.bf16.mxu0 0
      %412 = vmatpush1.bf16.xpose.msra.mxu0 0
      %413 = vmatprep.subr.bf16.mxu0 0
      %414 = vmatpush1.bf16.xpose.msra.mxu0 0
      %415 = vmatprep.subr.bf16.mxu0 0
      %416 = vmatpush1.bf16.xpose.msra.mxu0 0
      %417 = vmatprep.subr.bf16.mxu0 0
      %418 = vmatpush1.bf16.xpose.msra.mxu0 0
      %419 = vmatprep.subr.bf16.mxu0 0
      %420 = vmatpush1.bf16.xpose.msra.mxu0 0
      %421 = vmatprep.subr.bf16.mxu0 0
      %422 = vmatpush1.bf16.xpose.msra.mxu0 0
      %423 = vmatprep.subr.bf16.mxu0 0
      %424 = vmatpush1.bf16.xpose.msra.mxu0 0
      %425 = vmatprep.subr.bf16.mxu0 0
      %426 = vmatpush1.bf16.xpose.msra.mxu0 0
      %427 = vmatprep.subr.bf16.mxu0 0
      %428 = vmatpush1.bf16.xpose.msra.mxu0 0
      %429 = vmatprep.subr.bf16.mxu0 0
      %430 = vmatpush1.bf16.xpose.msra.mxu0 0
      %431 = vmatprep.subr.bf16.mxu0 0
      %432 = vmatpush1.bf16.xpose.msra.mxu0 0
      %433 = vmatprep.subr.bf16.mxu0 0
      %434 = vmatpush1.bf16.xpose.msra.mxu0 0
      %435 = vmatprep.subr.bf16.mxu0 0
      %436 = vmatpush1.bf16.xpose.msra.mxu0 0
      %437 = vmatprep.mubr.bf16.mxu0 0
      %438 = vmatmul.mubr.bf16.gmra.mrb[0].mxu0 %v400
      %v439 = vpop.f32.mrb[0].mxu0
      %v440 = vadd.f32 0.0, %v439
      %v441 = vpop.f32.mrb[0].mxu0
      %v442 = vpop.f32.mrb[0].mxu0
      %v443 = vpop.f32.mrb[0].mxu0
      %444 = vdwg.mxu0
      %v445 = vsel %vm192, %v440, -inf
      %446 = vmax.xlane.f32.xlu0 %v445
      %v447 = vpop.xlane.xlu0 %446
      %v448 = vsub.f32 %v440, %v447
      %v449 = vmul.f32 %v448, 1.442695
      %v450 = vpow.pop %v449
      %v451 = vsel %vm192, %v450, 0.0
      %452 = vadd.xlane.f32.xlu0 %v451
      %v453 = vpop.xlane.xlu0 %452
      %v454 = vrcp.pop %v453
      %v455 = vmul.f32 %v450, %v454
      %v456 = vpack.c.bf16 %v455, %v455
      %v458 = vunpack.c.l.b16 %v388
      %v459 = vpack.c.b16 %v458, %v458
      %460 = vrot.lane.b32.xlu0 %v459, 64
      %v461 = vpop.permute.xlu0 %460
      %v463 = vsel %vm192, %v456, 0
      %v466 = vsel %vm208, %v461, 0
      %468 = vmatprep.subr.bf16.mxu0 0
      %469 = vmatpush1.bf16.msra.mxu0 %v466
      %470 = vmatprep.subr.bf16.mxu0 0
      %471 = vmatpush1.bf16.msra.mxu0 0
      %472 = vmatprep.subr.bf16.mxu0 0
      %473 = vmatpush1.bf16.msra.mxu0 0
      %474 = vmatprep.subr.bf16.mxu0 0
      %475 = vmatpush1.bf16.msra.mxu0 0
      %476 = vmatprep.subr.bf16.mxu0 0
      %477 = vmatpush1.bf16.msra.mxu0 0
      %478 = vmatprep.subr.bf16.mxu0 0
      %479 = vmatpush1.bf16.msra.mxu0 0
      %480 = vmatprep.subr.bf16.mxu0 0
      %481 = vmatpush1.bf16.msra.mxu0 0
      %482 = vmatprep.subr.bf16.mxu0 0
      %483 = vmatpush1.bf16.msra.mxu0 0
      %484 = vmatprep.subr.bf16.mxu0 0
      %485 = vmatpush1.bf16.msra.mxu0 0
      %486 = vmatprep.subr.bf16.mxu0 0
      %487 = vmatpush1.bf16.msra.mxu0 0
      %488 = vmatprep.subr.bf16.mxu0 0
      %489 = vmatpush1.bf16.msra.mxu0 0
      %490 = vmatprep.subr.bf16.mxu0 0
      %491 = vmatpush1.bf16.msra.mxu0 0
      %492 = vmatprep.subr.bf16.mxu0 0
      %493 = vmatpush1.bf16.msra.mxu0 0
      %494 = vmatprep.subr.bf16.mxu0 0
      %495 = vmatpush1.bf16.msra.mxu0 0
      %496 = vmatprep.subr.bf16.mxu0 0
      %497 = vmatpush1.bf16.msra.mxu0 0
      %498 = vmatprep.subr.bf16.mxu0 0
      %499 = vmatpush1.bf16.msra.mxu0 0
      %500 = vmatprep.mubr.bf16.mxu0 0
      %501 = vmatmul.mubr.bf16.gmra.mrb[0].mxu0 %v463
      %v502 = vpop.f32.mrb[0].mxu0
      %v503 = vadd.f32 0.0, %v502
      %v504 = vpop.f32.mrb[0].mxu0
      %v505 = vpop.f32.mrb[0].mxu0
      %v506 = vpop.f32.mrb[0].mxu0
      %507 = vdwg.mxu0
      %v508 = vpack.c.bf16 %v503, %v503
      %v510 = vunpack.c.l.b16 %v508
      %v511 = vpack.c.b16 %v510, %v510
      %512 = vrot.lane.b32.xlu0 %v511, 64
      %v513 = vpop.permute.xlu0 %512
      %vm515 = vcmask 781824
      %516 = vst.msk [vmem:[%s134] sm:$0xf] %vm515, %v513
      %v517 = vld [vmem:[%s141] sm:$0xf]
      %v518 = vld [vmem:[%s127 + $0x4] sm:$0xf]
      %v519 = vld [vmem:[%s127 + $0x8] sm:$0xf]
      %v521 = vunpack.c.l.b16 %v517
      %v522 = vpack.c.b16 %v521, %v521
      %523 = vrot.lane.b32.xlu0 %v522, 32
      %v524 = vpop.permute.xlu0 %523
      %v526 = vunpack.c.l.b16 %v518
      %v527 = vpack.c.b16 %v526, %v526
      %528 = vrot.lane.b32.xlu0 %v527, 32
      %v529 = vpop.permute.xlu0 %528
      %v531 = vsel %vm145, %v524, 0
      %v534 = vsel %vm145, %v529, 0
      %536 = vmatprep.subr.bf16.mxu0 0
      %537 = vmatpush1.bf16.xpose.msra.mxu0 %v534
      %538 = vmatprep.subr.bf16.mxu0 0
      %539 = vmatpush1.bf16.xpose.msra.mxu0 0
      %540 = vmatprep.subr.bf16.mxu0 0
      %541 = vmatpush1.bf16.xpose.msra.mxu0 0
      %542 = vmatprep.subr.bf16.mxu0 0
      %543 = vmatpush1.bf16.xpose.msra.mxu0 0
      %544 = vmatprep.subr.bf16.mxu0 0
      %545 = vmatpush1.bf16.xpose.msra.mxu0 0
      %546 = vmatprep.subr.bf16.mxu0 0
      %547 = vmatpush1.bf16.xpose.msra.mxu0 0
      %548 = vmatprep.subr.bf16.mxu0 0
      %549 = vmatpush1.bf16.xpose.msra.mxu0 0
      %550 = vmatprep.subr.bf16.mxu0 0
      %551 = vmatpush1.bf16.xpose.msra.mxu0 0
      %552 = vmatprep.subr.bf16.mxu0 0
      %553 = vmatpush1.bf16.xpose.msra.mxu0 0
      %554 = vmatprep.subr.bf16.mxu0 0
      %555 = vmatpush1.bf16.xpose.msra.mxu0 0
      %556 = vmatprep.subr.bf16.mxu0 0
      %557 = vmatpush1.bf16.xpose.msra.mxu0 0
      %558 = vmatprep.subr.bf16.mxu0 0
      %559 = vmatpush1.bf16.xpose.msra.mxu0 0
      %560 = vmatprep.subr.bf16.mxu0 0
      %561 = vmatpush1.bf16.xpose.msra.mxu0 0
      %562 = vmatprep.subr.bf16.mxu0 0
      %563 = vmatpush1.bf16.xpose.msra.mxu0 0
      %564 = vmatprep.subr.bf16.mxu0 0
      %565 = vmatpush1.bf16.xpose.msra.mxu0 0
      %566 = vmatprep.subr.bf16.mxu0 0
      %567 = vmatpush1.bf16.xpose.msra.mxu0 0
      %568 = vmatprep.mubr.bf16.mxu0 0
      %569 = vmatmul.mubr.bf16.gmra.mrb[0].mxu0 %v531
      %v570 = vpop.f32.mrb[0].mxu0
      %v571 = vadd.f32 0.0, %v570
      %v572 = vpop.f32.mrb[0].mxu0
      %v573 = vpop.f32.mrb[0].mxu0
      %v574 = vpop.f32.mrb[0].mxu0
      %575 = vdwg.mxu0
      %v576 = vsel %vm192, %v571, -inf
      %577 = vmax.xlane.f32.xlu0 %v576
      %v578 = vpop.xlane.xlu0 %577
      %v579 = vsub.f32 %v571, %v578
      %v580 = vmul.f32 %v579, 1.442695
      %v581 = vpow.pop %v580
      %v582 = vsel %vm192, %v581, 0.0
      %583 = vadd.xlane.f32.xlu0 %v582
      %v584 = vpop.xlane.xlu0 %583
      %v585 = vrcp.pop %v584
      %v586 = vmul.f32 %v581, %v585
      %v587 = vpack.c.bf16 %v586, %v586
      %v589 = vunpack.c.l.b16 %v519
      %v590 = vpack.c.b16 %v589, %v589
      %591 = vrot.lane.b32.xlu0 %v590, 32
      %v592 = vpop.permute.xlu0 %591
      %v594 = vsel %vm192, %v587, 0
      %v597 = vsel %vm208, %v592, 0
      %599 = vmatprep.subr.bf16.mxu0 0
      %600 = vmatpush1.bf16.msra.mxu0 %v597
      %601 = vmatprep.subr.bf16.mxu0 0
      %602 = vmatpush1.bf16.msra.mxu0 0
      %603 = vmatprep.subr.bf16.mxu0 0
      %604 = vmatpush1.bf16.msra.mxu0 0
      %605 = vmatprep.subr.bf16.mxu0 0
      %606 = vmatpush1.bf16.msra.mxu0 0
      %607 = vmatprep.subr.bf16.mxu0 0
      %608 = vmatpush1.bf16.msra.mxu0 0
      %609 = vmatprep.subr.bf16.mxu0 0
      %610 = vmatpush1.bf16.msra.mxu0 0
      %611 = vmatprep.subr.bf16.mxu0 0
      %612 = vmatpush1.bf16.msra.mxu0 0
      %613 = vmatprep.subr.bf16.mxu0 0
      %614 = vmatpush1.bf16.msra.mxu0 0
      %615 = vmatprep.subr.bf16.mxu0 0
      %616 = vmatpush1.bf16.msra.mxu0 0
      %617 = vmatprep.subr.bf16.mxu0 0
      %618 = vmatpush1.bf16.msra.mxu0 0
      %619 = vmatprep.subr.bf16.mxu0 0
      %620 = vmatpush1.bf16.msra.mxu0 0
      %621 = vmatprep.subr.bf16.mxu0 0
      %622 = vmatpush1.bf16.msra.mxu0 0
      %623 = vmatprep.subr.bf16.mxu0 0
      %624 = vmatpush1.bf16.msra.mxu0 0
      %625 = vmatprep.subr.bf16.mxu0 0
      %626 = vmatpush1.bf16.msra.mxu0 0
      %627 = vmatprep.subr.bf16.mxu0 0
      %628 = vmatpush1.bf16.msra.mxu0 0
      %629 = vmatprep.subr.bf16.mxu0 0
      %630 = vmatpush1.bf16.msra.mxu0 0
      %631 = vmatprep.mubr.bf16.mxu0 0
      %632 = vmatmul.mubr.bf16.gmra.mrb[0].mxu0 %v594
      %v633 = vpop.f32.mrb[0].mxu0
      %v634 = vadd.f32 0.0, %v633
      %v635 = vpop.f32.mrb[0].mxu0
      %v636 = vpop.f32.mrb[0].mxu0
      %v637 = vpop.f32.mrb[0].mxu0
      %638 = vdwg.mxu0
      %v639 = vpack.c.bf16 %v634, %v634
      %v641 = vunpack.c.l.b16 %v639
      %v642 = vpack.c.b16 %v641, %v641
      %643 = vrot.lane.b32.xlu0 %v642, 96
      %v644 = vpop.permute.xlu0 %643
      %vm646 = vcmask 1044224
      %647 = vst.msk [vmem:[%s134] sm:$0xf] %vm646, %v644
      %p648 = scmp.lt.s32.totalorder %s16, 1
      %s649 = scalar_select %p648, %s16, 1
      %p650 = scmp.lt.s32.totalorder %s17, 0
      %s651 = scalar_select %p650, %s17, 0
      %s652 = sadd.s32 %s651, %s649
      %s653 = smul.addr %s652, 4
      %s654 = scalar_lea.vmem %s1, %s653
      // Predicated region
      $region25: #{net_forward.14} parent=23 // pred_check
        %p655 = pneg %p70
      $region26: #{net_forward.14} parent=23 // pred_check_branch
        %657 = sbr.rel (%p655) target = $region28
      $region27: #{net_forward.14} parent=23 // pred_region
        _
      $region28: #{net_forward.14} parent=23 // pred_fallthru
        _
    $region24: #{net_forward.14} parent=5 // pred_fallthru
      _
    %p658 = scmp.le.s32.totalorder 2, %s7
    // Predicated region
    $region29: #{net_forward.14} parent=5 // pred_check
      %p659 = pneg %p658
    $region30: #{net_forward.14} parent=5 // pred_check_branch
      %661 = sbr.rel (%p659) target = $region32
    $region31: #{net_forward.14} parent=5 // pred_region
      %s662 = ssub.s32 %s7, 2
      // Predicated region
      $region33: #{net_forward.14} parent=31 // pred_check
        %p663 = pneg %p76
      $region34: #{net_forward.14} parent=31 // pred_check_branch
        %665 = sbr.rel (%p663) target = $region36
      $region35: #{net_forward.14} parent=31 // pred_region
        %p666 = scmp.lt.s32.totalorder %s18, 1
        %s667 = scalar_select %p666, %s18, 1
        %p668 = scmp.lt.s32.totalorder %s19, 0
        %s669 = scalar_select %p668, %s19, 0
        %s670 = sadd.s32 %s669, %s667
        %s671 = smul.addr %s670, 4
        %s672 = scalar_lea.vmem %s1, %s671
      $region36: #{net_forward.14} parent=31 // pred_fallthru
        _
    $region32: #{net_forward.14} parent=5 // pred_fallthru
      _
  $region6: #{net_forward.14} parent=0 // loop_footer
    %s11 = sadd.s32 1, %s7
  $region7: #{net_forward.14} parent=0 // loop_footer_branch
    %6 = sbr.rel target = $region3
  $region8: #{net_forward.14} parent=0 // loop_exit
    _

// kernel: net_forward.23
$region0: #{net_forward.23}
  #allocation0 [shape = 'u32[]', space=smem, size = 0x4, offset = 0x4, fixed_abs, tag = 'smem constant byte address 0x4 - core index']
  #allocation1 [shape = 'u32[144,128]{1,0:T(1,128)}', space=vmem, size = 0x12000, scoped, tag = 'internal scratch']
  #allocation2 [shape = 'f32[16,128]{1,0:T(8,128)}', space=vmem, size = 0x2000, scoped, tag = 'scratch operand']
  %s0 = inlined_call_operand.vmem [shape: bf16[16,128], index: 0, kind: input, shape index: {}]
  %s1 = inlined_call_operand.vmem [shape: bf16[128,128], index: 1, kind: input, shape index: {}]
  %s2 = inlined_call_operand.vmem [shape: f32[1,128], index: 2, kind: input, shape index: {}]
  %s3 = inlined_call_operand.vmem [shape: f32[16,128], index: 3, kind: output, shape index: {}]
  %s4 = sld [smem:[#allocation0]]
  $region30: #{net_forward.23} parent=0
    _
  %s6 = ssub.s32 1, %s4
  %s7 = scalar_select 0, %s6, %s4
  // Predicated region
  $region2: #{net_forward.23} parent=0 // pred_check
    _
  $region3: #{net_forward.23} parent=0 // pred_check_branch
    %9 = sbr.rel (0) target = $region5
  $region4: #{net_forward.23} parent=0 // pred_region
    _
  $region5: #{net_forward.23} parent=0 // pred_fallthru
    _
  // Predicated region
  $region6: #{net_forward.23} parent=0 // pred_check
    _
  $region7: #{net_forward.23} parent=0 // pred_check_branch
    %11 = sbr.rel (0) target = $region9
  $region8: #{net_forward.23} parent=0 // pred_region
    _
  $region9: #{net_forward.23} parent=0 // pred_fallthru
    _
  // Predicated region
  $region10: #{net_forward.23} parent=0 // pred_check
    _
  $region11: #{net_forward.23} parent=0 // pred_check_branch
    %13 = sbr.rel (0) target = $region13
  $region12: #{net_forward.23} parent=0 // pred_region
    _
  $region13: #{net_forward.23} parent=0 // pred_fallthru
    _
  %p15 = scmp.eq.s32.totalorder 0, 0
  // Predicated region
  $region14: #{net_forward.23} parent=0 // pred_check
    %p16 = pneg %p15
  $region15: #{net_forward.23} parent=0 // pred_check_branch
    %18 = sbr.rel (%p16) target = $region17
  $region16: #{net_forward.23} parent=0 // pred_region
    %19 = vst [vmem:[#allocation2] sm:$0xff] 0.0
    %20 = vst [vmem:[#allocation2 + $0x8] sm:$0xff] 0.0
  $region17: #{net_forward.23} parent=0 // pred_fallthru
    _
  %v21 = vld [vmem:[#allocation2] sm:$0xff]
  %v22 = vld [vmem:[#allocation2 + $0x8] sm:$0xff]
  %v23 = vld [vmem:[%s0] sm:$0xf]
  %v24 = vld [vmem:[%s0 + $0x4] sm:$0xf]
  %v25 = vld [vmem:[%s1] sm:$0xf]
  %v26 = vld [vmem:[%s1 + $0x4] sm:$0xf]
  %v27 = vld [vmem:[%s1 + $0x8] sm:$0xf]
  %v28 = vld [vmem:[%s1 + $0xc] sm:$0xf]
  %v29 = vld [vmem:[%s1 + $0x10] sm:$0xf]
  %v30 = vld [vmem:[%s1 + $0x14] sm:$0xf]
  %v31 = vld [vmem:[%s1 + $0x18] sm:$0xf]
  %v32 = vld [vmem:[%s1 + $0x1c] sm:$0xf]
  %v33 = vld [vmem:[%s1 + $0x20] sm:$0xf]
  %v34 = vld [vmem:[%s1 + $0x24] sm:$0xf]
  %v35 = vld [vmem:[%s1 + $0x28] sm:$0xf]
  %v36 = vld [vmem:[%s1 + $0x2c] sm:$0xf]
  %v37 = vld [vmem:[%s1 + $0x30] sm:$0xf]
  %v38 = vld [vmem:[%s1 + $0x34] sm:$0xf]
  %v39 = vld [vmem:[%s1 + $0x38] sm:$0xf]
  %v40 = vld [vmem:[%s1 + $0x3c] sm:$0xf]
  %v43 = vunpack.c.l.b16 %v23
  %v44 = vunpack.c.l.b16 %v24
  %v45 = vpack.c.b16 %v44, %v43
  %v63 = vunpack.c.l.b16 %v25
  %v64 = vunpack.c.l.b16 %v26
  %v65 = vunpack.c.l.b16 %v27
  %v66 = vunpack.c.l.b16 %v28
  %v67 = vunpack.c.l.b16 %v29
  %v68 = vunpack.c.l.b16 %v30
  %v69 = vunpack.c.l.b16 %v31
  %v70 = vunpack.c.l.b16 %v32
  %v71 = vunpack.c.l.b16 %v33
  %v72 = vunpack.c.l.b16 %v34
  %v73 = vunpack.c.l.b16 %v35
  %v74 = vunpack.c.l.b16 %v36
  %v75 = vunpack.c.l.b16 %v37
  %v76 = vunpack.c.l.b16 %v38
  %v77 = vunpack.c.l.b16 %v39
  %v78 = vunpack.c.l.b16 %v40
  %v79 = vpack.c.b16 %v64, %v63
  %v80 = vpack.c.b16 %v66, %v65
  %v81 = vpack.c.b16 %v68, %v67
  %v82 = vpack.c.b16 %v70, %v69
  %v83 = vpack.c.b16 %v72, %v71
  %v84 = vpack.c.b16 %v74, %v73
  %v85 = vpack.c.b16 %v76, %v75
  %v86 = vpack.c.b16 %v78, %v77
  %95 = vmatprep.subr.bf16.mxu0 0
  %96 = vmatpush1.bf16.msra.mxu0 %v79
  %97 = vmatprep.subr.bf16.mxu0 0
  %98 = vmatpush1.bf16.msra.mxu0 %v80
  %99 = vmatprep.subr.bf16.mxu0 0
  %100 = vmatpush1.bf16.msra.mxu0 %v81
  %101 = vmatprep.subr.bf16.mxu0 0
  %102 = vmatpush1.bf16.msra.mxu0 %v82
  %103 = vmatprep.subr.bf16.mxu0 0
  %104 = vmatpush1.bf16.msra.mxu0 %v83
  %105 = vmatprep.subr.bf16.mxu0 0
  %106 = vmatpush1.bf16.msra.mxu0 %v84
  %107 = vmatprep.subr.bf16.mxu0 0
  %108 = vmatpush1.bf16.msra.mxu0 %v85
  %109 = vmatprep.subr.bf16.mxu0 0
  %110 = vmatpush1.bf16.msra.mxu0 %v86
  %111 = vmatprep.subr.bf16.mxu0 0
  %112 = vmatpush1.bf16.msra.mxu0 0
  %113 = vmatprep.subr.bf16.mxu0 0
  %114 = vmatpush1.bf16.msra.mxu0 0
  %115 = vmatprep.subr.bf16.mxu0 0
  %116 = vmatpush1.bf16.msra.mxu0 0
  %117 = vmatprep.subr.bf16.mxu0 0
  %118 = vmatpush1.bf16.msra.mxu0 0
  %119 = vmatprep.subr.bf16.mxu0 0
  %120 = vmatpush1.bf16.msra.mxu0 0
  %121 = vmatprep.subr.bf16.mxu0 0
  %122 = vmatpush1.bf16.msra.mxu0 0
  %123 = vmatprep.subr.bf16.mxu0 0
  %124 = vmatpush1.bf16.msra.mxu0 0
  %125 = vmatprep.subr.bf16.mxu0 0
  %126 = vmatpush1.bf16.msra.mxu0 0
  %127 = vmatprep.mubr.bf16.mxu0 0
  %128 = vmatmul.mubr.bf16.gmra.mrb[0].mxu0 %v45
  %v129 = vpop.f32.mrb[0].mxu0
  %v130 = vadd.f32 0.0, %v129
  %v131 = vpop.f32.mrb[0].mxu0
  %v132 = vpop.f32.mrb[0].mxu0
  %v133 = vadd.f32 0.0, %v132
  %v134 = vpop.f32.mrb[0].mxu0
  %135 = vdwg.mxu0
  %v136 = vadd.f32 %v21, %v130
  %v137 = vadd.f32 %v22, %v133
  %138 = vst [vmem:[#allocation2] sm:$0xff] %v136
  %139 = vst [vmem:[#allocation2 + $0x8] sm:$0xff] %v137
  // Predicated region
  $region18: #{net_forward.23} parent=0 // pred_check
    %p140 = pneg %p15
  $region19: #{net_forward.23} parent=0 // pred_check_branch
    %142 = sbr.rel (%p140) target = $region21
  $region20: #{net_forward.23} parent=0 // pred_region
    %v143 = vld [vmem:[#allocation2] sm:$0xff]
    %v144 = vld [vmem:[#allocation2 + $0x8] sm:$0xff]
    %v145 = vld [vmem:[%s2] sm:$0x1]
    %v147 = vlaneseq
    %v148 = vshrl.u32 %v147, 7
    %v149 = vsub.s32 0, %v148
    %v150 = vrot.slane %v145, %v149
    %v152 = vadd.f32 %v143, %v150
    %v153 = vadd.f32 %v144, %v150
    %154 = vst [vmem:[%s3] sm:$0xff] %v152
    %155 = vst [vmem:[%s3 + $0x8] sm:$0xff] %v153
  $region21: #{net_forward.23} parent=0 // pred_fallthru
    _
  // Predicated region
  $region22: #{net_forward.23} parent=0 // pred_check
    _
  $region23: #{net_forward.23} parent=0 // pred_check_branch
    %157 = sbr.rel (0) target = $region25
  $region24: #{net_forward.23} parent=0 // pred_region
    _
  $region25: #{net_forward.23} parent=0 // pred_fallthru
    _
  // Predicated region
  $region26: #{net_forward.23} parent=0 // pred_check
    _
  $region27: #{net_forward.23} parent=0 // pred_check_branch
    %159 = sbr.rel (0) target = $region29
  $region28: #{net_forward.23} parent=0 // pred_region
    _
  $region29: #{net_forward.23} parent=0 // pred_fallthru
    _

// kernel: net_forward.16
$region0: #{net_forward.16}
  #allocation0 [shape = 'u32[]', space=smem, size = 0x4, offset = 0x4, fixed_abs, tag = 'smem constant byte address 0x4 - core index']
  #allocation1 [shape = 'u32[144,128]{1,0:T(1,128)}', space=vmem, size = 0x12000, scoped, tag = 'internal scratch']
  #allocation2 [shape = 'f32[16,512]{1,0:T(8,128)}', space=vmem, size = 0x8000, scoped, tag = 'scratch operand']
  %s0 = inlined_call_operand.vmem [shape: bf16[16,128], index: 0, kind: input, shape index: {}]
  %s1 = inlined_call_operand.vmem [shape: bf16[128,512], index: 1, kind: input, shape index: {}]
  %s2 = inlined_call_operand.vmem [shape: f32[1,512], index: 2, kind: input, shape index: {}]
  %s3 = inlined_call_operand.vmem [shape: bf16[16,512], index: 3, kind: output, shape index: {}]
  %s4 = sld [smem:[#allocation0]]
  $region30: #{net_forward.16} parent=0
    _
  %s6 = ssub.s32 1, %s4
  %s7 = scalar_select 0, %s6, %s4
  // Predicated region
  $region2: #{net_forward.16} parent=0 // pred_check
    _
  $region3: #{net_forward.16} parent=0 // pred_check_branch
    %9 = sbr.rel (0) target = $region5
  $region4: #{net_forward.16} parent=0 // pred_region
    _
  $region5: #{net_forward.16} parent=0 // pred_fallthru
    _
  // Predicated region
  $region6: #{net_forward.16} parent=0 // pred_check
    _
  $region7: #{net_forward.16} parent=0 // pred_check_branch
    %11 = sbr.rel (0) target = $region9
  $region8: #{net_forward.16} parent=0 // pred_region
    _
  $region9: #{net_forward.16} parent=0 // pred_fallthru
    _
  // Predicated region
  $region10: #{net_forward.16} parent=0 // pred_check
    _
  $region11: #{net_forward.16} parent=0 // pred_check_branch
    %13 = sbr.rel (0) target = $region13
  $region12: #{net_forward.16} parent=0 // pred_region
    _
  $region13: #{net_forward.16} parent=0 // pred_fallthru
    _
  %p15 = scmp.eq.s32.totalorder 0, 0
  // Predicated region
  $region14: #{net_forward.16} parent=0 // pred_check
    %p16 = pneg %p15
  $region15: #{net_forward.16} parent=0 // pred_check_branch
    %18 = sbr.rel (%p16) target = $region17
  $region16: #{net_forward.16} parent=0 // pred_region
    %19 = vst [vmem:[#allocation2] sm:$0xff] 0.0
    %20 = vst [vmem:[#allocation2 + $0x8] sm:$0xff] 0.0
    %21 = vst [vmem:[#allocation2 + $0x10] sm:$0xff] 0.0
    %22 = vst [vmem:[#allocation2 + $0x18] sm:$0xff] 0.0
    %23 = vst [vmem:[#allocation2 + $0x20] sm:$0xff] 0.0
    %24 = vst [vmem:[#allocation2 + $0x28] sm:$0xff] 0.0
    %25 = vst [vmem:[#allocation2 + $0x30] sm:$0xff] 0.0
    %26 = vst [vmem:[#allocation2 + $0x38] sm:$0xff] 0.0
  $region17: #{net_forward.16} parent=0 // pred_fallthru
    _
  %v27 = vld [vmem:[#allocation2] sm:$0xff]
  %v28 = vld [vmem:[#allocation2 + $0x8] sm:$0xff]
  %v29 = vld [vmem:[#allocation2 + $0x10] sm:$0xff]
  %v30 = vld [vmem:[#allocation2 + $0x18] sm:$0xff]
  %v31 = vld [vmem:[#allocation2 + $0x20] sm:$0xff]
  %v32 = vld [vmem:[#allocation2 + $0x28] sm:$0xff]
  %v33 = vld [vmem:[#allocation2 + $0x30] sm:$0xff]
  %v34 = vld [vmem:[#allocation2 + $0x38] sm:$0xff]
  %v35 = vld [vmem:[%s0] sm:$0xf]
  %v36 = vld [vmem:[%s0 + $0x4] sm:$0xf]
  %v37 = vld [vmem:[%s1] sm:$0xff]
  %v38 = vld [vmem:[%s1 + $0x8] sm:$0xff]
  %v39 = vld [vmem:[%s1 + $0x10] sm:$0xff]
  %v40 = vld [vmem:[%s1 + $0x18] sm:$0xff]
  %v41 = vld [vmem:[%s1 + $0x20] sm:$0xff]
  %v42 = vld [vmem:[%s1 + $0x28] sm:$0xff]
  %v43 = vld [vmem:[%s1 + $0x30] sm:$0xff]
  %v44 = vld [vmem:[%s1 + $0x38] sm:$0xff]
  %v45 = vld [vmem:[%s1 + $0x40] sm:$0xff]
  %v46 = vld [vmem:[%s1 + $0x48] sm:$0xff]
  %v47 = vld [vmem:[%s1 + $0x50] sm:$0xff]
  %v48 = vld [vmem:[%s1 + $0x58] sm:$0xff]
  %v49 = vld [vmem:[%s1 + $0x60] sm:$0xff]
  %v50 = vld [vmem:[%s1 + $0x68] sm:$0xff]
  %v51 = vld [vmem:[%s1 + $0x70] sm:$0xff]
  %v52 = vld [vmem:[%s1 + $0x78] sm:$0xff]
  %v53 = vld [vmem:[%s1 + $0x80] sm:$0xff]
  %v54 = vld [vmem:[%s1 + $0x88] sm:$0xff]
  %v55 = vld [vmem:[%s1 + $0x90] sm:$0xff]
  %v56 = vld [vmem:[%s1 + $0x98] sm:$0xff]
  %v57 = vld [vmem:[%s1 + $0xa0] sm:$0xff]
  %v58 = vld [vmem:[%s1 + $0xa8] sm:$0xff]
  %v59 = vld [vmem:[%s1 + $0xb0] sm:$0xff]
  %v60 = vld [vmem:[%s1 + $0xb8] sm:$0xff]
  %v61 = vld [vmem:[%s1 + $0xc0] sm:$0xff]
  %v62 = vld [vmem:[%s1 + $0xc8] sm:$0xff]
  %v63 = vld [vmem:[%s1 + $0xd0] sm:$0xff]
  %v64 = vld [vmem:[%s1 + $0xd8] sm:$0xff]
  %v65 = vld [vmem:[%s1 + $0xe0] sm:$0xff]
  %v66 = vld [vmem:[%s1 + $0xe8] sm:$0xff]
  %v67 = vld [vmem:[%s1 + $0xf0] sm:$0xff]
  %v68 = vld [vmem:[%s1 + $0xf8] sm:$0xff]
  %v71 = vunpack.c.l.b16 %v35
  %v72 = vunpack.c.l.b16 %v36
  %v73 = vpack.c.b16 %v72, %v71
  %v107 = vunpack.c.l.b16 %v37
  %v108 = vunpack.c.h.b16 %v37
  %v109 = vunpack.c.l.b16 %v38
  %v110 = vunpack.c.h.b16 %v38
  %v111 = vunpack.c.l.b16 %v39
  %v112 = vunpack.c.h.b16 %v39
  %v113 = vunpack.c.l.b16 %v40
  %v114 = vunpack.c.h.b16 %v40
  %v115 = vunpack.c.l.b16 %v41
  %v116 = vunpack.c.h.b16 %v41
  %v117 = vunpack.c.l.b16 %v42
  %v118 = vunpack.c.h.b16 %v42
  %v119 = vunpack.c.l.b16 %v43
  %v120 = vunpack.c.h.b16 %v43
  %v121 = vunpack.c.l.b16 %v44
  %v122 = vunpack.c.h.b16 %v44
  %v123 = vunpack.c.l.b16 %v45
  %v124 = vunpack.c.h.b16 %v45
  %v125 = vunpack.c.l.b16 %v46
  %v126 = vunpack.c.h.b16 %v46
  %v127 = vunpack.c.l.b16 %v47
  %v128 = vunpack.c.h.b16 %v47
  %v129 = vunpack.c.l.b16 %v48
  %v130 = vunpack.c.h.b16 %v48
  %v131 = vunpack.c.l.b16 %v49
  %v132 = vunpack.c.h.b16 %v49
  %v133 = vunpack.c.l.b16 %v50
  %v134 = vunpack.c.h.b16 %v50
  %v135 = vunpack.c.l.b16 %v51
  %v136 = vunpack.c.h.b16 %v51
  %v137 = vunpack.c.l.b16 %v52
  %v138 = vunpack.c.h.b16 %v52
  %v139 = vunpack.c.l.b16 %v53
  %v140 = vunpack.c.h.b16 %v53
  %v141 = vunpack.c.l.b16 %v54
  %v142 = vunpack.c.h.b16 %v54
  %v143 = vunpack.c.l.b16 %v55
  %v144 = vunpack.c.h.b16 %v55
  %v145 = vunpack.c.l.b16 %v56
  %v146 = vunpack.c.h.b16 %v56
  %v147 = vunpack.c.l.b16 %v57
  %v148 = vunpack.c.h.b16 %v57
  %v149 = vunpack.c.l.b16 %v58
  %v150 = vunpack.c.h.b16 %v58
  %v151 = vunpack.c.l.b16 %v59
  %v152 = vunpack.c.h.b16 %v59
  %v153 = vunpack.c.l.b16 %v60
  %v154 = vunpack.c.h.b16 %v60
  %v155 = vunpack.c.l.b16 %v61
  %v156 = vunpack.c.h.b16 %v61
  %v157 = vunpack.c.l.b16 %v62
  %v158 = vunpack.c.h.b16 %v62
  %v159 = vunpack.c.l.b16 %v63
  %v160 = vunpack.c.h.b16 %v63
  %v161 = vunpack.c.l.b16 %v64
  %v162 = vunpack.c.h.b16 %v64
  %v163 = vunpack.c.l.b16 %v65
  %v164 = vunpack.c.h.b16 %v65
  %v165 = vunpack.c.l.b16 %v66
  %v166 = vunpack.c.h.b16 %v66
  %v167 = vunpack.c.l.b16 %v67
  %v168 = vunpack.c.h.b16 %v67
  %v169 = vunpack.c.l.b16 %v68
  %v170 = vunpack.c.h.b16 %v68
  %v171 = vpack.c.b16 %v111, %v107
  %v172 = vpack.c.b16 %v112, %v108
  %v173 = vpack.c.b16 %v113, %v109
  %v174 = vpack.c.b16 %v114, %v110
  %v175 = vpack.c.b16 %v119, %v115
  %v176 = vpack.c.b16 %v120, %v116
  %v177 = vpack.c.b16 %v121, %v117
  %v178 = vpack.c.b16 %v122, %v118
  %v179 = vpack.c.b16 %v127, %v123
  %v180 = vpack.c.b16 %v128, %v124
  %v181 = vpack.c.b16 %v129, %v125
  %v182 = vpack.c.b16 %v130, %v126
  %v183 = vpack.c.b16 %v135, %v131
  %v184 = vpack.c.b16 %v136, %v132
  %v185 = vpack.c.b16 %v137, %v133
  %v186 = vpack.c.b16 %v138, %v134
  %v187 = vpack.c.b16 %v143, %v139
  %v188 = vpack.c.b16 %v144, %v140
  %v189 = vpack.c.b16 %v145, %v141
  %v190 = vpack.c.b16 %v146, %v142
  %v191 = vpack.c.b16 %v151, %v147
  %v192 = vpack.c.b16 %v152, %v148
  %v193 = vpack.c.b16 %v153, %v149
  %v194 = vpack.c.b16 %v154, %v150
  %v195 = vpack.c.b16 %v159, %v155
  %v196 = vpack.c.b16 %v160, %v156
  %v197 = vpack.c.b16 %v161, %v157
  %v198 = vpack.c.b16 %v162, %v158
  %v199 = vpack.c.b16 %v167, %v163
  %v200 = vpack.c.b16 %v168, %v164
  %v201 = vpack.c.b16 %v169, %v165
  %v202 = vpack.c.b16 %v170, %v166
  %235 = vmatprep.subr.bf16.mxu0 %v172
  %236 = vmatpush1.bf16.msra.mxu0 %v171
  %237 = vmatprep.subr.bf16.mxu0 %v176
  %238 = vmatpush1.bf16.msra.mxu0 %v175
  %239 = vmatprep.subr.bf16.mxu0 %v180
  %240 = vmatpush1.bf16.msra.mxu0 %v179
  %241 = vmatprep.subr.bf16.mxu0 %v184
  %242 = vmatpush1.bf16.msra.mxu0 %v183
  %243 = vmatprep.subr.bf16.mxu0 %v188
  %244 = vmatpush1.bf16.msra.mxu0 %v187
  %245 = vmatprep.subr.bf16.mxu0 %v192
  %246 = vmatpush1.bf16.msra.mxu0 %v191
  %247 = vmatprep.subr.bf16.mxu0 %v196
  %248 = vmatpush1.bf16.msra.mxu0 %v195
  %249 = vmatprep.subr.bf16.mxu0 %v200
  %250 = vmatpush1.bf16.msra.mxu0 %v199
  %251 = vmatprep.subr.bf16.mxu0 0
  %252 = vmatpush1.bf16.msra.mxu0 0
  %253 = vmatprep.subr.bf16.mxu0 0
  %254 = vmatpush1.bf16.msra.mxu0 0
  %255 = vmatprep.subr.bf16.mxu0 0
  %256 = vmatpush1.bf16.msra.mxu0 0
  %257 = vmatprep.subr.bf16.mxu0 0
  %258 = vmatpush1.bf16.msra.mxu0 0
  %259 = vmatprep.subr.bf16.mxu0 0
  %260 = vmatpush1.bf16.msra.mxu0 0
  %261 = vmatprep.subr.bf16.mxu0 0
  %262 = vmatpush1.bf16.msra.mxu0 0
  %263 = vmatprep.subr.bf16.mxu0 0
  %264 = vmatpush1.bf16.msra.mxu0 0
  %265 = vmatprep.subr.bf16.mxu0 0
  %266 = vmatpush1.bf16.msra.mxu0 0
  %267 = vmatprep.mubr.bf16.mxu0 0
  %268 = vmatmul.mubr.bf16.gmra.mrb[0].mxu0 %v73
  %v269 = vpop.f32.mrb[0].mxu0
  %v270 = vadd.f32 0.0, %v269
  %v271 = vpop.f32.mrb[0].mxu0
  %v272 = vadd.f32 0.0, %v271
  %v273 = vpop.f32.mrb[0].mxu0
  %v274 = vadd.f32 0.0, %v273
  %v275 = vpop.f32.mrb[0].mxu0
  %v276 = vadd.f32 0.0, %v275
  %277 = vdwg.mxu0
  %278 = vmatprep.subr.bf16.mxu0 %v174
  %279 = vmatpush1.bf16.msra.mxu0 %v173
  %280 = vmatprep.subr.bf16.mxu0 %v178
  %281 = vmatpush1.bf16.msra.mxu0 %v177
  %282 = vmatprep.subr.bf16.mxu0 %v182
  %283 = vmatpush1.bf16.msra.mxu0 %v181
  %284 = vmatprep.subr.bf16.mxu0 %v186
  %285 = vmatpush1.bf16.msra.mxu0 %v185
  %286 = vmatprep.subr.bf16.mxu0 %v190
  %287 = vmatpush1.bf16.msra.mxu0 %v189
  %288 = vmatprep.subr.bf16.mxu0 %v194
  %289 = vmatpush1.bf16.msra.mxu0 %v193
  %290 = vmatprep.subr.bf16.mxu0 %v198
  %291 = vmatpush1.bf16.msra.mxu0 %v197
  %292 = vmatprep.subr.bf16.mxu0 %v202
  %293 = vmatpush1.bf16.msra.mxu0 %v201
  %294 = vmatprep.subr.bf16.mxu0 0
  %295 = vmatpush1.bf16.msra.mxu0 0
  %296 = vmatprep.subr.bf16.mxu0 0
  %297 = vmatpush1.bf16.msra.mxu0 0
  %298 = vmatprep.subr.bf16.mxu0 0
  %299 = vmatpush1.bf16.msra.mxu0 0
  %300 = vmatprep.subr.bf16.mxu0 0
  %301 = vmatpush1.bf16.msra.mxu0 0
  %302 = vmatprep.subr.bf16.mxu0 0
  %303 = vmatpush1.bf16.msra.mxu0 0
  %304 = vmatprep.subr.bf16.mxu0 0
  %305 = vmatpush1.bf16.msra.mxu0 0
  %306 = vmatprep.subr.bf16.mxu0 0
  %307 = vmatpush1.bf16.msra.mxu0 0
  %308 = vmatprep.subr.bf16.mxu0 0
  %309 = vmatpush1.bf16.msra.mxu0 0
  %310 = vmatprep.mubr.bf16.mxu0 0
  %311 = vmatmul.mubr.bf16.gmra.mrb[0].mxu0 %v73
  %v312 = vpop.f32.mrb[0].mxu0
  %v313 = vadd.f32 0.0, %v312
  %v314 = vpop.f32.mrb[0].mxu0
  %v315 = vadd.f32 0.0, %v314
  %v316 = vpop.f32.mrb[0].mxu0
  %v317 = vadd.f32 0.0, %v316
  %v318 = vpop.f32.mrb[0].mxu0
  %v319 = vadd.f32 0.0, %v318
  %320 = vdwg.mxu0
  %v321 = vadd.f32 %v27, %v270
  %v322 = vadd.f32 %v28, %v272
  %v323 = vadd.f32 %v29, %v313
  %v324 = vadd.f32 %v30, %v315
  %v325 = vadd.f32 %v31, %v274
  %v326 = vadd.f32 %v32, %v276
  %v327 = vadd.f32 %v33, %v317
  %v328 = vadd.f32 %v34, %v319
  %329 = vst [vmem:[#allocation2] sm:$0xff] %v321
  %330 = vst [vmem:[#allocation2 + $0x8] sm:$0xff] %v322
  %331 = vst [vmem:[#allocation2 + $0x10] sm:$0xff] %v323
  %332 = vst [vmem:[#allocation2 + $0x18] sm:$0xff] %v324
  %333 = vst [vmem:[#allocation2 + $0x20] sm:$0xff] %v325
  %334 = vst [vmem:[#allocation2 + $0x28] sm:$0xff] %v326
  %335 = vst [vmem:[#allocation2 + $0x30] sm:$0xff] %v327
  %336 = vst [vmem:[#allocation2 + $0x38] sm:$0xff] %v328
  // Predicated region
  $region18: #{net_forward.16} parent=0 // pred_check
    %p337 = pneg %p15
  $region19: #{net_forward.16} parent=0 // pred_check_branch
    %339 = sbr.rel (%p337) target = $region21
  $region20: #{net_forward.16} parent=0 // pred_region
    %v340 = vld [vmem:[#allocation2] sm:$0xff]
    %v341 = vld [vmem:[#allocation2 + $0x8] sm:$0xff]
    %v342 = vld [vmem:[#allocation2 + $0x10] sm:$0xff]
    %v343 = vld [vmem:[#allocation2 + $0x18] sm:$0xff]
    %v344 = vld [vmem:[#allocation2 + $0x20] sm:$0xff]
    %v345 = vld [vmem:[#allocation2 + $0x28] sm:$0xff]
    %v346 = vld [vmem:[#allocation2 + $0x30] sm:$0xff]
    %v347 = vld [vmem:[#allocation2 + $0x38] sm:$0xff]
    %v348 = vld [vmem:[%s2] sm:$0xf]
    %v350 = vlaneseq
    %v351 = vshrl.u32 %v350, 7
    %v352 = vsub.s32 0, %v351
    %v353 = vrot.slane %v348, %v352
    %v354 = vlaneseq
    %v355 = vshrl.u32 %v354, 7
    %v356 = vsub.s32 1, %v355
    %v357 = vrot.slane %v348, %v356
    %v358 = vlaneseq
    %v359 = vshrl.u32 %v358, 7
    %v360 = vsub.s32 2, %v359
    %v361 = vrot.slane %v348, %v360
    %v362 = vlaneseq
    %v363 = vshrl.u32 %v362, 7
    %v364 = vsub.s32 3, %v363
    %v365 = vrot.slane %v348, %v364
    %v370 = vadd.f32 %v340, %v353
    %v371 = vadd.f32 %v341, %v357
    %v372 = vadd.f32 %v342, %v361
    %v373 = vadd.f32 %v343, %v365
    %v374 = vadd.f32 %v344, %v353
    %v375 = vadd.f32 %v345, %v357
    %v376 = vadd.f32 %v346, %v361
    %v377 = vadd.f32 %v347, %v365
    %v378 = vmul.f32 %v370, 0.5
    %v379 = vmul.f32 %v371, 0.5
    %v380 = vmul.f32 %v372, 0.5
    %v381 = vmul.f32 %v373, 0.5
    %v382 = vmul.f32 %v374, 0.5
    %v383 = vmul.f32 %v375, 0.5
    %v384 = vmul.f32 %v376, 0.5
    %v385 = vmul.f32 %v377, 0.5
    %v386 = vmul.f32 %v370, 0.044715
    %v387 = vmul.f32 %v371, 0.044715
    %v388 = vmul.f32 %v372, 0.044715
    %v389 = vmul.f32 %v373, 0.044715
    %v390 = vmul.f32 %v374, 0.044715
    %v391 = vmul.f32 %v375, 0.044715
    %v392 = vmul.f32 %v376, 0.044715
    %v393 = vmul.f32 %v377, 0.044715
    %v394 = vmul.f32 %v386, %v370
    %v395 = vmul.f32 %v387, %v371
    %v396 = vmul.f32 %v388, %v372
    %v397 = vmul.f32 %v389, %v373
    %v398 = vmul.f32 %v390, %v374
    %v399 = vmul.f32 %v391, %v375
    %v400 = vmul.f32 %v392, %v376
    %v401 = vmul.f32 %v393, %v377
    %v402 = vmul.f32 %v394, %v370
    %v403 = vmul.f32 %v395, %v371
    %v404 = vmul.f32 %v396, %v372
    %v405 = vmul.f32 %v397, %v373
    %v406 = vmul.f32 %v398, %v374
    %v407 = vmul.f32 %v399, %v375
    %v408 = vmul.f32 %v400, %v376
    %v409 = vmul.f32 %v401, %v377
    %v410 = vadd.f32 %v370, %v402
    %v411 = vadd.f32 %v371, %v403
    %v412 = vadd.f32 %v372, %v404
    %v413 = vadd.f32 %v373, %v405
    %v414 = vadd.f32 %v374, %v406
    %v415 = vadd.f32 %v375, %v407
    %v416 = vadd.f32 %v376, %v408
    %v417 = vadd.f32 %v377, %v409
    %v418 = vmul.f32 %v410, 0.7978846
    %v419 = vmul.f32 %v411, 0.7978846
    %v420 = vmul.f32 %v412, 0.7978846
    %v421 = vmul.f32 %v413, 0.7978846
    %v422 = vmul.f32 %v414, 0.7978846
    %v423 = vmul.f32 %v415, 0.7978846
    %v424 = vmul.f32 %v416, 0.7978846
    %v425 = vmul.f32 %v417, 0.7978846
    %v426 = vtanh.pop %v418
    %v427 = vtanh.pop %v419
    %v428 = vtanh.pop %v420
    %v429 = vtanh.pop %v421
    %v430 = vtanh.pop %v422
    %v431 = vtanh.pop %v423
    %v432 = vtanh.pop %v424
    %v433 = vtanh.pop %v425
    %v434 = vadd.f32 %v426, 1.0
    %v435 = vadd.f32 %v427, 1.0
    %v436 = vadd.f32 %v428, 1.0
    %v437 = vadd.f32 %v429, 1.0
    %v438 = vadd.f32 %v430, 1.0
    %v439 = vadd.f32 %v431, 1.0
    %v440 = vadd.f32 %v432, 1.0
    %v441 = vadd.f32 %v433, 1.0
    %v442 = vmul.f32 %v378, %v434
    %v443 = vmul.f32 %v379, %v435
    %v444 = vmul.f32 %v380, %v436
    %v445 = vmul.f32 %v381, %v437
    %v446 = vmul.f32 %v382, %v438
    %v447 = vmul.f32 %v383, %v439
    %v448 = vmul.f32 %v384, %v440
    %v449 = vmul.f32 %v385, %v441
    %v450 = vpack.c.bf16 %v446, %v442
    %v451 = vpack.c.bf16 %v447, %v443
    %v452 = vpack.c.bf16 %v448, %v444
    %v453 = vpack.c.bf16 %v449, %v445
    %v458 = vunpack.c.l.b16 %v450
    %v459 = vunpack.c.l.b16 %v451
    %v460 = vunpack.c.l.b16 %v452
    %v461 = vunpack.c.l.b16 %v453
    %v462 = vunpack.c.h.b16 %v450
    %v463 = vunpack.c.h.b16 %v451
    %v464 = vunpack.c.h.b16 %v452
    %v465 = vunpack.c.h.b16 %v453
    %v466 = vpack.c.b16 %v459, %v458
    %v467 = vpack.c.b16 %v461, %v460
    %v468 = vpack.c.b16 %v463, %v462
    %v469 = vpack.c.b16 %v465, %v464
    %474 = vst [vmem:[%s3] sm:$0xff] %v466
    %475 = vst [vmem:[%s3 + $0x8] sm:$0xff] %v467
    %476 = vst [vmem:[%s3 + $0x10] sm:$0xff] %v468
    %477 = vst [vmem:[%s3 + $0x18] sm:$0xff] %v469
  $region21: #{net_forward.16} parent=0 // pred_fallthru
    _
  // Predicated region
  $region22: #{net_forward.16} parent=0 // pred_check
    _
  $region23: #{net_forward.16} parent=0 // pred_check_branch
    %479 = sbr.rel (0) target = $region25
  $region24: #{net_forward.16} parent=0 // pred_region
    _
  $region25: #{net_forward.16} parent=0 // pred_fallthru
    _
  // Predicated region
  $region26: #{net_forward.16} parent=0 // pred_check
    _
  $region27: #{net_forward.16} parent=0 // pred_check_branch
    %481 = sbr.rel (0) target = $region29
  $region28: #{net_forward.16} parent=0 // pred_region
    _
  $region29: #{net_forward.16} parent=0 // pred_fallthru
    _

// kernel: net_forward.17
$region0: #{net_forward.17}
  #allocation0 [shape = 'u32[]', space=smem, size = 0x4, offset = 0x4, fixed_abs, tag = 'smem constant byte address 0x4 - core index']
  #allocation1 [shape = 'u32[144,128]{1,0:T(1,128)}', space=vmem, size = 0x12000, scoped, tag = 'internal scratch']
  #allocation2 [shape = 'f32[16,128]{1,0:T(8,128)}', space=vmem, size = 0x2000, scoped, tag = 'scratch operand']
  %s0 = inlined_call_operand.vmem [shape: bf16[16,512], index: 0, kind: input, shape index: {}]
  %s1 = inlined_call_operand.vmem [shape: bf16[512,128], index: 1, kind: input, shape index: {}]
  %s2 = inlined_call_operand.vmem [shape: f32[1,128], index: 2, kind: input, shape index: {}]
  %s3 = inlined_call_operand.vmem [shape: bf16[16,128], index: 3, kind: input, shape index: {}]
  %s4 = inlined_call_operand.vmem [shape: f32[1,128], index: 4, kind: input, shape index: {}]
  %s5 = inlined_call_operand.vmem [shape: f32[1,128], index: 5, kind: input, shape index: {}]
  %s6 = inlined_call_operand.vmem [shape: bf16[16,128], index: 6, kind: output, shape index: {}]
  %s7 = sld [smem:[#allocation0]]
  $region42: #{net_forward.17} parent=0
    _
  %s9 = ssub.s32 1, %s7
  %s10 = scalar_select 0, %s9, %s7
  // Predicated region
  $region2: #{net_forward.17} parent=0 // pred_check
    _
  $region3: #{net_forward.17} parent=0 // pred_check_branch
    %12 = sbr.rel (0) target = $region5
  $region4: #{net_forward.17} parent=0 // pred_region
    _
  $region5: #{net_forward.17} parent=0 // pred_fallthru
    _
  // Predicated region
  $region6: #{net_forward.17} parent=0 // pred_check
    _
  $region7: #{net_forward.17} parent=0 // pred_check_branch
    %14 = sbr.rel (0) target = $region9
  $region8: #{net_forward.17} parent=0 // pred_region
    _
  $region9: #{net_forward.17} parent=0 // pred_fallthru
    _
  // Predicated region
  $region10: #{net_forward.17} parent=0 // pred_check
    _
  $region11: #{net_forward.17} parent=0 // pred_check_branch
    %16 = sbr.rel (0) target = $region13
  $region12: #{net_forward.17} parent=0 // pred_region
    _
  $region13: #{net_forward.17} parent=0 // pred_fallthru
    _
  // Predicated region
  $region14: #{net_forward.17} parent=0 // pred_check
    _
  $region15: #{net_forward.17} parent=0 // pred_check_branch
    %18 = sbr.rel (0) target = $region17
  $region16: #{net_forward.17} parent=0 // pred_region
    _
  $region17: #{net_forward.17} parent=0 // pred_fallthru
    _
  // Predicated region
  $region18: #{net_forward.17} parent=0 // pred_check
    _
  $region19: #{net_forward.17} parent=0 // pred_check_branch
    %20 = sbr.rel (0) target = $region21
  $region20: #{net_forward.17} parent=0 // pred_region
    _
  $region21: #{net_forward.17} parent=0 // pred_fallthru
    _
  // Predicated region
  $region22: #{net_forward.17} parent=0 // pred_check
    _
  $region23: #{net_forward.17} parent=0 // pred_check_branch
    %22 = sbr.rel (0) target = $region25
  $region24: #{net_forward.17} parent=0 // pred_region
    _
  $region25: #{net_forward.17} parent=0 // pred_fallthru
    _
  %p24 = scmp.eq.s32.totalorder 0, 0
  // Predicated region
  $region26: #{net_forward.17} parent=0 // pred_check
    %p25 = pneg %p24
  $region27: #{net_forward.17} parent=0 // pred_check_branch
    %27 = sbr.rel (%p25) target = $region29
  $region28: #{net_forward.17} parent=0 // pred_region
    %28 = vst [vmem:[#allocation2] sm:$0xff] 0.0
    %29 = vst [vmem:[#allocation2 + $0x8] sm:$0xff] 0.0
  $region29: #{net_forward.17} parent=0 // pred_fallthru
    _
  %v30 = vld [vmem:[#allocation2] sm:$0xff]
  %v31 = vld [vmem:[#allocation2 + $0x8] sm:$0xff]
  %v32 = vld [vmem:[%s0] sm:$0xff]
  %v33 = vld [vmem:[%s0 + $0x8] sm:$0xff]
  %v34 = vld [vmem:[%s0 + $0x10] sm:$0xff]
  %v35 = vld [vmem:[%s0 + $0x18] sm:$0xff]
  %v36 = vld [vmem:[%s1] sm:$0xf]
  %v37 = vld [vmem:[%s1 + $0x4] sm:$0xf]
  %v38 = vld [vmem:[%s1 + $0x8] sm:$0xf]
  %v39 = vld [vmem:[%s1 + $0xc] sm:$0xf]
  %v40 = vld [vmem:[%s1 + $0x10] sm:$0xf]
  %v41 = vld [vmem:[%s1 + $0x14] sm:$0xf]
  %v42 = vld [vmem:[%s1 + $0x18] sm:$0xf]
  %v43 = vld [vmem:[%s1 + $0x1c] sm:$0xf]
  %v44 = vld [vmem:[%s1 + $0x20] sm:$0xf]
  %v45 = vld [vmem:[%s1 + $0x24] sm:$0xf]
  %v46 = vld [vmem:[%s1 + $0x28] sm:$0xf]
  %v47 = vld [vmem:[%s1 + $0x2c] sm:$0xf]
  %v48 = vld [vmem:[%s1 + $0x30] sm:$0xf]
  %v49 = vld [vmem:[%s1 + $0x34] sm:$0xf]
  %v50 = vld [vmem:[%s1 + $0x38] sm:$0xf]
  %v51 = vld [vmem:[%s1 + $0x3c] sm:$0xf]
  %v52 = vld [vmem:[%s1 + $0x40] sm:$0xf]
  %v53 = vld [vmem:[%s1 + $0x44] sm:$0xf]
  %v54 = vld [vmem:[%s1 + $0x48] sm:$0xf]
  %v55 = vld [vmem:[%s1 + $0x4c] sm:$0xf]
  %v56 = vld [vmem:[%s1 + $0x50] sm:$0xf]
  %v57 = vld [vmem:[%s1 + $0x54] sm:$0xf]
  %v58 = vld [vmem:[%s1 + $0x58] sm:$0xf]
  %v59 = vld [vmem:[%s1 + $0x5c] sm:$0xf]
  %v60 = vld [vmem:[%s1 + $0x60] sm:$0xf]
  %v61 = vld [vmem:[%s1 + $0x64] sm:$0xf]
  %v62 = vld [vmem:[%s1 + $0x68] sm:$0xf]
  %v63 = vld [vmem:[%s1 + $0x6c] sm:$0xf]
  %v64 = vld [vmem:[%s1 + $0x70] sm:$0xf]
  %v65 = vld [vmem:[%s1 + $0x74] sm:$0xf]
  %v66 = vld [vmem:[%s1 + $0x78] sm:$0xf]
  %v67 = vld [vmem:[%s1 + $0x7c] sm:$0xf]
  %v68 = vld [vmem:[%s1 + $0x80] sm:$0xf]
  %v69 = vld [vmem:[%s1 + $0x84] sm:$0xf]
  %v70 = vld [vmem:[%s1 + $0x88] sm:$0xf]
  %v71 = vld [vmem:[%s1 + $0x8c] sm:$0xf]
  %v72 = vld [vmem:[%s1 + $0x90] sm:$0xf]
  %v73 = vld [vmem:[%s1 + $0x94] sm:$0xf]
  %v74 = vld [vmem:[%s1 + $0x98] sm:$0xf]
  %v75 = vld [vmem:[%s1 + $0x9c] sm:$0xf]
  %v76 = vld [vmem:[%s1 + $0xa0] sm:$0xf]
  %v77 = vld [vmem:[%s1 + $0xa4] sm:$0xf]
  %v78 = vld [vmem:[%s1 + $0xa8] sm:$0xf]
  %v79 = vld [vmem:[%s1 + $0xac] sm:$0xf]
  %v80 = vld [vmem:[%s1 + $0xb0] sm:$0xf]
  %v81 = vld [vmem:[%s1 + $0xb4] sm:$0xf]
  %v82 = vld [vmem:[%s1 + $0xb8] sm:$0xf]
  %v83 = vld [vmem:[%s1 + $0xbc] sm:$0xf]
  %v84 = vld [vmem:[%s1 + $0xc0] sm:$0xf]
  %v85 = vld [vmem:[%s1 + $0xc4] sm:$0xf]
  %v86 = vld [vmem:[%s1 + $0xc8] sm:$0xf]
  %v87 = vld [vmem:[%s1 + $0xcc] sm:$0xf]
  %v88 = vld [vmem:[%s1 + $0xd0] sm:$0xf]
  %v89 = vld [vmem:[%s1 + $0xd4] sm:$0xf]
  %v90 = vld [vmem:[%s1 + $0xd8] sm:$0xf]
  %v91 = vld [vmem:[%s1 + $0xdc] sm:$0xf]
  %v92 = vld [vmem:[%s1 + $0xe0] sm:$0xf]
  %v93 = vld [vmem:[%s1 + $0xe4] sm:$0xf]
  %v94 = vld [vmem:[%s1 + $0xe8] sm:$0xf]
  %v95 = vld [vmem:[%s1 + $0xec] sm:$0xf]
  %v96 = vld [vmem:[%s1 + $0xf0] sm:$0xf]
  %v97 = vld [vmem:[%s1 + $0xf4] sm:$0xf]
  %v98 = vld [vmem:[%s1 + $0xf8] sm:$0xf]
  %v99 = vld [vmem:[%s1 + $0xfc] sm:$0xf]
  %v104 = vunpack.c.l.b16 %v32
  %v105 = vunpack.c.h.b16 %v32
  %v106 = vunpack.c.l.b16 %v33
  %v107 = vunpack.c.h.b16 %v33
  %v108 = vunpack.c.l.b16 %v34
  %v109 = vunpack.c.h.b16 %v34
  %v110 = vunpack.c.l.b16 %v35
  %v111 = vunpack.c.h.b16 %v35
  %v112 = vpack.c.b16 %v108, %v104
  %v113 = vpack.c.b16 %v109, %v105
  %v114 = vpack.c.b16 %v110, %v106
  %v115 = vpack.c.b16 %v111, %v107
  %v184 = vunpack.c.l.b16 %v36
  %v185 = vunpack.c.l.b16 %v37
  %v186 = vunpack.c.l.b16 %v38
  %v187 = vunpack.c.l.b16 %v39
  %v188 = vunpack.c.l.b16 %v40
  %v189 = vunpack.c.l.b16 %v41
  %v190 = vunpack.c.l.b16 %v42
  %v191 = vunpack.c.l.b16 %v43
  %v192 = vunpack.c.l.b16 %v44
  %v193 = vunpack.c.l.b16 %v45
  %v194 = vunpack.c.l.b16 %v46
  %v195 = vunpack.c.l.b16 %v47
  %v196 = vunpack.c.l.b16 %v48
  %v197 = vunpack.c.l.b16 %v49
  %v198 = vunpack.c.l.b16 %v50
  %v199 = vunpack.c.l.b16 %v51
  %v200 = vunpack.c.l.b16 %v52
  %v201 = vunpack.c.l.b16 %v53
  %v202 = vunpack.c.l.b16 %v54
  %v203 = vunpack.c.l.b16 %v55
  %v204 = vunpack.c.l.b16 %v56
  %v205 = vunpack.c.l.b16 %v57
  %v206 = vunpack.c.l.b16 %v58
  %v207 = vunpack.c.l.b16 %v59
  %v208 = vunpack.c.l.b16 %v60
  %v209 = vunpack.c.l.b16 %v61
  %v210 = vunpack.c.l.b16 %v62
  %v211 = vunpack.c.l.b16 %v63
  %v212 = vunpack.c.l.b16 %v64
  %v213 = vunpack.c.l.b16 %v65
  %v214 = vunpack.c.l.b16 %v66
  %v215 = vunpack.c.l.b16 %v67
  %v216 = vunpack.c.l.b16 %v68
  %v217 = vunpack.c.l.b16 %v69
  %v218 = vunpack.c.l.b16 %v70
  %v219 = vunpack.c.l.b16 %v71
  %v220 = vunpack.c.l.b16 %v72
  %v221 = vunpack.c.l.b16 %v73
  %v222 = vunpack.c.l.b16 %v74
  %v223 = vunpack.c.l.b16 %v75
  %v224 = vunpack.c.l.b16 %v76
  %v225 = vunpack.c.l.b16 %v77
  %v226 = vunpack.c.l.b16 %v78
  %v227 = vunpack.c.l.b16 %v79
  %v228 = vunpack.c.l.b16 %v80
  %v229 = vunpack.c.l.b16 %v81
  %v230 = vunpack.c.l.b16 %v82
  %v231 = vunpack.c.l.b16 %v83
  %v232 = vunpack.c.l.b16 %v84
  %v233 = vunpack.c.l.b16 %v85
  %v234 = vunpack.c.l.b16 %v86
  %v235 = vunpack.c.l.b16 %v87
  %v236 = vunpack.c.l.b16 %v88
  %v237 = vunpack.c.l.b16 %v89
  %v238 = vunpack.c.l.b16 %v90
  %v239 = vunpack.c.l.b16 %v91
  %v240 = vunpack.c.l.b16 %v92
  %v241 = vunpack.c.l.b16 %v93
  %v242 = vunpack.c.l.b16 %v94
  %v243 = vunpack.c.l.b16 %v95
  %v244 = vunpack.c.l.b16 %v96
  %v245 = vunpack.c.l.b16 %v97
  %v246 = vunpack.c.l.b16 %v98
  %v247 = vunpack.c.l.b16 %v99
  %v248 = vpack.c.b16 %v185, %v184
  %v249 = vpack.c.b16 %v187, %v186
  %v250 = vpack.c.b16 %v189, %v188
  %v251 = vpack.c.b16 %v191, %v190
  %v252 = vpack.c.b16 %v193, %v192
  %v253 = vpack.c.b16 %v195, %v194
  %v254 = vpack.c.b16 %v197, %v196
  %v255 = vpack.c.b16 %v199, %v198
  %v256 = vpack.c.b16 %v201, %v200
  %v257 = vpack.c.b16 %v203, %v202
  %v258 = vpack.c.b16 %v205, %v204
  %v259 = vpack.c.b16 %v207, %v206
  %v260 = vpack.c.b16 %v209, %v208
  %v261 = vpack.c.b16 %v211, %v210
  %v262 = vpack.c.b16 %v213, %v212
  %v263 = vpack.c.b16 %v215, %v214
  %v264 = vpack.c.b16 %v217, %v216
  %v265 = vpack.c.b16 %v219, %v218
  %v266 = vpack.c.b16 %v221, %v220
  %v267 = vpack.c.b16 %v223, %v222
  %v268 = vpack.c.b16 %v225, %v224
  %v269 = vpack.c.b16 %v227, %v226
  %v270 = vpack.c.b16 %v229, %v228
  %v271 = vpack.c.b16 %v231, %v230
  %v272 = vpack.c.b16 %v233, %v232
  %v273 = vpack.c.b16 %v235, %v234
  %v274 = vpack.c.b16 %v237, %v236
  %v275 = vpack.c.b16 %v239, %v238
  %v276 = vpack.c.b16 %v241, %v240
  %v277 = vpack.c.b16 %v243, %v242
  %v278 = vpack.c.b16 %v245, %v244
  %v279 = vpack.c.b16 %v247, %v246
  %312 = vmatprep.subr.bf16.mxu0 0
  %313 = vmatpush1.bf16.msra.mxu0 %v248
  %314 = vmatprep.subr.bf16.mxu0 0
  %315 = vmatpush1.bf16.msra.mxu0 %v249
  %316 = vmatprep.subr.bf16.mxu0 0
  %317 = vmatpush1.bf16.msra.mxu0 %v250
  %318 = vmatprep.subr.bf16.mxu0 0
  %319 = vmatpush1.bf16.msra.mxu0 %v251
  %320 = vmatprep.subr.bf16.mxu0 0
  %321 = vmatpush1.bf16.msra.mxu0 %v252
  %322 = vmatprep.subr.bf16.mxu0 0
  %323 = vmatpush1.bf16.msra.mxu0 %v253
  %324 = vmatprep.subr.bf16.mxu0 0
  %325 = vmatpush1.bf16.msra.mxu0 %v254
  %326 = vmatprep.subr.bf16.mxu0 0
  %327 = vmatpush1.bf16.msra.mxu0 %v255
  %328 = vmatprep.subr.bf16.mxu0 0
  %329 = vmatpush1.bf16.msra.mxu0 %v256
  %330 = vmatprep.subr.bf16.mxu0 0
  %331 = vmatpush1.bf16.msra.mxu0 %v257
  %332 = vmatprep.subr.bf16.mxu0 0
  %333 = vmatpush1.bf16.msra.mxu0 %v258
  %334 = vmatprep.subr.bf16.mxu0 0
  %335 = vmatpush1.bf16.msra.mxu0 %v259
  %336 = vmatprep.subr.bf16.mxu0 0
  %337 = vmatpush1.bf16.msra.mxu0 %v260
  %338 = vmatprep.subr.bf16.mxu0 0
  %339 = vmatpush1.bf16.msra.mxu0 %v261
  %340 = vmatprep.subr.bf16.mxu0 0
  %341 = vmatpush1.bf16.msra.mxu0 %v262
  %342 = vmatprep.subr.bf16.mxu0 0
  %343 = vmatpush1.bf16.msra.mxu0 %v263
  %344 = vmatprep.mubr.bf16.mxu0 %v113
  %345 = vmatmul.mubr.bf16.gmra.mrb[0].mxu0 %v112
  %v346 = vpop.f32.mrb[0].mxu0
  %v347 = vadd.f32 0.0, %v346
  %v348 = vpop.f32.mrb[0].mxu0
  %v349 = vpop.f32.mrb[0].mxu0
  %v350 = vadd.f32 0.0, %v349
  %v351 = vpop.f32.mrb[0].mxu0
  %352 = vdwg.mxu0
  %353 = vmatprep.subr.bf16.mxu0 0
  %354 = vmatpush1.bf16.msra.mxu0 %v264
  %355 = vmatprep.subr.bf16.mxu0 0
  %356 = vmatpush1.bf16.msra.mxu0 %v265
  %357 = vmatprep.subr.bf16.mxu0 0
  %358 = vmatpush1.bf16.msra.mxu0 %v266
  %359 = vmatprep.subr.bf16.mxu0 0
  %360 = vmatpush1.bf16.msra.mxu0 %v267
  %361 = vmatprep.subr.bf16.mxu0 0
  %362 = vmatpush1.bf16.msra.mxu0 %v268
  %363 = vmatprep.subr.bf16.mxu0 0
  %364 = vmatpush1.bf16.msra.mxu0 %v269
  %365 = vmatprep.subr.bf16.mxu0 0
  %366 = vmatpush1.bf16.msra.mxu0 %v270
  %367 = vmatprep.subr.bf16.mxu0 0
  %368 = vmatpush1.bf16.msra.mxu0 %v271
  %369 = vmatprep.subr.bf16.mxu0 0
  %370 = vmatpush1.bf16.msra.mxu0 %v272
  %371 = vmatprep.subr.bf16.mxu0 0
  %372 = vmatpush1.bf16.msra.mxu0 %v273
  %373 = vmatprep.subr.bf16.mxu0 0
  %374 = vmatpush1.bf16.msra.mxu0 %v274
  %375 = vmatprep.subr.bf16.mxu0 0
  %376 = vmatpush1.bf16.msra.mxu0 %v275
  %377 = vmatprep.subr.bf16.mxu0 0
  %378 = vmatpush1.bf16.msra.mxu0 %v276
  %379 = vmatprep.subr.bf16.mxu0 0
  %380 = vmatpush1.bf16.msra.mxu0 %v277
  %381 = vmatprep.subr.bf16.mxu0 0
  %382 = vmatpush1.bf16.msra.mxu0 %v278
  %383 = vmatprep.subr.bf16.mxu0 0
  %384 = vmatpush1.bf16.msra.mxu0 %v279
  %385 = vmatprep.mubr.bf16.mxu0 %v115
  %386 = vmatmul.mubr.bf16.gmra.mrb[0].mxu0 %v114
  %v387 = vpop.f32.mrb[0].mxu0
  %v388 = vadd.f32 %v347, %v387
  %v389 = vpop.f32.mrb[0].mxu0
  %v390 = vpop.f32.mrb[0].mxu0
  %v391 = vadd.f32 %v350, %v390
  %v392 = vpop.f32.mrb[0].mxu0
  %393 = vdwg.mxu0
  %v394 = vadd.f32 %v30, %v388
  %v395 = vadd.f32 %v31, %v391
  %396 = vst [vmem:[#allocation2] sm:$0xff] %v394
  %397 = vst [vmem:[#allocation2 + $0x8] sm:$0xff] %v395
  // Predicated region
  $region30: #{net_forward.17} parent=0 // pred_check
    %p398 = pneg %p24
  $region31: #{net_forward.17} parent=0 // pred_check_branch
    %400 = sbr.rel (%p398) target = $region33
  $region32: #{net_forward.17} parent=0 // pred_region
    %v401 = vld [vmem:[#allocation2] sm:$0xff]
    %v402 = vld [vmem:[#allocation2 + $0x8] sm:$0xff]
    %v403 = vld [vmem:[%s2] sm:$0x1]
    %v405 = vlaneseq
    %v406 = vshrl.u32 %v405, 7
    %v407 = vsub.s32 0, %v406
    %v408 = vrot.slane %v403, %v407
    %v410 = vadd.f32 %v401, %v408
    %v411 = vadd.f32 %v402, %v408
    %v412 = vld [vmem:[%s3] sm:$0xf]
    %v413 = vld [vmem:[%s3 + $0x4] sm:$0xf]
    %v414 = vunpack.c.l.bf16 %v412
    %v415 = vunpack.c.l.bf16 %v413
    %v416 = vadd.f32 %v410, %v414
    %v417 = vadd.f32 %v411, %v415
    %418 = vadd.xlane.f32.xlu0 %v416
    %v419 = vpop.xlane.xlu0 %418
    %420 = vadd.xlane.f32.xlu0 %v417
    %v421 = vpop.xlane.xlu0 %420
    %v422 = vrcp.pop 128.0
    %v423 = vmul.f32 %v419, %v422
    %v424 = vmul.f32 %v421, %v422
    %v425 = vsub.f32 %v416, %v423
    %v426 = vsub.f32 %v417, %v424
    %v427 = vmul.f32 %v425, %v425
    %v428 = vmul.f32 %v426, %v426
    %429 = vadd.xlane.f32.xlu0 %v427
    %v430 = vpop.xlane.xlu0 %429
    %431 = vadd.xlane.f32.xlu0 %v428
    %v432 = vpop.xlane.xlu0 %431
    %v433 = vmul.f32 %v430, %v422
    %v434 = vmul.f32 %v432, %v422
    %v435 = vadd.f32 %v433, 1e-12
    %v436 = vadd.f32 %v434, 1e-12
    %v437 = vrsqrt.pop %v435
    %v438 = vrsqrt.pop %v436
    %v439 = vmul.f32 %v425, %v437
    %v440 = vmul.f32 %v426, %v438
    %v441 = vld [vmem:[%s4] sm:$0x1]
    %v443 = vlaneseq
    %v444 = vshrl.u32 %v443, 7
    %v445 = vsub.s32 0, %v444
    %v446 = vrot.slane %v441, %v445
    %v448 = vmul.f32 %v439, %v446
    %v449 = vmul.f32 %v440, %v446
    %v450 = vld [vmem:[%s5] sm:$0x1]
    %v452 = vlaneseq
    %v453 = vshrl.u32 %v452, 7
    %v454 = vsub.s32 0, %v453
    %v455 = vrot.slane %v450, %v454
    %v457 = vadd.f32 %v448, %v455
    %v458 = vadd.f32 %v449, %v455
    %v459 = vpack.c.bf16 %v458, %v457
    %v461 = vunpack.c.l.b16 %v459
    %v462 = vunpack.c.h.b16 %v459
    %v463 = vpack.c.b16 %v461, %v461
    %v464 = vpack.c.b16 %v462, %v462
    %467 = vst [vmem:[%s6] sm:$0xf] %v463
    %468 = vst [vmem:[%s6 + $0x4] sm:$0xf] %v464
  $region33: #{net_forward.17} parent=0 // pred_fallthru
    _
  // Predicated region
  $region34: #{net_forward.17} parent=0 // pred_check
    _
  $region35: #{net_forward.17} parent=0 // pred_check_branch
    %470 = sbr.rel (0) target = $region37
  $region36: #{net_forward.17} parent=0 // pred_region
    _
  $region37: #{net_forward.17} parent=0 // pred_fallthru
    _
  // Predicated region
  $region38: #{net_forward.17} parent=0 // pred_check
    _
  $region39: #{net_forward.17} parent=0 // pred_check_branch
    %472 = sbr.rel (0) target = $region41
  $region40: #{net_forward.17} parent=0 // pred_region
    _
  $region41: #{net_forward.17} parent=0 // pred_fallthru
    _

</llo_original>
